<compile_context>
chip_gen: v7x
topology: tpu7x:2x2x1
jax: 0.10.0
libtpu: 0.0.40
codegen_flags: <defaults>
</compile_context>

<pallas_src>
import jax
import jax.numpy as jnp
from jax.experimental import pallas as pl
from jax.experimental.pallas import tpu as pltpu

FEAT = 512             # backbone output channels (fixed by Linear(512, ...))
POOL_HW = 16           # 4x4 avg_pool2d window, fully reduced
FLAT = FEAT * POOL_HW  # 8192 = NCHW feature map flattened per batch row
LANE = 128             # fused head outputs padded to lane-dense tiles
MAX_TB_HEADS = 256     # heads path: 256 * 8192 * 4B = 8 MiB f32 block
MAX_TB_POOL = 32       # pool path: (32, 512, 16) f32 block = 8 MiB padded VMEM
VMEM_LIMIT = 32 * 1024 * 1024   # fits v7x (64 MiB) while allowing 8 MiB blocks


def _cdiv(a, b):
    return -(-a // b)


def _round_up(x, m):
    return _cdiv(x, m) * m


def _pick_tb(batch8, max_tb):
    """Batch tile: multiple of 8, <= max_tb, >= 2 tiles when B >= 16 (so v7x's
    two TensorCores both get work), balanced so any partial last block wastes
    at most a few rows."""
    n_tiles = _cdiv(batch8, max_tb)
    if batch8 >= 16 and n_tiles < 2:
        n_tiles = 2
    return min(max_tb, _round_up(_cdiv(batch8, n_tiles), 8))


def _pad_batch_to_8(x):
    b = x.shape[0]
    b8 = _round_up(b, 8)
    if b8 != b:
        # TODO(synk): only hit when B % 8 != 0; costs one extra XLA copy pass.
        x = jnp.pad(x, ((0, b8 - b),) + ((0, 0),) * (x.ndim - 1))
    return x


# ------------------------------- kernels -------------------------------------

def _heads_kernel(x_ref, w_ref, b_ref, out_ref):
    # x_ref: (TB, 8192) NCHW-flat; w_ref: (8192, PAD_OUT) pool-folded fused head
    # weight; b_ref: (1, PAD_OUT) f32.  avg_pool2d(4) + top_layer +
    # pseudo_top_layer collapse into one MXU matmul with f32 accumulation.
    acc = jnp.dot(x_ref[...], w_ref[...], preferred_element_type=jnp.float32)
    out_ref[...] = (acc + b_ref[...]).astype(out_ref.dtype)


def _pool_kernel(x_ref, feat_ref):
    # flag=False path: x_ref (TB, 512, 16) -> mean over the 16 spatial positions.
    x = x_ref[...].astype(jnp.float32)
    feat_ref[...] = jnp.mean(x, axis=-1).astype(feat_ref.dtype)


# ---------------------------- parameter prep ---------------------------------

def prepare_head_params(w_pseudo, b_pseudo, w_top, b_top, x_dtype=jnp.float32):
    """Build fused, pool-folded head parameters ONCE (hoisted out of the hot path).

    w_big[c*16 + s, o] = [w_top.T | w_pseudo.T][c, o] / 16, zero-padded to a
    multiple of 128 output columns, so that
        x_nchw.reshape(B, 8192) @ w_big + b_fused
    equals both Linear heads applied to the 4x4 average-pooled features.
    """
    num_classes = int(w_top.shape[0])
    pseudo_num_classes = int(w_pseudo.shape[0])
    n_out = num_classes + pseudo_num_classes
    pad_out = _round_up(n_out, LANE)

    w_fused = jnp.concatenate([w_top.T, w_pseudo.T], axis=1).astype(jnp.float32)
    w_fused = jnp.pad(w_fused, ((0, 0), (0, pad_out - n_out)))           # (512, pad_out)
    w_big = (jnp.repeat(w_fused, POOL_HW, axis=0) / POOL_HW).astype(x_dtype)  # (8192, pad_out)

    b_fused = jnp.concatenate([b_top, b_pseudo], axis=0).astype(jnp.float32)
    b_fused = jnp.pad(b_fused, (0, pad_out - n_out)).reshape(1, pad_out)

    return {
        "w_big": w_big,
        "b_fused": b_fused,
        "num_classes": num_classes,
        "pseudo_num_classes": pseudo_num_classes,
    }


# -------------------------------- forward ------------------------------------

def net_forward(x_nchw, head_params, flag):
    """x_nchw: (B, 512, 4, 4) backbone output (f32 or bf16).
    Returns (pseudo_y, y) if flag else the pooled (B, 512) features.
    `flag` must be a static Python bool, exactly like the PyTorch module."""
    assert isinstance(flag, bool), "flag must be a static Python bool"
    B, C, H, W = x_nchw.shape
    assert C == FEAT and H * W == POOL_HW
    dt = x_nchw.dtype
    itemsize = jnp.dtype(dt).itemsize

    cparams = pltpu.CompilerParams(
        dimension_semantics=("parallel",),
        vmem_limit_bytes=VMEM_LIMIT,
    )

    if not flag:
        # avg_pool2d(4) + flatten only; dtype-preserving like the PyTorch module.
        x3 = _pad_batch_to_8(x_nchw.reshape(B, FEAT, POOL_HW))   # free reshape
        bp = x3.shape[0]
        tb = _pick_tb(bp, MAX_TB_POOL)
        grid = (_cdiv(bp, tb),)
        feats = pl.pallas_call(
            _pool_kernel,
            out_shape=jax.ShapeDtypeStruct((bp, FEAT), dt),
            grid=grid,
            in_specs=[pl.BlockSpec((tb, FEAT, POOL_HW), lambda i: (i, 0, 0))],
            out_specs=pl.BlockSpec((tb, FEAT), lambda i: (i, 0)),
            compiler_params=cparams,
            cost_estimate=pl.CostEstimate(
                flops=int(bp) * FLAT,
                transcendentals=0,
                bytes_accessed=int(bp * FLAT * itemsize + bp * FEAT * itemsize),
            ),
        )(x3)
        return feats[:B]

    w_big = head_params["w_big"]
    if w_big.dtype != dt:
        w_big = w_big.astype(dt)
    b_fused = head_params["b_fused"]
    nc = head_params["num_classes"]
    pnc = head_params["pseudo_num_classes"]
    pad_out = int(w_big.shape[1])

    x_flat = _pad_batch_to_8(x_nchw.reshape(B, FLAT))   # free reshape, no transpose
    bp = x_flat.shape[0]
    tb = _pick_tb(bp, MAX_TB_HEADS)
    grid = (_cdiv(bp, tb),)

    out = pl.pallas_call(
        _heads_kernel,
        out_shape=jax.ShapeDtypeStruct((bp, pad_out), dt),
        grid=grid,
        in_specs=[
            pl.BlockSpec((tb, FLAT), lambda i: (i, 0)),
            # Resident weight / bias: constant index_map, single buffer.
            pl.BlockSpec((FLAT, pad_out), lambda i: (0, 0),
                         pipeline_mode=pl.Buffered(1)),
            pl.BlockSpec((1, pad_out), lambda i: (0, 0),
                         pipeline_mode=pl.Buffered(1)),
        ],
        out_specs=pl.BlockSpec((tb, pad_out), lambda i: (i, 0)),
        compiler_params=cparams,
        cost_estimate=pl.CostEstimate(
            flops=2 * int(bp) * FLAT * pad_out,
            transcendentals=0,
            bytes_accessed=int(bp * FLAT * itemsize
                               + int(w_big.size) * w_big.dtype.itemsize
                               + int(b_fused.size) * 4
                               + bp * pad_out * itemsize),
        ),
    )(x_flat, w_big, b_fused)

    y = out[:B, :nc]
    pseudo_y = out[:B, nc:nc + pnc]
    return pseudo_y, y


# --------------------------- demo / self-check -------------------------------

def _torch_linear_init(key, out_features, in_features):
    # Deterministic stand-in for nn.Linear default init: U(-1/sqrt(in), 1/sqrt(in))
    k1, k2 = jax.random.split(key)
    bound = 1.0 / (in_features ** 0.5)
    w = jax.random.uniform(k1, (out_features, in_features), jnp.float32, -bound, bound)
    b = jax.random.uniform(k2, (out_features,), jnp.float32, -bound, bound)
    return w, b


if __name__ == "__main__":
    key = jax.random.PRNGKey(0)
    k_x, k_p, k_t = jax.random.split(key, 3)

    B = 2
    pseudo_num_classes = 10
    num_classes = 8

    # Synthetic backbone output: (B, 512, 4, 4) NCHW feature map.
    x = jax.random.normal(k_x, (B, FEAT, 4, 4), dtype=jnp.float32)
    w_pseudo, b_pseudo = _torch_linear_init(k_p, pseudo_num_classes, FEAT)
    w_top, b_top = _torch_linear_init(k_t, num_classes, FEAT)

    # Fused / pool-folded head params built once (hoisted out of the hot path).
    params_f32 = prepare_head_params(w_pseudo, b_pseudo, w_top, b_top, jnp.float32)

    # flag=True path: returns (pseudo_y, y)
    pseudo_y, y = net_forward(x, params_f32, flag=True)
    # flag=False path: returns pooled 512-d features
    feats = net_forward(x, params_f32, flag=False)
    jax.block_until_ready((pseudo_y, y, feats))

    # Pure-JAX reference.
    pooled_ref = x.reshape(B, FEAT, POOL_HW).mean(-1)
    y_ref = pooled_ref @ w_top.T + b_top
    py_ref = pooled_ref @ w_pseudo.T + b_pseudo

    assert feats.shape == (B, FEAT) and feats.dtype == x.dtype
    assert y.shape == (B, num_classes)
    assert pseudo_y.shape == (B, pseudo_num_classes)
    assert jnp.allclose(feats, pooled_ref, atol=1e-5)
    # 8192-long MXU dot (default f32 matmul precision) -> slightly looser tol.
    assert jnp.allclose(y, y_ref, atol=5e-3)
    assert jnp.allclose(pseudo_y, py_ref, atol=5e-3)

    # bf16 backbone output: halves the dominant HBM read; kernels are dtype-generic.
    x_bf16 = x.astype(jnp.bfloat16)
    params_bf16 = prepare_head_params(w_pseudo, b_pseudo, w_top, b_top, jnp.bfloat16)
    p_bf, y_bf = net_forward(x_bf16, params_bf16, flag=True)
    jax.block_until_ready((p_bf, y_bf))
    assert jnp.allclose(y_bf.astype(jnp.float32), y_ref, atol=1e-1)
    assert jnp.allclose(p_bf.astype(jnp.float32), py_ref, atol=1e-1)

    print("KERNEL_OK")
</pallas_src>

<mosaic_0001>
module attributes {stable_mosaic.version = 11 : i64} {
  func.func @_heads_kernel(%arg0: i32, %arg1: memref<8x8192xf32, #tpu.memory_space<vmem>>, %arg2: memref<8192x128xf32, #tpu.memory_space<vmem>>, %arg3: memref<1x128xf32, #tpu.memory_space<vmem>>, %arg4: memref<8x128xf32, #tpu.memory_space<vmem>>) attributes {dimension_semantics = [#tpu.dimension_semantics<parallel>], iteration_bounds = array<i64: 1>, scalar_prefetch = 0 : i64, scratch_operands = 0 : i64, tpu.core_type = #tpu.core_type<tc>, window_params = [{transform_indices = @transform_0, window_bounds = array<i64: 8, 8192>}, {pipeline_mode = #tpu.pipeline_mode<synchronous>, transform_indices = @transform_1, window_bounds = array<i64: 8192, 128>}, {pipeline_mode = #tpu.pipeline_mode<synchronous>, transform_indices = @transform_2, window_bounds = array<i64: 1, 128>}, {transform_indices = @transform_3, window_bounds = array<i64: 8, 128>}]} {
    %c0 = arith.constant 0 : index
    %c0_0 = arith.constant 0 : index
    %0 = vector.load %arg1[%c0, %c0_0] : memref<8x8192xf32, #tpu.memory_space<vmem>>, vector<8x8192xf32>
    %c0_1 = arith.constant 0 : index
    %c0_2 = arith.constant 0 : index
    %1 = vector.load %arg2[%c0_1, %c0_2] : memref<8192x128xf32, #tpu.memory_space<vmem>>, vector<8192x128xf32>
    %cst = arith.constant dense<0.000000e+00> : vector<8x128xf32>
    %2 = tpu.matmul %0, %1, %cst {dimension_numbers = #tpu.dot_dimension_numbers<[1], [0], [0], [1], [0, 0, 1, 1], [], []>} : vector<8x8192xf32>, vector<8192x128xf32>, vector<8x128xf32> -> vector<8x128xf32>
    %c0_3 = arith.constant 0 : index
    %c0_4 = arith.constant 0 : index
    %3 = vector.load %arg3[%c0_3, %c0_4] : memref<1x128xf32, #tpu.memory_space<vmem>>, vector<1x128xf32>
    %4 = vector.broadcast %3 : vector<1x128xf32> to vector<8x128xf32>
    %5 = arith.addf %2, %4 : vector<8x128xf32>
    %c0_5 = arith.constant 0 : index
    %c0_6 = arith.constant 0 : index
    %6 = vector.load %arg4[%c0_5, %c0_6] : memref<8x128xf32, #tpu.memory_space<vmem>>, vector<8x128xf32>
    tpu.vector_store %arg4[%c0_5, %c0_6], %5 {strides = array<i32>} : memref<8x128xf32, #tpu.memory_space<vmem>>, vector<8x128xf32>,
    return
  }
  func.func @transform_0(%arg0: i32) -> (i32, i32) {
    %c0_i32 = arith.constant 0 : i32
    %c0_i32_0 = arith.constant 0 : i32
    return %arg0, %c0_i32 : i32, i32
  }
  func.func @transform_1(%arg0: i32) -> (i32, i32) {
    %c0_i32 = arith.constant 0 : i32
    %c0_i32_0 = arith.constant 0 : i32
    %c0_i32_1 = arith.constant 0 : i32
    return %c0_i32, %c0_i32_0 : i32, i32
  }
  func.func @transform_2(%arg0: i32) -> (i32, i32) {
    %c0_i32 = arith.constant 0 : i32
    %c0_i32_0 = arith.constant 0 : i32
    %c0_i32_1 = arith.constant 0 : i32
    return %c0_i32, %c0_i32_0 : i32, i32
  }
  func.func @transform_3(%arg0: i32) -> (i32, i32) {
    %c0_i32 = arith.constant 0 : i32
    %c0_i32_0 = arith.constant 0 : i32
    return %arg0, %c0_i32 : i32, i32
  }
}

</mosaic_0001>

<llo_original>
// kernel: tpu_custom_call.1
$region0: #{tpu_custom_call.1}
  #allocation0 [shape = 'u32[]', space=smem, size = 0x4, offset = 0x4, fixed_abs, tag = 'smem constant byte address 0x4 - core index']
  #allocation1 [shape = 'u32[144,128]{1,0:T(1,128)}', space=vmem, size = 0x12000, scoped, tag = 'internal scratch']
  %s0 = inlined_call_operand.hbm [shape: f32[8,8192], index: 0, kind: input, shape index: {}]
  %s1 = inlined_call_operand.hbm [shape: f32[8192,128], index: 1, kind: input, shape index: {}]
  %s2 = inlined_call_operand.hbm [shape: f32[1,128], index: 2, kind: input, shape index: {}]
  %s3 = inlined_call_operand.hbm [shape: f32[8,128], index: 3, kind: output, shape index: {}]
  %s4 = sld [smem:[#allocation0]]
  $region34: #{tpu_custom_call.1} parent=0
    _
  %s6 = ssub.s32 1, %s4
  %s7 = scalar_select 0, %s6, %s4
  $region1: #{tpu_custom_call.1} parent=0
    #allocation2 [shape = 'u8[262144]{0}', space=vmem, size = 0x40000, scoped, tag = 'input window, operand 0, single buffered']
    #allocation3 [shape = 's32[1]{0}', space=sflag, size = 0x4, scoped, tag = 'scoped memory for tpu_custom_call.1']
    #allocation4 [shape = 's32[1]{0}', space=sflag, size = 0x4, scoped, tag = 'scoped memory for tpu_custom_call.1']
    #allocation5 [shape = 'u8[4194304]{0}', space=vmem, size = 0x400000, scoped, tag = 'input window, operand 1, single buffered']
    #allocation6 [shape = 's32[1]{0}', space=sflag, size = 0x4, scoped, tag = 'scoped memory for tpu_custom_call.1']
    #allocation7 [shape = 'u8[512]{0}', space=vmem, size = 0x400, scoped, tag = 'input window, operand 2, single buffered']
    #allocation8 [shape = 'u8[4096]{0}', space=vmem, size = 0x1000, scoped, tag = 'output window, operand 0, single buffered']
    %8 = vsyncpa [#allocation3], 0
    %9 = vsyncpa [#allocation6], 0
    %10 = vsyncpa [#allocation4], 0
    // Predicated region
    $region2: #{tpu_custom_call.1} parent=1 // pred_check
      _
    $region3: #{tpu_custom_call.1} parent=1 // pred_check_branch
      %12 = sbr.rel (0) target = $region5
    $region4: #{tpu_custom_call.1} parent=1 // pred_region
      %s14 = ssub.s32 8192, 8192
      %15 = vsyncadd [#allocation3], %s14
      %s17 = sshll.u32 [#allocation2], 4
      %s18 = int_to_ptr.vmem [resolvable:$true] %s17
      %20 = dma.hbm_to_vmem [thread:$0]  %s0, 8192, %s18, [#allocation3]
    $region5: #{tpu_custom_call.1} parent=1 // pred_fallthru
      _
    // Predicated region
    $region6: #{tpu_custom_call.1} parent=1 // pred_check
      _
    $region7: #{tpu_custom_call.1} parent=1 // pred_check_branch
      %22 = sbr.rel (0) target = $region9
    $region8: #{tpu_custom_call.1} parent=1 // pred_region
      %s24 = ssub.s32 131072, 131072
      %25 = vsyncadd [#allocation6], %s24
      %s26 = sshll.u32 [#allocation5], 4
      %s27 = int_to_ptr.vmem [resolvable:$true] %s26
      %32 = dma.hbm_to_vmem [thread:$0]  %s1, 131072, %s27, [#allocation6], 128, 128, 8
    $region9: #{tpu_custom_call.1} parent=1 // pred_fallthru
      _
    // Predicated region
    $region10: #{tpu_custom_call.1} parent=1 // pred_check
      _
    $region11: #{tpu_custom_call.1} parent=1 // pred_check_branch
      %34 = sbr.rel (0) target = $region13
    $region12: #{tpu_custom_call.1} parent=1 // pred_region
      %s36 = ssub.s32 16, 16
      %37 = vsyncadd [#allocation6], %s36
      %s39 = sshll.u32 [#allocation7], 4
      %s40 = int_to_ptr.vmem [resolvable:$true] %s39
      %42 = dma.hbm_to_vmem [thread:$0]  %s2, 16, %s40, [#allocation6]
    $region13: #{tpu_custom_call.1} parent=1 // pred_fallthru
      _
    // Predicated region
    $region14: #{tpu_custom_call.1} parent=1 // pred_check
      _
    $region15: #{tpu_custom_call.1} parent=1 // pred_check_branch
      %44 = sbr.rel (0) target = $region17
    $region16: #{tpu_custom_call.1} parent=1 // pred_region
      %45 = dma.done [#allocation3], 8192
    $region17: #{tpu_custom_call.1} parent=1 // pred_fallthru
      _
    // Predicated region
    $region18: #{tpu_custom_call.1} parent=1 // pred_check
      _
    $region19: #{tpu_custom_call.1} parent=1 // pred_check_branch
      %47 = sbr.rel (0) target = $region21
    $region20: #{tpu_custom_call.1} parent=1 // pred_region
      %48 = dma.done [#allocation6], 131072
    $region21: #{tpu_custom_call.1} parent=1 // pred_fallthru
      _
    // Predicated region
    $region22: #{tpu_custom_call.1} parent=1 // pred_check
      _
    $region23: #{tpu_custom_call.1} parent=1 // pred_check_branch
      %50 = sbr.rel (0) target = $region25
    $region24: #{tpu_custom_call.1} parent=1 // pred_region
      %51 = dma.done [#allocation6], 16
    $region25: #{tpu_custom_call.1} parent=1 // pred_fallthru
      _
    %v52 = vld [vmem:[#allocation2] sm:$0xff]
    %v53 = vld [vmem:[#allocation2 + $0x8] sm:$0xff]
    %v54 = vld [vmem:[#allocation2 + $0x10] sm:$0xff]
    %v55 = vld [vmem:[#allocation2 + $0x18] sm:$0xff]
    %v56 = vld [vmem:[#allocation2 + $0x20] sm:$0xff]
    %v57 = vld [vmem:[#allocation2 + $0x28] sm:$0xff]
    %v58 = vld [vmem:[#allocation2 + $0x30] sm:$0xff]
    %v59 = vld [vmem:[#allocation2 + $0x38] sm:$0xff]
    %v60 = vld [vmem:[#allocation2 + $0x40] sm:$0xff]
    %v61 = vld [vmem:[#allocation2 + $0x48] sm:$0xff]
    %v62 = vld [vmem:[#allocation2 + $0x50] sm:$0xff]
    %v63 = vld [vmem:[#allocation2 + $0x58] sm:$0xff]
    %v64 = vld [vmem:[#allocation2 + $0x60] sm:$0xff]
    %v65 = vld [vmem:[#allocation2 + $0x68] sm:$0xff]
    %v66 = vld [vmem:[#allocation2 + $0x70] sm:$0xff]
    %v67 = vld [vmem:[#allocation2 + $0x78] sm:$0xff]
    %v68 = vld [vmem:[#allocation2 + $0x80] sm:$0xff]
    %v69 = vld [vmem:[#allocation2 + $0x88] sm:$0xff]
    %v70 = vld [vmem:[#allocation2 + $0x90] sm:$0xff]
    %v71 = vld [vmem:[#allocation2 + $0x98] sm:$0xff]
    %v72 = vld [vmem:[#allocation2 + $0xa0] sm:$0xff]
    %v73 = vld [vmem:[#allocation2 + $0xa8] sm:$0xff]
    %v74 = vld [vmem:[#allocation2 + $0xb0] sm:$0xff]
    %v75 = vld [vmem:[#allocation2 + $0xb8] sm:$0xff]
    %v76 = vld [vmem:[#allocation2 + $0xc0] sm:$0xff]
    %v77 = vld [vmem:[#allocation2 + $0xc8] sm:$0xff]
    %v78 = vld [vmem:[#allocation2 + $0xd0] sm:$0xff]
    %v79 = vld [vmem:[#allocation2 + $0xd8] sm:$0xff]
    %v80 = vld [vmem:[#allocation2 + $0xe0] sm:$0xff]
    %v81 = vld [vmem:[#allocation2 + $0xe8] sm:$0xff]
    %v82 = vld [vmem:[#allocation2 + $0xf0] sm:$0xff]
    %v83 = vld [vmem:[#allocation2 + $0xf8] sm:$0xff]
    %v84 = vld [vmem:[#allocation2 + $0x100] sm:$0xff]
    %v85 = vld [vmem:[#allocation2 + $0x108] sm:$0xff]
    %v86 = vld [vmem:[#allocation2 + $0x110] sm:$0xff]
    %v87 = vld [vmem:[#allocation2 + $0x118] sm:$0xff]
    %v88 = vld [vmem:[#allocation2 + $0x120] sm:$0xff]
    %v89 = vld [vmem:[#allocation2 + $0x128] sm:$0xff]
    %v90 = vld [vmem:[#allocation2 + $0x130] sm:$0xff]
    %v91 = vld [vmem:[#allocation2 + $0x138] sm:$0xff]
    %v92 = vld [vmem:[#allocation2 + $0x140] sm:$0xff]
    %v93 = vld [vmem:[#allocation2 + $0x148] sm:$0xff]
    %v94 = vld [vmem:[#allocation2 + $0x150] sm:$0xff]
    %v95 = vld [vmem:[#allocation2 + $0x158] sm:$0xff]
    %v96 = vld [vmem:[#allocation2 + $0x160] sm:$0xff]
    %v97 = vld [vmem:[#allocation2 + $0x168] sm:$0xff]
    %v98 = vld [vmem:[#allocation2 + $0x170] sm:$0xff]
    %v99 = vld [vmem:[#allocation2 + $0x178] sm:$0xff]
    %v100 = vld [vmem:[#allocation2 + $0x180] sm:$0xff]
    %v101 = vld [vmem:[#allocation2 + $0x188] sm:$0xff]
    %v102 = vld [vmem:[#allocation2 + $0x190] sm:$0xff]
    %v103 = vld [vmem:[#allocation2 + $0x198] sm:$0xff]
    %v104 = vld [vmem:[#allocation2 + $0x1a0] sm:$0xff]
    %v105 = vld [vmem:[#allocation2 + $0x1a8] sm:$0xff]
    %v106 = vld [vmem:[#allocation2 + $0x1b0] sm:$0xff]
    %v107 = vld [vmem:[#allocation2 + $0x1b8] sm:$0xff]
    %v108 = vld [vmem:[#allocation2 + $0x1c0] sm:$0xff]
    %v109 = vld [vmem:[#allocation2 + $0x1c8] sm:$0xff]
    %v110 = vld [vmem:[#allocation2 + $0x1d0] sm:$0xff]
    %v111 = vld [vmem:[#allocation2 + $0x1d8] sm:$0xff]
    %v112 = vld [vmem:[#allocation2 + $0x1e0] sm:$0xff]
    %v113 = vld [vmem:[#allocation2 + $0x1e8] sm:$0xff]
    %v114 = vld [vmem:[#allocation2 + $0x1f0] sm:$0xff]
    %v115 = vld [vmem:[#allocation2 + $0x1f8] sm:$0xff]
    %v116 = vld [vmem:[#allocation5] sm:$0xff]
    %v117 = vld [vmem:[#allocation5 + $0x8] sm:$0xff]
    %v118 = vld [vmem:[#allocation5 + $0x10] sm:$0xff]
    %v119 = vld [vmem:[#allocation5 + $0x18] sm:$0xff]
    %v120 = vld [vmem:[#allocation5 + $0x20] sm:$0xff]
    %v121 = vld [vmem:[#allocation5 + $0x28] sm:$0xff]
    %v122 = vld [vmem:[#allocation5 + $0x30] sm:$0xff]
    %v123 = vld [vmem:[#allocation5 + $0x38] sm:$0xff]
    %v124 = vld [vmem:[#allocation5 + $0x40] sm:$0xff]
    %v125 = vld [vmem:[#allocation5 + $0x48] sm:$0xff]
    %v126 = vld [vmem:[#allocation5 + $0x50] sm:$0xff]
    %v127 = vld [vmem:[#allocation5 + $0x58] sm:$0xff]
    %v128 = vld [vmem:[#allocation5 + $0x60] sm:$0xff]
    %v129 = vld [vmem:[#allocation5 + $0x68] sm:$0xff]
    %v130 = vld [vmem:[#allocation5 + $0x70] sm:$0xff]
    %v131 = vld [vmem:[#allocation5 + $0x78] sm:$0xff]
    %v132 = vld [vmem:[#allocation5 + $0x80] sm:$0xff]
    %v133 = vld [vmem:[#allocation5 + $0x88] sm:$0xff]
    %v134 = vld [vmem:[#allocation5 + $0x90] sm:$0xff]
    %v135 = vld [vmem:[#allocation5 + $0x98] sm:$0xff]
    %v136 = vld [vmem:[#allocation5 + $0xa0] sm:$0xff]
    %v137 = vld [vmem:[#allocation5 + $0xa8] sm:$0xff]
    %v138 = vld [vmem:[#allocation5 + $0xb0] sm:$0xff]
    %v139 = vld [vmem:[#allocation5 + $0xb8] sm:$0xff]
    %v140 = vld [vmem:[#allocation5 + $0xc0] sm:$0xff]
    %v141 = vld [vmem:[#allocation5 + $0xc8] sm:$0xff]
    %v142 = vld [vmem:[#allocation5 + $0xd0] sm:$0xff]
    %v143 = vld [vmem:[#allocation5 + $0xd8] sm:$0xff]
    %v144 = vld [vmem:[#allocation5 + $0xe0] sm:$0xff]
    %v145 = vld [vmem:[#allocation5 + $0xe8] sm:$0xff]
    %v146 = vld [vmem:[#allocation5 + $0xf0] sm:$0xff]
    %v147 = vld [vmem:[#allocation5 + $0xf8] sm:$0xff]
    %v148 = vld [vmem:[#allocation5 + $0x100] sm:$0xff]
    %v149 = vld [vmem:[#allocation5 + $0x108] sm:$0xff]
    %v150 = vld [vmem:[#allocation5 + $0x110] sm:$0xff]
    %v151 = vld [vmem:[#allocation5 + $0x118] sm:$0xff]
    %v152 = vld [vmem:[#allocation5 + $0x120] sm:$0xff]
    %v153 = vld [vmem:[#allocation5 + $0x128] sm:$0xff]
    %v154 = vld [vmem:[#allocation5 + $0x130] sm:$0xff]
    %v155 = vld [vmem:[#allocation5 + $0x138] sm:$0xff]
    %v156 = vld [vmem:[#allocation5 + $0x140] sm:$0xff]
    %v157 = vld [vmem:[#allocation5 + $0x148] sm:$0xff]
    %v158 = vld [vmem:[#allocation5 + $0x150] sm:$0xff]
    %v159 = vld [vmem:[#allocation5 + $0x158] sm:$0xff]
    %v160 = vld [vmem:[#allocation5 + $0x160] sm:$0xff]
    %v161 = vld [vmem:[#allocation5 + $0x168] sm:$0xff]
    %v162 = vld [vmem:[#allocation5 + $0x170] sm:$0xff]
    %v163 = vld [vmem:[#allocation5 + $0x178] sm:$0xff]
    %v164 = vld [vmem:[#allocation5 + $0x180] sm:$0xff]
    %v165 = vld [vmem:[#allocation5 + $0x188] sm:$0xff]
    %v166 = vld [vmem:[#allocation5 + $0x190] sm:$0xff]
    %v167 = vld [vmem:[#allocation5 + $0x198] sm:$0xff]
    %v168 = vld [vmem:[#allocation5 + $0x1a0] sm:$0xff]
    %v169 = vld [vmem:[#allocation5 + $0x1a8] sm:$0xff]
    %v170 = vld [vmem:[#allocation5 + $0x1b0] sm:$0xff]
    %v171 = vld [vmem:[#allocation5 + $0x1b8] sm:$0xff]
    %v172 = vld [vmem:[#allocation5 + $0x1c0] sm:$0xff]
    %v173 = vld [vmem:[#allocation5 + $0x1c8] sm:$0xff]
    %v174 = vld [vmem:[#allocation5 + $0x1d0] sm:$0xff]
    %v175 = vld [vmem:[#allocation5 + $0x1d8] sm:$0xff]
    %v176 = vld [vmem:[#allocation5 + $0x1e0] sm:$0xff]
    %v177 = vld [vmem:[#allocation5 + $0x1e8] sm:$0xff]
    %v178 = vld [vmem:[#allocation5 + $0x1f0] sm:$0xff]
    %v179 = vld [vmem:[#allocation5 + $0x1f8] sm:$0xff]
    %v180 = vld [vmem:[#allocation5 + $0x200] sm:$0xff]
    %v181 = vld [vmem:[#allocation5 + $0x208] sm:$0xff]
    %v182 = vld [vmem:[#allocation5 + $0x210] sm:$0xff]
    %v183 = vld [vmem:[#allocation5 + $0x218] sm:$0xff]
    %v184 = vld [vmem:[#allocation5 + $0x220] sm:$0xff]
    %v185 = vld [vmem:[#allocation5 + $0x228] sm:$0xff]
    %v186 = vld [vmem:[#allocation5 + $0x230] sm:$0xff]
    %v187 = vld [vmem:[#allocation5 + $0x238] sm:$0xff]
    %v188 = vld [vmem:[#allocation5 + $0x240] sm:$0xff]
    %v189 = vld [vmem:[#allocation5 + $0x248] sm:$0xff]
    %v190 = vld [vmem:[#allocation5 + $0x250] sm:$0xff]
    %v191 = vld [vmem:[#allocation5 + $0x258] sm:$0xff]
    %v192 = vld [vmem:[#allocation5 + $0x260] sm:$0xff]
    %v193 = vld [vmem:[#allocation5 + $0x268] sm:$0xff]
    %v194 = vld [vmem:[#allocation5 + $0x270] sm:$0xff]
    %v195 = vld [vmem:[#allocation5 + $0x278] sm:$0xff]
    %v196 = vld [vmem:[#allocation5 + $0x280] sm:$0xff]
    %v197 = vld [vmem:[#allocation5 + $0x288] sm:$0xff]
    %v198 = vld [vmem:[#allocation5 + $0x290] sm:$0xff]
    %v199 = vld [vmem:[#allocation5 + $0x298] sm:$0xff]
    %v200 = vld [vmem:[#allocation5 + $0x2a0] sm:$0xff]
    %v201 = vld [vmem:[#allocation5 + $0x2a8] sm:$0xff]
    %v202 = vld [vmem:[#allocation5 + $0x2b0] sm:$0xff]
    %v203 = vld [vmem:[#allocation5 + $0x2b8] sm:$0xff]
    %v204 = vld [vmem:[#allocation5 + $0x2c0] sm:$0xff]
    %v205 = vld [vmem:[#allocation5 + $0x2c8] sm:$0xff]
    %v206 = vld [vmem:[#allocation5 + $0x2d0] sm:$0xff]
    %v207 = vld [vmem:[#allocation5 + $0x2d8] sm:$0xff]
    %v208 = vld [vmem:[#allocation5 + $0x2e0] sm:$0xff]
    %v209 = vld [vmem:[#allocation5 + $0x2e8] sm:$0xff]
    %v210 = vld [vmem:[#allocation5 + $0x2f0] sm:$0xff]
    %v211 = vld [vmem:[#allocation5 + $0x2f8] sm:$0xff]
    %v212 = vld [vmem:[#allocation5 + $0x300] sm:$0xff]
    %v213 = vld [vmem:[#allocation5 + $0x308] sm:$0xff]
    %v214 = vld [vmem:[#allocation5 + $0x310] sm:$0xff]
    %v215 = vld [vmem:[#allocation5 + $0x318] sm:$0xff]
    %v216 = vld [vmem:[#allocation5 + $0x320] sm:$0xff]
    %v217 = vld [vmem:[#allocation5 + $0x328] sm:$0xff]
    %v218 = vld [vmem:[#allocation5 + $0x330] sm:$0xff]
    %v219 = vld [vmem:[#allocation5 + $0x338] sm:$0xff]
    %v220 = vld [vmem:[#allocation5 + $0x340] sm:$0xff]
    %v221 = vld [vmem:[#allocation5 + $0x348] sm:$0xff]
    %v222 = vld [vmem:[#allocation5 + $0x350] sm:$0xff]
    %v223 = vld [vmem:[#allocation5 + $0x358] sm:$0xff]
    %v224 = vld [vmem:[#allocation5 + $0x360] sm:$0xff]
    %v225 = vld [vmem:[#allocation5 + $0x368] sm:$0xff]
    %v226 = vld [vmem:[#allocation5 + $0x370] sm:$0xff]
    %v227 = vld [vmem:[#allocation5 + $0x378] sm:$0xff]
    %v228 = vld [vmem:[#allocation5 + $0x380] sm:$0xff]
    %v229 = vld [vmem:[#allocation5 + $0x388] sm:$0xff]
    %v230 = vld [vmem:[#allocation5 + $0x390] sm:$0xff]
    %v231 = vld [vmem:[#allocation5 + $0x398] sm:$0xff]
    %v232 = vld [vmem:[#allocation5 + $0x3a0] sm:$0xff]
    %v233 = vld [vmem:[#allocation5 + $0x3a8] sm:$0xff]
    %v234 = vld [vmem:[#allocation5 + $0x3b0] sm:$0xff]
    %v235 = vld [vmem:[#allocation5 + $0x3b8] sm:$0xff]
    %v236 = vld [vmem:[#allocation5 + $0x3c0] sm:$0xff]
    %v237 = vld [vmem:[#allocation5 + $0x3c8] sm:$0xff]
    %v238 = vld [vmem:[#allocation5 + $0x3d0] sm:$0xff]
    %v239 = vld [vmem:[#allocation5 + $0x3d8] sm:$0xff]
    %v240 = vld [vmem:[#allocation5 + $0x3e0] sm:$0xff]
    %v241 = vld [vmem:[#allocation5 + $0x3e8] sm:$0xff]
    %v242 = vld [vmem:[#allocation5 + $0x3f0] sm:$0xff]
    %v243 = vld [vmem:[#allocation5 + $0x3f8] sm:$0xff]
    %v244 = vld [vmem:[#allocation5 + $0x400] sm:$0xff]
    %v245 = vld [vmem:[#allocation5 + $0x408] sm:$0xff]
    %v246 = vld [vmem:[#allocation5 + $0x410] sm:$0xff]
    %v247 = vld [vmem:[#allocation5 + $0x418] sm:$0xff]
    %v248 = vld [vmem:[#allocation5 + $0x420] sm:$0xff]
    %v249 = vld [vmem:[#allocation5 + $0x428] sm:$0xff]
    %v250 = vld [vmem:[#allocation5 + $0x430] sm:$0xff]
    %v251 = vld [vmem:[#allocation5 + $0x438] sm:$0xff]
    %v252 = vld [vmem:[#allocation5 + $0x440] sm:$0xff]
    %v253 = vld [vmem:[#allocation5 + $0x448] sm:$0xff]
    %v254 = vld [vmem:[#allocation5 + $0x450] sm:$0xff]
    %v255 = vld [vmem:[#allocation5 + $0x458] sm:$0xff]
    %v256 = vld [vmem:[#allocation5 + $0x460] sm:$0xff]
    %v257 = vld [vmem:[#allocation5 + $0x468] sm:$0xff]
    %v258 = vld [vmem:[#allocation5 + $0x470] sm:$0xff]
    %v259 = vld [vmem:[#allocation5 + $0x478] sm:$0xff]
    %v260 = vld [vmem:[#allocation5 + $0x480] sm:$0xff]
    %v261 = vld [vmem:[#allocation5 + $0x488] sm:$0xff]
    %v262 = vld [vmem:[#allocation5 + $0x490] sm:$0xff]
    %v263 = vld [vmem:[#allocation5 + $0x498] sm:$0xff]
    %v264 = vld [vmem:[#allocation5 + $0x4a0] sm:$0xff]
    %v265 = vld [vmem:[#allocation5 + $0x4a8] sm:$0xff]
    %v266 = vld [vmem:[#allocation5 + $0x4b0] sm:$0xff]
    %v267 = vld [vmem:[#allocation5 + $0x4b8] sm:$0xff]
    %v268 = vld [vmem:[#allocation5 + $0x4c0] sm:$0xff]
    %v269 = vld [vmem:[#allocation5 + $0x4c8] sm:$0xff]
    %v270 = vld [vmem:[#allocation5 + $0x4d0] sm:$0xff]
    %v271 = vld [vmem:[#allocation5 + $0x4d8] sm:$0xff]
    %v272 = vld [vmem:[#allocation5 + $0x4e0] sm:$0xff]
    %v273 = vld [vmem:[#allocation5 + $0x4e8] sm:$0xff]
    %v274 = vld [vmem:[#allocation5 + $0x4f0] sm:$0xff]
    %v275 = vld [vmem:[#allocation5 + $0x4f8] sm:$0xff]
    %v276 = vld [vmem:[#allocation5 + $0x500] sm:$0xff]
    %v277 = vld [vmem:[#allocation5 + $0x508] sm:$0xff]
    %v278 = vld [vmem:[#allocation5 + $0x510] sm:$0xff]
    %v279 = vld [vmem:[#allocation5 + $0x518] sm:$0xff]
    %v280 = vld [vmem:[#allocation5 + $0x520] sm:$0xff]
    %v281 = vld [vmem:[#allocation5 + $0x528] sm:$0xff]
    %v282 = vld [vmem:[#allocation5 + $0x530] sm:$0xff]
    %v283 = vld [vmem:[#allocation5 + $0x538] sm:$0xff]
    %v284 = vld [vmem:[#allocation5 + $0x540] sm:$0xff]
    %v285 = vld [vmem:[#allocation5 + $0x548] sm:$0xff]
    %v286 = vld [vmem:[#allocation5 + $0x550] sm:$0xff]
    %v287 = vld [vmem:[#allocation5 + $0x558] sm:$0xff]
    %v288 = vld [vmem:[#allocation5 + $0x560] sm:$0xff]
    %v289 = vld [vmem:[#allocation5 + $0x568] sm:$0xff]
    %v290 = vld [vmem:[#allocation5 + $0x570] sm:$0xff]
    %v291 = vld [vmem:[#allocation5 + $0x578] sm:$0xff]
    %v292 = vld [vmem:[#allocation5 + $0x580] sm:$0xff]
    %v293 = vld [vmem:[#allocation5 + $0x588] sm:$0xff]
    %v294 = vld [vmem:[#allocation5 + $0x590] sm:$0xff]
    %v295 = vld [vmem:[#allocation5 + $0x598] sm:$0xff]
    %v296 = vld [vmem:[#allocation5 + $0x5a0] sm:$0xff]
    %v297 = vld [vmem:[#allocation5 + $0x5a8] sm:$0xff]
    %v298 = vld [vmem:[#allocation5 + $0x5b0] sm:$0xff]
    %v299 = vld [vmem:[#allocation5 + $0x5b8] sm:$0xff]
    %v300 = vld [vmem:[#allocation5 + $0x5c0] sm:$0xff]
    %v301 = vld [vmem:[#allocation5 + $0x5c8] sm:$0xff]
    %v302 = vld [vmem:[#allocation5 + $0x5d0] sm:$0xff]
    %v303 = vld [vmem:[#allocation5 + $0x5d8] sm:$0xff]
    %v304 = vld [vmem:[#allocation5 + $0x5e0] sm:$0xff]
    %v305 = vld [vmem:[#allocation5 + $0x5e8] sm:$0xff]
    %v306 = vld [vmem:[#allocation5 + $0x5f0] sm:$0xff]
    %v307 = vld [vmem:[#allocation5 + $0x5f8] sm:$0xff]
    %v308 = vld [vmem:[#allocation5 + $0x600] sm:$0xff]
    %v309 = vld [vmem:[#allocation5 + $0x608] sm:$0xff]
    %v310 = vld [vmem:[#allocation5 + $0x610] sm:$0xff]
    %v311 = vld [vmem:[#allocation5 + $0x618] sm:$0xff]
    %v312 = vld [vmem:[#allocation5 + $0x620] sm:$0xff]
    %v313 = vld [vmem:[#allocation5 + $0x628] sm:$0xff]
    %v314 = vld [vmem:[#allocation5 + $0x630] sm:$0xff]
    %v315 = vld [vmem:[#allocation5 + $0x638] sm:$0xff]
    %v316 = vld [vmem:[#allocation5 + $0x640] sm:$0xff]
    %v317 = vld [vmem:[#allocation5 + $0x648] sm:$0xff]
    %v318 = vld [vmem:[#allocation5 + $0x650] sm:$0xff]
    %v319 = vld [vmem:[#allocation5 + $0x658] sm:$0xff]
    %v320 = vld [vmem:[#allocation5 + $0x660] sm:$0xff]
    %v321 = vld [vmem:[#allocation5 + $0x668] sm:$0xff]
    %v322 = vld [vmem:[#allocation5 + $0x670] sm:$0xff]
    %v323 = vld [vmem:[#allocation5 + $0x678] sm:$0xff]
    %v324 = vld [vmem:[#allocation5 + $0x680] sm:$0xff]
    %v325 = vld [vmem:[#allocation5 + $0x688] sm:$0xff]
    %v326 = vld [vmem:[#allocation5 + $0x690] sm:$0xff]
    %v327 = vld [vmem:[#allocation5 + $0x698] sm:$0xff]
    %v328 = vld [vmem:[#allocation5 + $0x6a0] sm:$0xff]
    %v329 = vld [vmem:[#allocation5 + $0x6a8] sm:$0xff]
    %v330 = vld [vmem:[#allocation5 + $0x6b0] sm:$0xff]
    %v331 = vld [vmem:[#allocation5 + $0x6b8] sm:$0xff]
    %v332 = vld [vmem:[#allocation5 + $0x6c0] sm:$0xff]
    %v333 = vld [vmem:[#allocation5 + $0x6c8] sm:$0xff]
    %v334 = vld [vmem:[#allocation5 + $0x6d0] sm:$0xff]
    %v335 = vld [vmem:[#allocation5 + $0x6d8] sm:$0xff]
    %v336 = vld [vmem:[#allocation5 + $0x6e0] sm:$0xff]
    %v337 = vld [vmem:[#allocation5 + $0x6e8] sm:$0xff]
    %v338 = vld [vmem:[#allocation5 + $0x6f0] sm:$0xff]
    %v339 = vld [vmem:[#allocation5 + $0x6f8] sm:$0xff]
    %v340 = vld [vmem:[#allocation5 + $0x700] sm:$0xff]
    %v341 = vld [vmem:[#allocation5 + $0x708] sm:$0xff]
    %v342 = vld [vmem:[#allocation5 + $0x710] sm:$0xff]
    %v343 = vld [vmem:[#allocation5 + $0x718] sm:$0xff]
    %v344 = vld [vmem:[#allocation5 + $0x720] sm:$0xff]
    %v345 = vld [vmem:[#allocation5 + $0x728] sm:$0xff]
    %v346 = vld [vmem:[#allocation5 + $0x730] sm:$0xff]
    %v347 = vld [vmem:[#allocation5 + $0x738] sm:$0xff]
    %v348 = vld [vmem:[#allocation5 + $0x740] sm:$0xff]
    %v349 = vld [vmem:[#allocation5 + $0x748] sm:$0xff]
    %v350 = vld [vmem:[#allocation5 + $0x750] sm:$0xff]
    %v351 = vld [vmem:[#allocation5 + $0x758] sm:$0xff]
    %v352 = vld [vmem:[#allocation5 + $0x760] sm:$0xff]
    %v353 = vld [vmem:[#allocation5 + $0x768] sm:$0xff]
    %v354 = vld [vmem:[#allocation5 + $0x770] sm:$0xff]
    %v355 = vld [vmem:[#allocation5 + $0x778] sm:$0xff]
    %v356 = vld [vmem:[#allocation5 + $0x780] sm:$0xff]
    %v357 = vld [vmem:[#allocation5 + $0x788] sm:$0xff]
    %v358 = vld [vmem:[#allocation5 + $0x790] sm:$0xff]
    %v359 = vld [vmem:[#allocation5 + $0x798] sm:$0xff]
    %v360 = vld [vmem:[#allocation5 + $0x7a0] sm:$0xff]
    %v361 = vld [vmem:[#allocation5 + $0x7a8] sm:$0xff]
    %v362 = vld [vmem:[#allocation5 + $0x7b0] sm:$0xff]
    %v363 = vld [vmem:[#allocation5 + $0x7b8] sm:$0xff]
    %v364 = vld [vmem:[#allocation5 + $0x7c0] sm:$0xff]
    %v365 = vld [vmem:[#allocation5 + $0x7c8] sm:$0xff]
    %v366 = vld [vmem:[#allocation5 + $0x7d0] sm:$0xff]
    %v367 = vld [vmem:[#allocation5 + $0x7d8] sm:$0xff]
    %v368 = vld [vmem:[#allocation5 + $0x7e0] sm:$0xff]
    %v369 = vld [vmem:[#allocation5 + $0x7e8] sm:$0xff]
    %v370 = vld [vmem:[#allocation5 + $0x7f0] sm:$0xff]
    %v371 = vld [vmem:[#allocation5 + $0x7f8] sm:$0xff]
    %v372 = vld [vmem:[#allocation5 + $0x800] sm:$0xff]
    %v373 = vld [vmem:[#allocation5 + $0x808] sm:$0xff]
    %v374 = vld [vmem:[#allocation5 + $0x810] sm:$0xff]
    %v375 = vld [vmem:[#allocation5 + $0x818] sm:$0xff]
    %v376 = vld [vmem:[#allocation5 + $0x820] sm:$0xff]
    %v377 = vld [vmem:[#allocation5 + $0x828] sm:$0xff]
    %v378 = vld [vmem:[#allocation5 + $0x830] sm:$0xff]
    %v379 = vld [vmem:[#allocation5 + $0x838] sm:$0xff]
    %v380 = vld [vmem:[#allocation5 + $0x840] sm:$0xff]
    %v381 = vld [vmem:[#allocation5 + $0x848] sm:$0xff]
    %v382 = vld [vmem:[#allocation5 + $0x850] sm:$0xff]
    %v383 = vld [vmem:[#allocation5 + $0x858] sm:$0xff]
    %v384 = vld [vmem:[#allocation5 + $0x860] sm:$0xff]
    %v385 = vld [vmem:[#allocation5 + $0x868] sm:$0xff]
    %v386 = vld [vmem:[#allocation5 + $0x870] sm:$0xff]
    %v387 = vld [vmem:[#allocation5 + $0x878] sm:$0xff]
    %v388 = vld [vmem:[#allocation5 + $0x880] sm:$0xff]
    %v389 = vld [vmem:[#allocation5 + $0x888] sm:$0xff]
    %v390 = vld [vmem:[#allocation5 + $0x890] sm:$0xff]
    %v391 = vld [vmem:[#allocation5 + $0x898] sm:$0xff]
    %v392 = vld [vmem:[#allocation5 + $0x8a0] sm:$0xff]
    %v393 = vld [vmem:[#allocation5 + $0x8a8] sm:$0xff]
    %v394 = vld [vmem:[#allocation5 + $0x8b0] sm:$0xff]
    %v395 = vld [vmem:[#allocation5 + $0x8b8] sm:$0xff]
    %v396 = vld [vmem:[#allocation5 + $0x8c0] sm:$0xff]
    %v397 = vld [vmem:[#allocation5 + $0x8c8] sm:$0xff]
    %v398 = vld [vmem:[#allocation5 + $0x8d0] sm:$0xff]
    %v399 = vld [vmem:[#allocation5 + $0x8d8] sm:$0xff]
    %v400 = vld [vmem:[#allocation5 + $0x8e0] sm:$0xff]
    %v401 = vld [vmem:[#allocation5 + $0x8e8] sm:$0xff]
    %v402 = vld [vmem:[#allocation5 + $0x8f0] sm:$0xff]
    %v403 = vld [vmem:[#allocation5 + $0x8f8] sm:$0xff]
    %v404 = vld [vmem:[#allocation5 + $0x900] sm:$0xff]
    %v405 = vld [vmem:[#allocation5 + $0x908] sm:$0xff]
    %v406 = vld [vmem:[#allocation5 + $0x910] sm:$0xff]
    %v407 = vld [vmem:[#allocation5 + $0x918] sm:$0xff]
    %v408 = vld [vmem:[#allocation5 + $0x920] sm:$0xff]
    %v409 = vld [vmem:[#allocation5 + $0x928] sm:$0xff]
    %v410 = vld [vmem:[#allocation5 + $0x930] sm:$0xff]
    %v411 = vld [vmem:[#allocation5 + $0x938] sm:$0xff]
    %v412 = vld [vmem:[#allocation5 + $0x940] sm:$0xff]
    %v413 = vld [vmem:[#allocation5 + $0x948] sm:$0xff]
    %v414 = vld [vmem:[#allocation5 + $0x950] sm:$0xff]
    %v415 = vld [vmem:[#allocation5 + $0x958] sm:$0xff]
    %v416 = vld [vmem:[#allocation5 + $0x960] sm:$0xff]
    %v417 = vld [vmem:[#allocation5 + $0x968] sm:$0xff]
    %v418 = vld [vmem:[#allocation5 + $0x970] sm:$0xff]
    %v419 = vld [vmem:[#allocation5 + $0x978] sm:$0xff]
    %v420 = vld [vmem:[#allocation5 + $0x980] sm:$0xff]
    %v421 = vld [vmem:[#allocation5 + $0x988] sm:$0xff]
    %v422 = vld [vmem:[#allocation5 + $0x990] sm:$0xff]
    %v423 = vld [vmem:[#allocation5 + $0x998] sm:$0xff]
    %v424 = vld [vmem:[#allocation5 + $0x9a0] sm:$0xff]
    %v425 = vld [vmem:[#allocation5 + $0x9a8] sm:$0xff]
    %v426 = vld [vmem:[#allocation5 + $0x9b0] sm:$0xff]
    %v427 = vld [vmem:[#allocation5 + $0x9b8] sm:$0xff]
    %v428 = vld [vmem:[#allocation5 + $0x9c0] sm:$0xff]
    %v429 = vld [vmem:[#allocation5 + $0x9c8] sm:$0xff]
    %v430 = vld [vmem:[#allocation5 + $0x9d0] sm:$0xff]
    %v431 = vld [vmem:[#allocation5 + $0x9d8] sm:$0xff]
    %v432 = vld [vmem:[#allocation5 + $0x9e0] sm:$0xff]
    %v433 = vld [vmem:[#allocation5 + $0x9e8] sm:$0xff]
    %v434 = vld [vmem:[#allocation5 + $0x9f0] sm:$0xff]
    %v435 = vld [vmem:[#allocation5 + $0x9f8] sm:$0xff]
    %v436 = vld [vmem:[#allocation5 + $0xa00] sm:$0xff]
    %v437 = vld [vmem:[#allocation5 + $0xa08] sm:$0xff]
    %v438 = vld [vmem:[#allocation5 + $0xa10] sm:$0xff]
    %v439 = vld [vmem:[#allocation5 + $0xa18] sm:$0xff]
    %v440 = vld [vmem:[#allocation5 + $0xa20] sm:$0xff]
    %v441 = vld [vmem:[#allocation5 + $0xa28] sm:$0xff]
    %v442 = vld [vmem:[#allocation5 + $0xa30] sm:$0xff]
    %v443 = vld [vmem:[#allocation5 + $0xa38] sm:$0xff]
    %v444 = vld [vmem:[#allocation5 + $0xa40] sm:$0xff]
    %v445 = vld [vmem:[#allocation5 + $0xa48] sm:$0xff]
    %v446 = vld [vmem:[#allocation5 + $0xa50] sm:$0xff]
    %v447 = vld [vmem:[#allocation5 + $0xa58] sm:$0xff]
    %v448 = vld [vmem:[#allocation5 + $0xa60] sm:$0xff]
    %v449 = vld [vmem:[#allocation5 + $0xa68] sm:$0xff]
    %v450 = vld [vmem:[#allocation5 + $0xa70] sm:$0xff]
    %v451 = vld [vmem:[#allocation5 + $0xa78] sm:$0xff]
    %v452 = vld [vmem:[#allocation5 + $0xa80] sm:$0xff]
    %v453 = vld [vmem:[#allocation5 + $0xa88] sm:$0xff]
    %v454 = vld [vmem:[#allocation5 + $0xa90] sm:$0xff]
    %v455 = vld [vmem:[#allocation5 + $0xa98] sm:$0xff]
    %v456 = vld [vmem:[#allocation5 + $0xaa0] sm:$0xff]
    %v457 = vld [vmem:[#allocation5 + $0xaa8] sm:$0xff]
    %v458 = vld [vmem:[#allocation5 + $0xab0] sm:$0xff]
    %v459 = vld [vmem:[#allocation5 + $0xab8] sm:$0xff]
    %v460 = vld [vmem:[#allocation5 + $0xac0] sm:$0xff]
    %v461 = vld [vmem:[#allocation5 + $0xac8] sm:$0xff]
    %v462 = vld [vmem:[#allocation5 + $0xad0] sm:$0xff]
    %v463 = vld [vmem:[#allocation5 + $0xad8] sm:$0xff]
    %v464 = vld [vmem:[#allocation5 + $0xae0] sm:$0xff]
    %v465 = vld [vmem:[#allocation5 + $0xae8] sm:$0xff]
    %v466 = vld [vmem:[#allocation5 + $0xaf0] sm:$0xff]
    %v467 = vld [vmem:[#allocation5 + $0xaf8] sm:$0xff]
    %v468 = vld [vmem:[#allocation5 + $0xb00] sm:$0xff]
    %v469 = vld [vmem:[#allocation5 + $0xb08] sm:$0xff]
    %v470 = vld [vmem:[#allocation5 + $0xb10] sm:$0xff]
    %v471 = vld [vmem:[#allocation5 + $0xb18] sm:$0xff]
    %v472 = vld [vmem:[#allocation5 + $0xb20] sm:$0xff]
    %v473 = vld [vmem:[#allocation5 + $0xb28] sm:$0xff]
    %v474 = vld [vmem:[#allocation5 + $0xb30] sm:$0xff]
    %v475 = vld [vmem:[#allocation5 + $0xb38] sm:$0xff]
    %v476 = vld [vmem:[#allocation5 + $0xb40] sm:$0xff]
    %v477 = vld [vmem:[#allocation5 + $0xb48] sm:$0xff]
    %v478 = vld [vmem:[#allocation5 + $0xb50] sm:$0xff]
    %v479 = vld [vmem:[#allocation5 + $0xb58] sm:$0xff]
    %v480 = vld [vmem:[#allocation5 + $0xb60] sm:$0xff]
    %v481 = vld [vmem:[#allocation5 + $0xb68] sm:$0xff]
    %v482 = vld [vmem:[#allocation5 + $0xb70] sm:$0xff]
    %v483 = vld [vmem:[#allocation5 + $0xb78] sm:$0xff]
    %v484 = vld [vmem:[#allocation5 + $0xb80] sm:$0xff]
    %v485 = vld [vmem:[#allocation5 + $0xb88] sm:$0xff]
    %v486 = vld [vmem:[#allocation5 + $0xb90] sm:$0xff]
    %v487 = vld [vmem:[#allocation5 + $0xb98] sm:$0xff]
    %v488 = vld [vmem:[#allocation5 + $0xba0] sm:$0xff]
    %v489 = vld [vmem:[#allocation5 + $0xba8] sm:$0xff]
    %v490 = vld [vmem:[#allocation5 + $0xbb0] sm:$0xff]
    %v491 = vld [vmem:[#allocation5 + $0xbb8] sm:$0xff]
    %v492 = vld [vmem:[#allocation5 + $0xbc0] sm:$0xff]
    %v493 = vld [vmem:[#allocation5 + $0xbc8] sm:$0xff]
    %v494 = vld [vmem:[#allocation5 + $0xbd0] sm:$0xff]
    %v495 = vld [vmem:[#allocation5 + $0xbd8] sm:$0xff]
    %v496 = vld [vmem:[#allocation5 + $0xbe0] sm:$0xff]
    %v497 = vld [vmem:[#allocation5 + $0xbe8] sm:$0xff]
    %v498 = vld [vmem:[#allocation5 + $0xbf0] sm:$0xff]
    %v499 = vld [vmem:[#allocation5 + $0xbf8] sm:$0xff]
    %v500 = vld [vmem:[#allocation5 + $0xc00] sm:$0xff]
    %v501 = vld [vmem:[#allocation5 + $0xc08] sm:$0xff]
    %v502 = vld [vmem:[#allocation5 + $0xc10] sm:$0xff]
    %v503 = vld [vmem:[#allocation5 + $0xc18] sm:$0xff]
    %v504 = vld [vmem:[#allocation5 + $0xc20] sm:$0xff]
    %v505 = vld [vmem:[#allocation5 + $0xc28] sm:$0xff]
    %v506 = vld [vmem:[#allocation5 + $0xc30] sm:$0xff]
    %v507 = vld [vmem:[#allocation5 + $0xc38] sm:$0xff]
    %v508 = vld [vmem:[#allocation5 + $0xc40] sm:$0xff]
    %v509 = vld [vmem:[#allocation5 + $0xc48] sm:$0xff]
    %v510 = vld [vmem:[#allocation5 + $0xc50] sm:$0xff]
    %v511 = vld [vmem:[#allocation5 + $0xc58] sm:$0xff]
    %v512 = vld [vmem:[#allocation5 + $0xc60] sm:$0xff]
    %v513 = vld [vmem:[#allocation5 + $0xc68] sm:$0xff]
    %v514 = vld [vmem:[#allocation5 + $0xc70] sm:$0xff]
    %v515 = vld [vmem:[#allocation5 + $0xc78] sm:$0xff]
    %v516 = vld [vmem:[#allocation5 + $0xc80] sm:$0xff]
    %v517 = vld [vmem:[#allocation5 + $0xc88] sm:$0xff]
    %v518 = vld [vmem:[#allocation5 + $0xc90] sm:$0xff]
    %v519 = vld [vmem:[#allocation5 + $0xc98] sm:$0xff]
    %v520 = vld [vmem:[#allocation5 + $0xca0] sm:$0xff]
    %v521 = vld [vmem:[#allocation5 + $0xca8] sm:$0xff]
    %v522 = vld [vmem:[#allocation5 + $0xcb0] sm:$0xff]
    %v523 = vld [vmem:[#allocation5 + $0xcb8] sm:$0xff]
    %v524 = vld [vmem:[#allocation5 + $0xcc0] sm:$0xff]
    %v525 = vld [vmem:[#allocation5 + $0xcc8] sm:$0xff]
    %v526 = vld [vmem:[#allocation5 + $0xcd0] sm:$0xff]
    %v527 = vld [vmem:[#allocation5 + $0xcd8] sm:$0xff]
    %v528 = vld [vmem:[#allocation5 + $0xce0] sm:$0xff]
    %v529 = vld [vmem:[#allocation5 + $0xce8] sm:$0xff]
    %v530 = vld [vmem:[#allocation5 + $0xcf0] sm:$0xff]
    %v531 = vld [vmem:[#allocation5 + $0xcf8] sm:$0xff]
    %v532 = vld [vmem:[#allocation5 + $0xd00] sm:$0xff]
    %v533 = vld [vmem:[#allocation5 + $0xd08] sm:$0xff]
    %v534 = vld [vmem:[#allocation5 + $0xd10] sm:$0xff]
    %v535 = vld [vmem:[#allocation5 + $0xd18] sm:$0xff]
    %v536 = vld [vmem:[#allocation5 + $0xd20] sm:$0xff]
    %v537 = vld [vmem:[#allocation5 + $0xd28] sm:$0xff]
    %v538 = vld [vmem:[#allocation5 + $0xd30] sm:$0xff]
    %v539 = vld [vmem:[#allocation5 + $0xd38] sm:$0xff]
    %v540 = vld [vmem:[#allocation5 + $0xd40] sm:$0xff]
    %v541 = vld [vmem:[#allocation5 + $0xd48] sm:$0xff]
    %v542 = vld [vmem:[#allocation5 + $0xd50] sm:$0xff]
    %v543 = vld [vmem:[#allocation5 + $0xd58] sm:$0xff]
    %v544 = vld [vmem:[#allocation5 + $0xd60] sm:$0xff]
    %v545 = vld [vmem:[#allocation5 + $0xd68] sm:$0xff]
    %v546 = vld [vmem:[#allocation5 + $0xd70] sm:$0xff]
    %v547 = vld [vmem:[#allocation5 + $0xd78] sm:$0xff]
    %v548 = vld [vmem:[#allocation5 + $0xd80] sm:$0xff]
    %v549 = vld [vmem:[#allocation5 + $0xd88] sm:$0xff]
    %v550 = vld [vmem:[#allocation5 + $0xd90] sm:$0xff]
    %v551 = vld [vmem:[#allocation5 + $0xd98] sm:$0xff]
    %v552 = vld [vmem:[#allocation5 + $0xda0] sm:$0xff]
    %v553 = vld [vmem:[#allocation5 + $0xda8] sm:$0xff]
    %v554 = vld [vmem:[#allocation5 + $0xdb0] sm:$0xff]
    %v555 = vld [vmem:[#allocation5 + $0xdb8] sm:$0xff]
    %v556 = vld [vmem:[#allocation5 + $0xdc0] sm:$0xff]
    %v557 = vld [vmem:[#allocation5 + $0xdc8] sm:$0xff]
    %v558 = vld [vmem:[#allocation5 + $0xdd0] sm:$0xff]
    %v559 = vld [vmem:[#allocation5 + $0xdd8] sm:$0xff]
    %v560 = vld [vmem:[#allocation5 + $0xde0] sm:$0xff]
    %v561 = vld [vmem:[#allocation5 + $0xde8] sm:$0xff]
    %v562 = vld [vmem:[#allocation5 + $0xdf0] sm:$0xff]
    %v563 = vld [vmem:[#allocation5 + $0xdf8] sm:$0xff]
    %v564 = vld [vmem:[#allocation5 + $0xe00] sm:$0xff]
    %v565 = vld [vmem:[#allocation5 + $0xe08] sm:$0xff]
    %v566 = vld [vmem:[#allocation5 + $0xe10] sm:$0xff]
    %v567 = vld [vmem:[#allocation5 + $0xe18] sm:$0xff]
    %v568 = vld [vmem:[#allocation5 + $0xe20] sm:$0xff]
    %v569 = vld [vmem:[#allocation5 + $0xe28] sm:$0xff]
    %v570 = vld [vmem:[#allocation5 + $0xe30] sm:$0xff]
    %v571 = vld [vmem:[#allocation5 + $0xe38] sm:$0xff]
    %v572 = vld [vmem:[#allocation5 + $0xe40] sm:$0xff]
    %v573 = vld [vmem:[#allocation5 + $0xe48] sm:$0xff]
    %v574 = vld [vmem:[#allocation5 + $0xe50] sm:$0xff]
    %v575 = vld [vmem:[#allocation5 + $0xe58] sm:$0xff]
    %v576 = vld [vmem:[#allocation5 + $0xe60] sm:$0xff]
    %v577 = vld [vmem:[#allocation5 + $0xe68] sm:$0xff]
    %v578 = vld [vmem:[#allocation5 + $0xe70] sm:$0xff]
    %v579 = vld [vmem:[#allocation5 + $0xe78] sm:$0xff]
    %v580 = vld [vmem:[#allocation5 + $0xe80] sm:$0xff]
    %v581 = vld [vmem:[#allocation5 + $0xe88] sm:$0xff]
    %v582 = vld [vmem:[#allocation5 + $0xe90] sm:$0xff]
    %v583 = vld [vmem:[#allocation5 + $0xe98] sm:$0xff]
    %v584 = vld [vmem:[#allocation5 + $0xea0] sm:$0xff]
    %v585 = vld [vmem:[#allocation5 + $0xea8] sm:$0xff]
    %v586 = vld [vmem:[#allocation5 + $0xeb0] sm:$0xff]
    %v587 = vld [vmem:[#allocation5 + $0xeb8] sm:$0xff]
    %v588 = vld [vmem:[#allocation5 + $0xec0] sm:$0xff]
    %v589 = vld [vmem:[#allocation5 + $0xec8] sm:$0xff]
    %v590 = vld [vmem:[#allocation5 + $0xed0] sm:$0xff]
    %v591 = vld [vmem:[#allocation5 + $0xed8] sm:$0xff]
    %v592 = vld [vmem:[#allocation5 + $0xee0] sm:$0xff]
    %v593 = vld [vmem:[#allocation5 + $0xee8] sm:$0xff]
    %v594 = vld [vmem:[#allocation5 + $0xef0] sm:$0xff]
    %v595 = vld [vmem:[#allocation5 + $0xef8] sm:$0xff]
    %v596 = vld [vmem:[#allocation5 + $0xf00] sm:$0xff]
    %v597 = vld [vmem:[#allocation5 + $0xf08] sm:$0xff]
    %v598 = vld [vmem:[#allocation5 + $0xf10] sm:$0xff]
    %v599 = vld [vmem:[#allocation5 + $0xf18] sm:$0xff]
    %v600 = vld [vmem:[#allocation5 + $0xf20] sm:$0xff]
    %v601 = vld [vmem:[#allocation5 + $0xf28] sm:$0xff]
    %v602 = vld [vmem:[#allocation5 + $0xf30] sm:$0xff]
    %v603 = vld [vmem:[#allocation5 + $0xf38] sm:$0xff]
    %v604 = vld [vmem:[#allocation5 + $0xf40] sm:$0xff]
    %v605 = vld [vmem:[#allocation5 + $0xf48] sm:$0xff]
    %v606 = vld [vmem:[#allocation5 + $0xf50] sm:$0xff]
    %v607 = vld [vmem:[#allocation5 + $0xf58] sm:$0xff]
    %v608 = vld [vmem:[#allocation5 + $0xf60] sm:$0xff]
    %v609 = vld [vmem:[#allocation5 + $0xf68] sm:$0xff]
    %v610 = vld [vmem:[#allocation5 + $0xf70] sm:$0xff]
    %v611 = vld [vmem:[#allocation5 + $0xf78] sm:$0xff]
    %v612 = vld [vmem:[#allocation5 + $0xf80] sm:$0xff]
    %v613 = vld [vmem:[#allocation5 + $0xf88] sm:$0xff]
    %v614 = vld [vmem:[#allocation5 + $0xf90] sm:$0xff]
    %v615 = vld [vmem:[#allocation5 + $0xf98] sm:$0xff]
    %v616 = vld [vmem:[#allocation5 + $0xfa0] sm:$0xff]
    %v617 = vld [vmem:[#allocation5 + $0xfa8] sm:$0xff]
    %v618 = vld [vmem:[#allocation5 + $0xfb0] sm:$0xff]
    %v619 = vld [vmem:[#allocation5 + $0xfb8] sm:$0xff]
    %v620 = vld [vmem:[#allocation5 + $0xfc0] sm:$0xff]
    %v621 = vld [vmem:[#allocation5 + $0xfc8] sm:$0xff]
    %v622 = vld [vmem:[#allocation5 + $0xfd0] sm:$0xff]
    %v623 = vld [vmem:[#allocation5 + $0xfd8] sm:$0xff]
    %v624 = vld [vmem:[#allocation5 + $0xfe0] sm:$0xff]
    %v625 = vld [vmem:[#allocation5 + $0xfe8] sm:$0xff]
    %v626 = vld [vmem:[#allocation5 + $0xff0] sm:$0xff]
    %v627 = vld [vmem:[#allocation5 + $0xff8] sm:$0xff]
    %v628 = vld [vmem:[#allocation5 + $0x1000] sm:$0xff]
    %v629 = vld [vmem:[#allocation5 + $0x1008] sm:$0xff]
    %v630 = vld [vmem:[#allocation5 + $0x1010] sm:$0xff]
    %v631 = vld [vmem:[#allocation5 + $0x1018] sm:$0xff]
    %v632 = vld [vmem:[#allocation5 + $0x1020] sm:$0xff]
    %v633 = vld [vmem:[#allocation5 + $0x1028] sm:$0xff]
    %v634 = vld [vmem:[#allocation5 + $0x1030] sm:$0xff]
    %v635 = vld [vmem:[#allocation5 + $0x1038] sm:$0xff]
    %v636 = vld [vmem:[#allocation5 + $0x1040] sm:$0xff]
    %v637 = vld [vmem:[#allocation5 + $0x1048] sm:$0xff]
    %v638 = vld [vmem:[#allocation5 + $0x1050] sm:$0xff]
    %v639 = vld [vmem:[#allocation5 + $0x1058] sm:$0xff]
    %v640 = vld [vmem:[#allocation5 + $0x1060] sm:$0xff]
    %v641 = vld [vmem:[#allocation5 + $0x1068] sm:$0xff]
    %v642 = vld [vmem:[#allocation5 + $0x1070] sm:$0xff]
    %v643 = vld [vmem:[#allocation5 + $0x1078] sm:$0xff]
    %v644 = vld [vmem:[#allocation5 + $0x1080] sm:$0xff]
    %v645 = vld [vmem:[#allocation5 + $0x1088] sm:$0xff]
    %v646 = vld [vmem:[#allocation5 + $0x1090] sm:$0xff]
    %v647 = vld [vmem:[#allocation5 + $0x1098] sm:$0xff]
    %v648 = vld [vmem:[#allocation5 + $0x10a0] sm:$0xff]
    %v649 = vld [vmem:[#allocation5 + $0x10a8] sm:$0xff]
    %v650 = vld [vmem:[#allocation5 + $0x10b0] sm:$0xff]
    %v651 = vld [vmem:[#allocation5 + $0x10b8] sm:$0xff]
    %v652 = vld [vmem:[#allocation5 + $0x10c0] sm:$0xff]
    %v653 = vld [vmem:[#allocation5 + $0x10c8] sm:$0xff]
    %v654 = vld [vmem:[#allocation5 + $0x10d0] sm:$0xff]
    %v655 = vld [vmem:[#allocation5 + $0x10d8] sm:$0xff]
    %v656 = vld [vmem:[#allocation5 + $0x10e0] sm:$0xff]
    %v657 = vld [vmem:[#allocation5 + $0x10e8] sm:$0xff]
    %v658 = vld [vmem:[#allocation5 + $0x10f0] sm:$0xff]
    %v659 = vld [vmem:[#allocation5 + $0x10f8] sm:$0xff]
    %v660 = vld [vmem:[#allocation5 + $0x1100] sm:$0xff]
    %v661 = vld [vmem:[#allocation5 + $0x1108] sm:$0xff]
    %v662 = vld [vmem:[#allocation5 + $0x1110] sm:$0xff]
    %v663 = vld [vmem:[#allocation5 + $0x1118] sm:$0xff]
    %v664 = vld [vmem:[#allocation5 + $0x1120] sm:$0xff]
    %v665 = vld [vmem:[#allocation5 + $0x1128] sm:$0xff]
    %v666 = vld [vmem:[#allocation5 + $0x1130] sm:$0xff]
    %v667 = vld [vmem:[#allocation5 + $0x1138] sm:$0xff]
    %v668 = vld [vmem:[#allocation5 + $0x1140] sm:$0xff]
    %v669 = vld [vmem:[#allocation5 + $0x1148] sm:$0xff]
    %v670 = vld [vmem:[#allocation5 + $0x1150] sm:$0xff]
    %v671 = vld [vmem:[#allocation5 + $0x1158] sm:$0xff]
    %v672 = vld [vmem:[#allocation5 + $0x1160] sm:$0xff]
    %v673 = vld [vmem:[#allocation5 + $0x1168] sm:$0xff]
    %v674 = vld [vmem:[#allocation5 + $0x1170] sm:$0xff]
    %v675 = vld [vmem:[#allocation5 + $0x1178] sm:$0xff]
    %v676 = vld [vmem:[#allocation5 + $0x1180] sm:$0xff]
    %v677 = vld [vmem:[#allocation5 + $0x1188] sm:$0xff]
    %v678 = vld [vmem:[#allocation5 + $0x1190] sm:$0xff]
    %v679 = vld [vmem:[#allocation5 + $0x1198] sm:$0xff]
    %v680 = vld [vmem:[#allocation5 + $0x11a0] sm:$0xff]
    %v681 = vld [vmem:[#allocation5 + $0x11a8] sm:$0xff]
    %v682 = vld [vmem:[#allocation5 + $0x11b0] sm:$0xff]
    %v683 = vld [vmem:[#allocation5 + $0x11b8] sm:$0xff]
    %v684 = vld [vmem:[#allocation5 + $0x11c0] sm:$0xff]
    %v685 = vld [vmem:[#allocation5 + $0x11c8] sm:$0xff]
    %v686 = vld [vmem:[#allocation5 + $0x11d0] sm:$0xff]
    %v687 = vld [vmem:[#allocation5 + $0x11d8] sm:$0xff]
    %v688 = vld [vmem:[#allocation5 + $0x11e0] sm:$0xff]
    %v689 = vld [vmem:[#allocation5 + $0x11e8] sm:$0xff]
    %v690 = vld [vmem:[#allocation5 + $0x11f0] sm:$0xff]
    %v691 = vld [vmem:[#allocation5 + $0x11f8] sm:$0xff]
    %v692 = vld [vmem:[#allocation5 + $0x1200] sm:$0xff]
    %v693 = vld [vmem:[#allocation5 + $0x1208] sm:$0xff]
    %v694 = vld [vmem:[#allocation5 + $0x1210] sm:$0xff]
    %v695 = vld [vmem:[#allocation5 + $0x1218] sm:$0xff]
    %v696 = vld [vmem:[#allocation5 + $0x1220] sm:$0xff]
    %v697 = vld [vmem:[#allocation5 + $0x1228] sm:$0xff]
    %v698 = vld [vmem:[#allocation5 + $0x1230] sm:$0xff]
    %v699 = vld [vmem:[#allocation5 + $0x1238] sm:$0xff]
    %v700 = vld [vmem:[#allocation5 + $0x1240] sm:$0xff]
    %v701 = vld [vmem:[#allocation5 + $0x1248] sm:$0xff]
    %v702 = vld [vmem:[#allocation5 + $0x1250] sm:$0xff]
    %v703 = vld [vmem:[#allocation5 + $0x1258] sm:$0xff]
    %v704 = vld [vmem:[#allocation5 + $0x1260] sm:$0xff]
    %v705 = vld [vmem:[#allocation5 + $0x1268] sm:$0xff]
    %v706 = vld [vmem:[#allocation5 + $0x1270] sm:$0xff]
    %v707 = vld [vmem:[#allocation5 + $0x1278] sm:$0xff]
    %v708 = vld [vmem:[#allocation5 + $0x1280] sm:$0xff]
    %v709 = vld [vmem:[#allocation5 + $0x1288] sm:$0xff]
    %v710 = vld [vmem:[#allocation5 + $0x1290] sm:$0xff]
    %v711 = vld [vmem:[#allocation5 + $0x1298] sm:$0xff]
    %v712 = vld [vmem:[#allocation5 + $0x12a0] sm:$0xff]
    %v713 = vld [vmem:[#allocation5 + $0x12a8] sm:$0xff]
    %v714 = vld [vmem:[#allocation5 + $0x12b0] sm:$0xff]
    %v715 = vld [vmem:[#allocation5 + $0x12b8] sm:$0xff]
    %v716 = vld [vmem:[#allocation5 + $0x12c0] sm:$0xff]
    %v717 = vld [vmem:[#allocation5 + $0x12c8] sm:$0xff]
    %v718 = vld [vmem:[#allocation5 + $0x12d0] sm:$0xff]
    %v719 = vld [vmem:[#allocation5 + $0x12d8] sm:$0xff]
    %v720 = vld [vmem:[#allocation5 + $0x12e0] sm:$0xff]
    %v721 = vld [vmem:[#allocation5 + $0x12e8] sm:$0xff]
    %v722 = vld [vmem:[#allocation5 + $0x12f0] sm:$0xff]
    %v723 = vld [vmem:[#allocation5 + $0x12f8] sm:$0xff]
    %v724 = vld [vmem:[#allocation5 + $0x1300] sm:$0xff]
    %v725 = vld [vmem:[#allocation5 + $0x1308] sm:$0xff]
    %v726 = vld [vmem:[#allocation5 + $0x1310] sm:$0xff]
    %v727 = vld [vmem:[#allocation5 + $0x1318] sm:$0xff]
    %v728 = vld [vmem:[#allocation5 + $0x1320] sm:$0xff]
    %v729 = vld [vmem:[#allocation5 + $0x1328] sm:$0xff]
    %v730 = vld [vmem:[#allocation5 + $0x1330] sm:$0xff]
    %v731 = vld [vmem:[#allocation5 + $0x1338] sm:$0xff]
    %v732 = vld [vmem:[#allocation5 + $0x1340] sm:$0xff]
    %v733 = vld [vmem:[#allocation5 + $0x1348] sm:$0xff]
    %v734 = vld [vmem:[#allocation5 + $0x1350] sm:$0xff]
    %v735 = vld [vmem:[#allocation5 + $0x1358] sm:$0xff]
    %v736 = vld [vmem:[#allocation5 + $0x1360] sm:$0xff]
    %v737 = vld [vmem:[#allocation5 + $0x1368] sm:$0xff]
    %v738 = vld [vmem:[#allocation5 + $0x1370] sm:$0xff]
    %v739 = vld [vmem:[#allocation5 + $0x1378] sm:$0xff]
    %v740 = vld [vmem:[#allocation5 + $0x1380] sm:$0xff]
    %v741 = vld [vmem:[#allocation5 + $0x1388] sm:$0xff]
    %v742 = vld [vmem:[#allocation5 + $0x1390] sm:$0xff]
    %v743 = vld [vmem:[#allocation5 + $0x1398] sm:$0xff]
    %v744 = vld [vmem:[#allocation5 + $0x13a0] sm:$0xff]
    %v745 = vld [vmem:[#allocation5 + $0x13a8] sm:$0xff]
    %v746 = vld [vmem:[#allocation5 + $0x13b0] sm:$0xff]
    %v747 = vld [vmem:[#allocation5 + $0x13b8] sm:$0xff]
    %v748 = vld [vmem:[#allocation5 + $0x13c0] sm:$0xff]
    %v749 = vld [vmem:[#allocation5 + $0x13c8] sm:$0xff]
    %v750 = vld [vmem:[#allocation5 + $0x13d0] sm:$0xff]
    %v751 = vld [vmem:[#allocation5 + $0x13d8] sm:$0xff]
    %v752 = vld [vmem:[#allocation5 + $0x13e0] sm:$0xff]
    %v753 = vld [vmem:[#allocation5 + $0x13e8] sm:$0xff]
    %v754 = vld [vmem:[#allocation5 + $0x13f0] sm:$0xff]
    %v755 = vld [vmem:[#allocation5 + $0x13f8] sm:$0xff]
    %v756 = vld [vmem:[#allocation5 + $0x1400] sm:$0xff]
    %v757 = vld [vmem:[#allocation5 + $0x1408] sm:$0xff]
    %v758 = vld [vmem:[#allocation5 + $0x1410] sm:$0xff]
    %v759 = vld [vmem:[#allocation5 + $0x1418] sm:$0xff]
    %v760 = vld [vmem:[#allocation5 + $0x1420] sm:$0xff]
    %v761 = vld [vmem:[#allocation5 + $0x1428] sm:$0xff]
    %v762 = vld [vmem:[#allocation5 + $0x1430] sm:$0xff]
    %v763 = vld [vmem:[#allocation5 + $0x1438] sm:$0xff]
    %v764 = vld [vmem:[#allocation5 + $0x1440] sm:$0xff]
    %v765 = vld [vmem:[#allocation5 + $0x1448] sm:$0xff]
    %v766 = vld [vmem:[#allocation5 + $0x1450] sm:$0xff]
    %v767 = vld [vmem:[#allocation5 + $0x1458] sm:$0xff]
    %v768 = vld [vmem:[#allocation5 + $0x1460] sm:$0xff]
    %v769 = vld [vmem:[#allocation5 + $0x1468] sm:$0xff]
    %v770 = vld [vmem:[#allocation5 + $0x1470] sm:$0xff]
    %v771 = vld [vmem:[#allocation5 + $0x1478] sm:$0xff]
    %v772 = vld [vmem:[#allocation5 + $0x1480] sm:$0xff]
    %v773 = vld [vmem:[#allocation5 + $0x1488] sm:$0xff]
    %v774 = vld [vmem:[#allocation5 + $0x1490] sm:$0xff]
    %v775 = vld [vmem:[#allocation5 + $0x1498] sm:$0xff]
    %v776 = vld [vmem:[#allocation5 + $0x14a0] sm:$0xff]
    %v777 = vld [vmem:[#allocation5 + $0x14a8] sm:$0xff]
    %v778 = vld [vmem:[#allocation5 + $0x14b0] sm:$0xff]
    %v779 = vld [vmem:[#allocation5 + $0x14b8] sm:$0xff]
    %v780 = vld [vmem:[#allocation5 + $0x14c0] sm:$0xff]
    %v781 = vld [vmem:[#allocation5 + $0x14c8] sm:$0xff]
    %v782 = vld [vmem:[#allocation5 + $0x14d0] sm:$0xff]
    %v783 = vld [vmem:[#allocation5 + $0x14d8] sm:$0xff]
    %v784 = vld [vmem:[#allocation5 + $0x14e0] sm:$0xff]
    %v785 = vld [vmem:[#allocation5 + $0x14e8] sm:$0xff]
    %v786 = vld [vmem:[#allocation5 + $0x14f0] sm:$0xff]
    %v787 = vld [vmem:[#allocation5 + $0x14f8] sm:$0xff]
    %v788 = vld [vmem:[#allocation5 + $0x1500] sm:$0xff]
    %v789 = vld [vmem:[#allocation5 + $0x1508] sm:$0xff]
    %v790 = vld [vmem:[#allocation5 + $0x1510] sm:$0xff]
    %v791 = vld [vmem:[#allocation5 + $0x1518] sm:$0xff]
    %v792 = vld [vmem:[#allocation5 + $0x1520] sm:$0xff]
    %v793 = vld [vmem:[#allocation5 + $0x1528] sm:$0xff]
    %v794 = vld [vmem:[#allocation5 + $0x1530] sm:$0xff]
    %v795 = vld [vmem:[#allocation5 + $0x1538] sm:$0xff]
    %v796 = vld [vmem:[#allocation5 + $0x1540] sm:$0xff]
    %v797 = vld [vmem:[#allocation5 + $0x1548] sm:$0xff]
    %v798 = vld [vmem:[#allocation5 + $0x1550] sm:$0xff]
    %v799 = vld [vmem:[#allocation5 + $0x1558] sm:$0xff]
    %v800 = vld [vmem:[#allocation5 + $0x1560] sm:$0xff]
    %v801 = vld [vmem:[#allocation5 + $0x1568] sm:$0xff]
    %v802 = vld [vmem:[#allocation5 + $0x1570] sm:$0xff]
    %v803 = vld [vmem:[#allocation5 + $0x1578] sm:$0xff]
    %v804 = vld [vmem:[#allocation5 + $0x1580] sm:$0xff]
    %v805 = vld [vmem:[#allocation5 + $0x1588] sm:$0xff]
    %v806 = vld [vmem:[#allocation5 + $0x1590] sm:$0xff]
    %v807 = vld [vmem:[#allocation5 + $0x1598] sm:$0xff]
    %v808 = vld [vmem:[#allocation5 + $0x15a0] sm:$0xff]
    %v809 = vld [vmem:[#allocation5 + $0x15a8] sm:$0xff]
    %v810 = vld [vmem:[#allocation5 + $0x15b0] sm:$0xff]
    %v811 = vld [vmem:[#allocation5 + $0x15b8] sm:$0xff]
    %v812 = vld [vmem:[#allocation5 + $0x15c0] sm:$0xff]
    %v813 = vld [vmem:[#allocation5 + $0x15c8] sm:$0xff]
    %v814 = vld [vmem:[#allocation5 + $0x15d0] sm:$0xff]
    %v815 = vld [vmem:[#allocation5 + $0x15d8] sm:$0xff]
    %v816 = vld [vmem:[#allocation5 + $0x15e0] sm:$0xff]
    %v817 = vld [vmem:[#allocation5 + $0x15e8] sm:$0xff]
    %v818 = vld [vmem:[#allocation5 + $0x15f0] sm:$0xff]
    %v819 = vld [vmem:[#allocation5 + $0x15f8] sm:$0xff]
    %v820 = vld [vmem:[#allocation5 + $0x1600] sm:$0xff]
    %v821 = vld [vmem:[#allocation5 + $0x1608] sm:$0xff]
    %v822 = vld [vmem:[#allocation5 + $0x1610] sm:$0xff]
    %v823 = vld [vmem:[#allocation5 + $0x1618] sm:$0xff]
    %v824 = vld [vmem:[#allocation5 + $0x1620] sm:$0xff]
    %v825 = vld [vmem:[#allocation5 + $0x1628] sm:$0xff]
    %v826 = vld [vmem:[#allocation5 + $0x1630] sm:$0xff]
    %v827 = vld [vmem:[#allocation5 + $0x1638] sm:$0xff]
    %v828 = vld [vmem:[#allocation5 + $0x1640] sm:$0xff]
    %v829 = vld [vmem:[#allocation5 + $0x1648] sm:$0xff]
    %v830 = vld [vmem:[#allocation5 + $0x1650] sm:$0xff]
    %v831 = vld [vmem:[#allocation5 + $0x1658] sm:$0xff]
    %v832 = vld [vmem:[#allocation5 + $0x1660] sm:$0xff]
    %v833 = vld [vmem:[#allocation5 + $0x1668] sm:$0xff]
    %v834 = vld [vmem:[#allocation5 + $0x1670] sm:$0xff]
    %v835 = vld [vmem:[#allocation5 + $0x1678] sm:$0xff]
    %v836 = vld [vmem:[#allocation5 + $0x1680] sm:$0xff]
    %v837 = vld [vmem:[#allocation5 + $0x1688] sm:$0xff]
    %v838 = vld [vmem:[#allocation5 + $0x1690] sm:$0xff]
    %v839 = vld [vmem:[#allocation5 + $0x1698] sm:$0xff]
    %v840 = vld [vmem:[#allocation5 + $0x16a0] sm:$0xff]
    %v841 = vld [vmem:[#allocation5 + $0x16a8] sm:$0xff]
    %v842 = vld [vmem:[#allocation5 + $0x16b0] sm:$0xff]
    %v843 = vld [vmem:[#allocation5 + $0x16b8] sm:$0xff]
    %v844 = vld [vmem:[#allocation5 + $0x16c0] sm:$0xff]
    %v845 = vld [vmem:[#allocation5 + $0x16c8] sm:$0xff]
    %v846 = vld [vmem:[#allocation5 + $0x16d0] sm:$0xff]
    %v847 = vld [vmem:[#allocation5 + $0x16d8] sm:$0xff]
    %v848 = vld [vmem:[#allocation5 + $0x16e0] sm:$0xff]
    %v849 = vld [vmem:[#allocation5 + $0x16e8] sm:$0xff]
    %v850 = vld [vmem:[#allocation5 + $0x16f0] sm:$0xff]
    %v851 = vld [vmem:[#allocation5 + $0x16f8] sm:$0xff]
    %v852 = vld [vmem:[#allocation5 + $0x1700] sm:$0xff]
    %v853 = vld [vmem:[#allocation5 + $0x1708] sm:$0xff]
    %v854 = vld [vmem:[#allocation5 + $0x1710] sm:$0xff]
    %v855 = vld [vmem:[#allocation5 + $0x1718] sm:$0xff]
    %v856 = vld [vmem:[#allocation5 + $0x1720] sm:$0xff]
    %v857 = vld [vmem:[#allocation5 + $0x1728] sm:$0xff]
    %v858 = vld [vmem:[#allocation5 + $0x1730] sm:$0xff]
    %v859 = vld [vmem:[#allocation5 + $0x1738] sm:$0xff]
    %v860 = vld [vmem:[#allocation5 + $0x1740] sm:$0xff]
    %v861 = vld [vmem:[#allocation5 + $0x1748] sm:$0xff]
    %v862 = vld [vmem:[#allocation5 + $0x1750] sm:$0xff]
    %v863 = vld [vmem:[#allocation5 + $0x1758] sm:$0xff]
    %v864 = vld [vmem:[#allocation5 + $0x1760] sm:$0xff]
    %v865 = vld [vmem:[#allocation5 + $0x1768] sm:$0xff]
    %v866 = vld [vmem:[#allocation5 + $0x1770] sm:$0xff]
    %v867 = vld [vmem:[#allocation5 + $0x1778] sm:$0xff]
    %v868 = vld [vmem:[#allocation5 + $0x1780] sm:$0xff]
    %v869 = vld [vmem:[#allocation5 + $0x1788] sm:$0xff]
    %v870 = vld [vmem:[#allocation5 + $0x1790] sm:$0xff]
    %v871 = vld [vmem:[#allocation5 + $0x1798] sm:$0xff]
    %v872 = vld [vmem:[#allocation5 + $0x17a0] sm:$0xff]
    %v873 = vld [vmem:[#allocation5 + $0x17a8] sm:$0xff]
    %v874 = vld [vmem:[#allocation5 + $0x17b0] sm:$0xff]
    %v875 = vld [vmem:[#allocation5 + $0x17b8] sm:$0xff]
    %v876 = vld [vmem:[#allocation5 + $0x17c0] sm:$0xff]
    %v877 = vld [vmem:[#allocation5 + $0x17c8] sm:$0xff]
    %v878 = vld [vmem:[#allocation5 + $0x17d0] sm:$0xff]
    %v879 = vld [vmem:[#allocation5 + $0x17d8] sm:$0xff]
    %v880 = vld [vmem:[#allocation5 + $0x17e0] sm:$0xff]
    %v881 = vld [vmem:[#allocation5 + $0x17e8] sm:$0xff]
    %v882 = vld [vmem:[#allocation5 + $0x17f0] sm:$0xff]
    %v883 = vld [vmem:[#allocation5 + $0x17f8] sm:$0xff]
    %v884 = vld [vmem:[#allocation5 + $0x1800] sm:$0xff]
    %v885 = vld [vmem:[#allocation5 + $0x1808] sm:$0xff]
    %v886 = vld [vmem:[#allocation5 + $0x1810] sm:$0xff]
    %v887 = vld [vmem:[#allocation5 + $0x1818] sm:$0xff]
    %v888 = vld [vmem:[#allocation5 + $0x1820] sm:$0xff]
    %v889 = vld [vmem:[#allocation5 + $0x1828] sm:$0xff]
    %v890 = vld [vmem:[#allocation5 + $0x1830] sm:$0xff]
    %v891 = vld [vmem:[#allocation5 + $0x1838] sm:$0xff]
    %v892 = vld [vmem:[#allocation5 + $0x1840] sm:$0xff]
    %v893 = vld [vmem:[#allocation5 + $0x1848] sm:$0xff]
    %v894 = vld [vmem:[#allocation5 + $0x1850] sm:$0xff]
    %v895 = vld [vmem:[#allocation5 + $0x1858] sm:$0xff]
    %v896 = vld [vmem:[#allocation5 + $0x1860] sm:$0xff]
    %v897 = vld [vmem:[#allocation5 + $0x1868] sm:$0xff]
    %v898 = vld [vmem:[#allocation5 + $0x1870] sm:$0xff]
    %v899 = vld [vmem:[#allocation5 + $0x1878] sm:$0xff]
    %v900 = vld [vmem:[#allocation5 + $0x1880] sm:$0xff]
    %v901 = vld [vmem:[#allocation5 + $0x1888] sm:$0xff]
    %v902 = vld [vmem:[#allocation5 + $0x1890] sm:$0xff]
    %v903 = vld [vmem:[#allocation5 + $0x1898] sm:$0xff]
    %v904 = vld [vmem:[#allocation5 + $0x18a0] sm:$0xff]
    %v905 = vld [vmem:[#allocation5 + $0x18a8] sm:$0xff]
    %v906 = vld [vmem:[#allocation5 + $0x18b0] sm:$0xff]
    %v907 = vld [vmem:[#allocation5 + $0x18b8] sm:$0xff]
    %v908 = vld [vmem:[#allocation5 + $0x18c0] sm:$0xff]
    %v909 = vld [vmem:[#allocation5 + $0x18c8] sm:$0xff]
    %v910 = vld [vmem:[#allocation5 + $0x18d0] sm:$0xff]
    %v911 = vld [vmem:[#allocation5 + $0x18d8] sm:$0xff]
    %v912 = vld [vmem:[#allocation5 + $0x18e0] sm:$0xff]
    %v913 = vld [vmem:[#allocation5 + $0x18e8] sm:$0xff]
    %v914 = vld [vmem:[#allocation5 + $0x18f0] sm:$0xff]
    %v915 = vld [vmem:[#allocation5 + $0x18f8] sm:$0xff]
    %v916 = vld [vmem:[#allocation5 + $0x1900] sm:$0xff]
    %v917 = vld [vmem:[#allocation5 + $0x1908] sm:$0xff]
    %v918 = vld [vmem:[#allocation5 + $0x1910] sm:$0xff]
    %v919 = vld [vmem:[#allocation5 + $0x1918] sm:$0xff]
    %v920 = vld [vmem:[#allocation5 + $0x1920] sm:$0xff]
    %v921 = vld [vmem:[#allocation5 + $0x1928] sm:$0xff]
    %v922 = vld [vmem:[#allocation5 + $0x1930] sm:$0xff]
    %v923 = vld [vmem:[#allocation5 + $0x1938] sm:$0xff]
    %v924 = vld [vmem:[#allocation5 + $0x1940] sm:$0xff]
    %v925 = vld [vmem:[#allocation5 + $0x1948] sm:$0xff]
    %v926 = vld [vmem:[#allocation5 + $0x1950] sm:$0xff]
    %v927 = vld [vmem:[#allocation5 + $0x1958] sm:$0xff]
    %v928 = vld [vmem:[#allocation5 + $0x1960] sm:$0xff]
    %v929 = vld [vmem:[#allocation5 + $0x1968] sm:$0xff]
    %v930 = vld [vmem:[#allocation5 + $0x1970] sm:$0xff]
    %v931 = vld [vmem:[#allocation5 + $0x1978] sm:$0xff]
    %v932 = vld [vmem:[#allocation5 + $0x1980] sm:$0xff]
    %v933 = vld [vmem:[#allocation5 + $0x1988] sm:$0xff]
    %v934 = vld [vmem:[#allocation5 + $0x1990] sm:$0xff]
    %v935 = vld [vmem:[#allocation5 + $0x1998] sm:$0xff]
    %v936 = vld [vmem:[#allocation5 + $0x19a0] sm:$0xff]
    %v937 = vld [vmem:[#allocation5 + $0x19a8] sm:$0xff]
    %v938 = vld [vmem:[#allocation5 + $0x19b0] sm:$0xff]
    %v939 = vld [vmem:[#allocation5 + $0x19b8] sm:$0xff]
    %v940 = vld [vmem:[#allocation5 + $0x19c0] sm:$0xff]
    %v941 = vld [vmem:[#allocation5 + $0x19c8] sm:$0xff]
    %v942 = vld [vmem:[#allocation5 + $0x19d0] sm:$0xff]
    %v943 = vld [vmem:[#allocation5 + $0x19d8] sm:$0xff]
    %v944 = vld [vmem:[#allocation5 + $0x19e0] sm:$0xff]
    %v945 = vld [vmem:[#allocation5 + $0x19e8] sm:$0xff]
    %v946 = vld [vmem:[#allocation5 + $0x19f0] sm:$0xff]
    %v947 = vld [vmem:[#allocation5 + $0x19f8] sm:$0xff]
    %v948 = vld [vmem:[#allocation5 + $0x1a00] sm:$0xff]
    %v949 = vld [vmem:[#allocation5 + $0x1a08] sm:$0xff]
    %v950 = vld [vmem:[#allocation5 + $0x1a10] sm:$0xff]
    %v951 = vld [vmem:[#allocation5 + $0x1a18] sm:$0xff]
    %v952 = vld [vmem:[#allocation5 + $0x1a20] sm:$0xff]
    %v953 = vld [vmem:[#allocation5 + $0x1a28] sm:$0xff]
    %v954 = vld [vmem:[#allocation5 + $0x1a30] sm:$0xff]
    %v955 = vld [vmem:[#allocation5 + $0x1a38] sm:$0xff]
    %v956 = vld [vmem:[#allocation5 + $0x1a40] sm:$0xff]
    %v957 = vld [vmem:[#allocation5 + $0x1a48] sm:$0xff]
    %v958 = vld [vmem:[#allocation5 + $0x1a50] sm:$0xff]
    %v959 = vld [vmem:[#allocation5 + $0x1a58] sm:$0xff]
    %v960 = vld [vmem:[#allocation5 + $0x1a60] sm:$0xff]
    %v961 = vld [vmem:[#allocation5 + $0x1a68] sm:$0xff]
    %v962 = vld [vmem:[#allocation5 + $0x1a70] sm:$0xff]
    %v963 = vld [vmem:[#allocation5 + $0x1a78] sm:$0xff]
    %v964 = vld [vmem:[#allocation5 + $0x1a80] sm:$0xff]
    %v965 = vld [vmem:[#allocation5 + $0x1a88] sm:$0xff]
    %v966 = vld [vmem:[#allocation5 + $0x1a90] sm:$0xff]
    %v967 = vld [vmem:[#allocation5 + $0x1a98] sm:$0xff]
    %v968 = vld [vmem:[#allocation5 + $0x1aa0] sm:$0xff]
    %v969 = vld [vmem:[#allocation5 + $0x1aa8] sm:$0xff]
    %v970 = vld [vmem:[#allocation5 + $0x1ab0] sm:$0xff]
    %v971 = vld [vmem:[#allocation5 + $0x1ab8] sm:$0xff]
    %v972 = vld [vmem:[#allocation5 + $0x1ac0] sm:$0xff]
    %v973 = vld [vmem:[#allocation5 + $0x1ac8] sm:$0xff]
    %v974 = vld [vmem:[#allocation5 + $0x1ad0] sm:$0xff]
    %v975 = vld [vmem:[#allocation5 + $0x1ad8] sm:$0xff]
    %v976 = vld [vmem:[#allocation5 + $0x1ae0] sm:$0xff]
    %v977 = vld [vmem:[#allocation5 + $0x1ae8] sm:$0xff]
    %v978 = vld [vmem:[#allocation5 + $0x1af0] sm:$0xff]
    %v979 = vld [vmem:[#allocation5 + $0x1af8] sm:$0xff]
    %v980 = vld [vmem:[#allocation5 + $0x1b00] sm:$0xff]
    %v981 = vld [vmem:[#allocation5 + $0x1b08] sm:$0xff]
    %v982 = vld [vmem:[#allocation5 + $0x1b10] sm:$0xff]
    %v983 = vld [vmem:[#allocation5 + $0x1b18] sm:$0xff]
    %v984 = vld [vmem:[#allocation5 + $0x1b20] sm:$0xff]
    %v985 = vld [vmem:[#allocation5 + $0x1b28] sm:$0xff]
    %v986 = vld [vmem:[#allocation5 + $0x1b30] sm:$0xff]
    %v987 = vld [vmem:[#allocation5 + $0x1b38] sm:$0xff]
    %v988 = vld [vmem:[#allocation5 + $0x1b40] sm:$0xff]
    %v989 = vld [vmem:[#allocation5 + $0x1b48] sm:$0xff]
    %v990 = vld [vmem:[#allocation5 + $0x1b50] sm:$0xff]
    %v991 = vld [vmem:[#allocation5 + $0x1b58] sm:$0xff]
    %v992 = vld [vmem:[#allocation5 + $0x1b60] sm:$0xff]
    %v993 = vld [vmem:[#allocation5 + $0x1b68] sm:$0xff]
    %v994 = vld [vmem:[#allocation5 + $0x1b70] sm:$0xff]
    %v995 = vld [vmem:[#allocation5 + $0x1b78] sm:$0xff]
    %v996 = vld [vmem:[#allocation5 + $0x1b80] sm:$0xff]
    %v997 = vld [vmem:[#allocation5 + $0x1b88] sm:$0xff]
    %v998 = vld [vmem:[#allocation5 + $0x1b90] sm:$0xff]
    %v999 = vld [vmem:[#allocation5 + $0x1b98] sm:$0xff]
    %v1000 = vld [vmem:[#allocation5 + $0x1ba0] sm:$0xff]
    %v1001 = vld [vmem:[#allocation5 + $0x1ba8] sm:$0xff]
    %v1002 = vld [vmem:[#allocation5 + $0x1bb0] sm:$0xff]
    %v1003 = vld [vmem:[#allocation5 + $0x1bb8] sm:$0xff]
    %v1004 = vld [vmem:[#allocation5 + $0x1bc0] sm:$0xff]
    %v1005 = vld [vmem:[#allocation5 + $0x1bc8] sm:$0xff]
    %v1006 = vld [vmem:[#allocation5 + $0x1bd0] sm:$0xff]
    %v1007 = vld [vmem:[#allocation5 + $0x1bd8] sm:$0xff]
    %v1008 = vld [vmem:[#allocation5 + $0x1be0] sm:$0xff]
    %v1009 = vld [vmem:[#allocation5 + $0x1be8] sm:$0xff]
    %v1010 = vld [vmem:[#allocation5 + $0x1bf0] sm:$0xff]
    %v1011 = vld [vmem:[#allocation5 + $0x1bf8] sm:$0xff]
    %v1012 = vld [vmem:[#allocation5 + $0x1c00] sm:$0xff]
    %v1013 = vld [vmem:[#allocation5 + $0x1c08] sm:$0xff]
    %v1014 = vld [vmem:[#allocation5 + $0x1c10] sm:$0xff]
    %v1015 = vld [vmem:[#allocation5 + $0x1c18] sm:$0xff]
    %v1016 = vld [vmem:[#allocation5 + $0x1c20] sm:$0xff]
    %v1017 = vld [vmem:[#allocation5 + $0x1c28] sm:$0xff]
    %v1018 = vld [vmem:[#allocation5 + $0x1c30] sm:$0xff]
    %v1019 = vld [vmem:[#allocation5 + $0x1c38] sm:$0xff]
    %v1020 = vld [vmem:[#allocation5 + $0x1c40] sm:$0xff]
    %v1021 = vld [vmem:[#allocation5 + $0x1c48] sm:$0xff]
    %v1022 = vld [vmem:[#allocation5 + $0x1c50] sm:$0xff]
    %v1023 = vld [vmem:[#allocation5 + $0x1c58] sm:$0xff]
    %v1024 = vld [vmem:[#allocation5 + $0x1c60] sm:$0xff]
    %v1025 = vld [vmem:[#allocation5 + $0x1c68] sm:$0xff]
    %v1026 = vld [vmem:[#allocation5 + $0x1c70] sm:$0xff]
    %v1027 = vld [vmem:[#allocation5 + $0x1c78] sm:$0xff]
    %v1028 = vld [vmem:[#allocation5 + $0x1c80] sm:$0xff]
    %v1029 = vld [vmem:[#allocation5 + $0x1c88] sm:$0xff]
    %v1030 = vld [vmem:[#allocation5 + $0x1c90] sm:$0xff]
    %v1031 = vld [vmem:[#allocation5 + $0x1c98] sm:$0xff]
    %v1032 = vld [vmem:[#allocation5 + $0x1ca0] sm:$0xff]
    %v1033 = vld [vmem:[#allocation5 + $0x1ca8] sm:$0xff]
    %v1034 = vld [vmem:[#allocation5 + $0x1cb0] sm:$0xff]
    %v1035 = vld [vmem:[#allocation5 + $0x1cb8] sm:$0xff]
    %v1036 = vld [vmem:[#allocation5 + $0x1cc0] sm:$0xff]
    %v1037 = vld [vmem:[#allocation5 + $0x1cc8] sm:$0xff]
    %v1038 = vld [vmem:[#allocation5 + $0x1cd0] sm:$0xff]
    %v1039 = vld [vmem:[#allocation5 + $0x1cd8] sm:$0xff]
    %v1040 = vld [vmem:[#allocation5 + $0x1ce0] sm:$0xff]
    %v1041 = vld [vmem:[#allocation5 + $0x1ce8] sm:$0xff]
    %v1042 = vld [vmem:[#allocation5 + $0x1cf0] sm:$0xff]
    %v1043 = vld [vmem:[#allocation5 + $0x1cf8] sm:$0xff]
    %v1044 = vld [vmem:[#allocation5 + $0x1d00] sm:$0xff]
    %v1045 = vld [vmem:[#allocation5 + $0x1d08] sm:$0xff]
    %v1046 = vld [vmem:[#allocation5 + $0x1d10] sm:$0xff]
    %v1047 = vld [vmem:[#allocation5 + $0x1d18] sm:$0xff]
    %v1048 = vld [vmem:[#allocation5 + $0x1d20] sm:$0xff]
    %v1049 = vld [vmem:[#allocation5 + $0x1d28] sm:$0xff]
    %v1050 = vld [vmem:[#allocation5 + $0x1d30] sm:$0xff]
    %v1051 = vld [vmem:[#allocation5 + $0x1d38] sm:$0xff]
    %v1052 = vld [vmem:[#allocation5 + $0x1d40] sm:$0xff]
    %v1053 = vld [vmem:[#allocation5 + $0x1d48] sm:$0xff]
    %v1054 = vld [vmem:[#allocation5 + $0x1d50] sm:$0xff]
    %v1055 = vld [vmem:[#allocation5 + $0x1d58] sm:$0xff]
    %v1056 = vld [vmem:[#allocation5 + $0x1d60] sm:$0xff]
    %v1057 = vld [vmem:[#allocation5 + $0x1d68] sm:$0xff]
    %v1058 = vld [vmem:[#allocation5 + $0x1d70] sm:$0xff]
    %v1059 = vld [vmem:[#allocation5 + $0x1d78] sm:$0xff]
    %v1060 = vld [vmem:[#allocation5 + $0x1d80] sm:$0xff]
    %v1061 = vld [vmem:[#allocation5 + $0x1d88] sm:$0xff]
    %v1062 = vld [vmem:[#allocation5 + $0x1d90] sm:$0xff]
    %v1063 = vld [vmem:[#allocation5 + $0x1d98] sm:$0xff]
    %v1064 = vld [vmem:[#allocation5 + $0x1da0] sm:$0xff]
    %v1065 = vld [vmem:[#allocation5 + $0x1da8] sm:$0xff]
    %v1066 = vld [vmem:[#allocation5 + $0x1db0] sm:$0xff]
    %v1067 = vld [vmem:[#allocation5 + $0x1db8] sm:$0xff]
    %v1068 = vld [vmem:[#allocation5 + $0x1dc0] sm:$0xff]
    %v1069 = vld [vmem:[#allocation5 + $0x1dc8] sm:$0xff]
    %v1070 = vld [vmem:[#allocation5 + $0x1dd0] sm:$0xff]
    %v1071 = vld [vmem:[#allocation5 + $0x1dd8] sm:$0xff]
    %v1072 = vld [vmem:[#allocation5 + $0x1de0] sm:$0xff]
    %v1073 = vld [vmem:[#allocation5 + $0x1de8] sm:$0xff]
    %v1074 = vld [vmem:[#allocation5 + $0x1df0] sm:$0xff]
    %v1075 = vld [vmem:[#allocation5 + $0x1df8] sm:$0xff]
    %v1076 = vld [vmem:[#allocation5 + $0x1e00] sm:$0xff]
    %v1077 = vld [vmem:[#allocation5 + $0x1e08] sm:$0xff]
    %v1078 = vld [vmem:[#allocation5 + $0x1e10] sm:$0xff]
    %v1079 = vld [vmem:[#allocation5 + $0x1e18] sm:$0xff]
    %v1080 = vld [vmem:[#allocation5 + $0x1e20] sm:$0xff]
    %v1081 = vld [vmem:[#allocation5 + $0x1e28] sm:$0xff]
    %v1082 = vld [vmem:[#allocation5 + $0x1e30] sm:$0xff]
    %v1083 = vld [vmem:[#allocation5 + $0x1e38] sm:$0xff]
    %v1084 = vld [vmem:[#allocation5 + $0x1e40] sm:$0xff]
    %v1085 = vld [vmem:[#allocation5 + $0x1e48] sm:$0xff]
    %v1086 = vld [vmem:[#allocation5 + $0x1e50] sm:$0xff]
    %v1087 = vld [vmem:[#allocation5 + $0x1e58] sm:$0xff]
    %v1088 = vld [vmem:[#allocation5 + $0x1e60] sm:$0xff]
    %v1089 = vld [vmem:[#allocation5 + $0x1e68] sm:$0xff]
    %v1090 = vld [vmem:[#allocation5 + $0x1e70] sm:$0xff]
    %v1091 = vld [vmem:[#allocation5 + $0x1e78] sm:$0xff]
    %v1092 = vld [vmem:[#allocation5 + $0x1e80] sm:$0xff]
    %v1093 = vld [vmem:[#allocation5 + $0x1e88] sm:$0xff]
    %v1094 = vld [vmem:[#allocation5 + $0x1e90] sm:$0xff]
    %v1095 = vld [vmem:[#allocation5 + $0x1e98] sm:$0xff]
    %v1096 = vld [vmem:[#allocation5 + $0x1ea0] sm:$0xff]
    %v1097 = vld [vmem:[#allocation5 + $0x1ea8] sm:$0xff]
    %v1098 = vld [vmem:[#allocation5 + $0x1eb0] sm:$0xff]
    %v1099 = vld [vmem:[#allocation5 + $0x1eb8] sm:$0xff]
    %v1100 = vld [vmem:[#allocation5 + $0x1ec0] sm:$0xff]
    %v1101 = vld [vmem:[#allocation5 + $0x1ec8] sm:$0xff]
    %v1102 = vld [vmem:[#allocation5 + $0x1ed0] sm:$0xff]
    %v1103 = vld [vmem:[#allocation5 + $0x1ed8] sm:$0xff]
    %v1104 = vld [vmem:[#allocation5 + $0x1ee0] sm:$0xff]
    %v1105 = vld [vmem:[#allocation5 + $0x1ee8] sm:$0xff]
    %v1106 = vld [vmem:[#allocation5 + $0x1ef0] sm:$0xff]
    %v1107 = vld [vmem:[#allocation5 + $0x1ef8] sm:$0xff]
    %v1108 = vld [vmem:[#allocation5 + $0x1f00] sm:$0xff]
    %v1109 = vld [vmem:[#allocation5 + $0x1f08] sm:$0xff]
    %v1110 = vld [vmem:[#allocation5 + $0x1f10] sm:$0xff]
    %v1111 = vld [vmem:[#allocation5 + $0x1f18] sm:$0xff]
    %v1112 = vld [vmem:[#allocation5 + $0x1f20] sm:$0xff]
    %v1113 = vld [vmem:[#allocation5 + $0x1f28] sm:$0xff]
    %v1114 = vld [vmem:[#allocation5 + $0x1f30] sm:$0xff]
    %v1115 = vld [vmem:[#allocation5 + $0x1f38] sm:$0xff]
    %v1116 = vld [vmem:[#allocation5 + $0x1f40] sm:$0xff]
    %v1117 = vld [vmem:[#allocation5 + $0x1f48] sm:$0xff]
    %v1118 = vld [vmem:[#allocation5 + $0x1f50] sm:$0xff]
    %v1119 = vld [vmem:[#allocation5 + $0x1f58] sm:$0xff]
    %v1120 = vld [vmem:[#allocation5 + $0x1f60] sm:$0xff]
    %v1121 = vld [vmem:[#allocation5 + $0x1f68] sm:$0xff]
    %v1122 = vld [vmem:[#allocation5 + $0x1f70] sm:$0xff]
    %v1123 = vld [vmem:[#allocation5 + $0x1f78] sm:$0xff]
    %v1124 = vld [vmem:[#allocation5 + $0x1f80] sm:$0xff]
    %v1125 = vld [vmem:[#allocation5 + $0x1f88] sm:$0xff]
    %v1126 = vld [vmem:[#allocation5 + $0x1f90] sm:$0xff]
    %v1127 = vld [vmem:[#allocation5 + $0x1f98] sm:$0xff]
    %v1128 = vld [vmem:[#allocation5 + $0x1fa0] sm:$0xff]
    %v1129 = vld [vmem:[#allocation5 + $0x1fa8] sm:$0xff]
    %v1130 = vld [vmem:[#allocation5 + $0x1fb0] sm:$0xff]
    %v1131 = vld [vmem:[#allocation5 + $0x1fb8] sm:$0xff]
    %v1132 = vld [vmem:[#allocation5 + $0x1fc0] sm:$0xff]
    %v1133 = vld [vmem:[#allocation5 + $0x1fc8] sm:$0xff]
    %v1134 = vld [vmem:[#allocation5 + $0x1fd0] sm:$0xff]
    %v1135 = vld [vmem:[#allocation5 + $0x1fd8] sm:$0xff]
    %v1136 = vld [vmem:[#allocation5 + $0x1fe0] sm:$0xff]
    %v1137 = vld [vmem:[#allocation5 + $0x1fe8] sm:$0xff]
    %v1138 = vld [vmem:[#allocation5 + $0x1ff0] sm:$0xff]
    %v1139 = vld [vmem:[#allocation5 + $0x1ff8] sm:$0xff]
    %v1140 = vld [vmem:[#allocation7] sm:$0x1]
    %v1142 = vlaneseq
    %v1143 = vshrl.u32 %v1142, 7
    %v1144 = vsub.s32 0, %v1143
    %v1145 = vrot.slane %v1140, %v1144
    %1147 = vmatprep.subr.mxu0 0.0
    %1148 = vmatpush1.msra.mxu0 %v116
    %1149 = vmatprep.subr.mxu0 0.0
    %1150 = vmatpush1.msra.mxu0 %v117
    %1151 = vmatprep.subr.mxu0 0.0
    %1152 = vmatpush1.msra.mxu0 %v118
    %1153 = vmatprep.subr.mxu0 0.0
    %1154 = vmatpush1.msra.mxu0 %v119
    %1155 = vmatprep.subr.mxu0 0.0
    %1156 = vmatpush1.msra.mxu0 %v120
    %1157 = vmatprep.subr.mxu0 0.0
    %1158 = vmatpush1.msra.mxu0 %v121
    %1159 = vmatprep.subr.mxu0 0.0
    %1160 = vmatpush1.msra.mxu0 %v122
    %1161 = vmatprep.subr.mxu0 0.0
    %1162 = vmatpush1.msra.mxu0 %v123
    %1163 = vmatprep.subr.mxu0 0.0
    %1164 = vmatpush1.msra.mxu0 %v124
    %1165 = vmatprep.subr.mxu0 0.0
    %1166 = vmatpush1.msra.mxu0 %v125
    %1167 = vmatprep.subr.mxu0 0.0
    %1168 = vmatpush1.msra.mxu0 %v126
    %1169 = vmatprep.subr.mxu0 0.0
    %1170 = vmatpush1.msra.mxu0 %v127
    %1171 = vmatprep.subr.mxu0 0.0
    %1172 = vmatpush1.msra.mxu0 %v128
    %1173 = vmatprep.subr.mxu0 0.0
    %1174 = vmatpush1.msra.mxu0 %v129
    %1175 = vmatprep.subr.mxu0 0.0
    %1176 = vmatpush1.msra.mxu0 %v130
    %1177 = vmatprep.subr.mxu0 0.0
    %1178 = vmatpush1.msra.mxu0 %v131
    %1179 = vmatprep.subr.mxu0 0.0
    %1180 = vmatpush1.msra.mxu0 %v132
    %1181 = vmatprep.subr.mxu0 0.0
    %1182 = vmatpush1.msra.mxu0 %v133
    %1183 = vmatprep.subr.mxu0 0.0
    %1184 = vmatpush1.msra.mxu0 %v134
    %1185 = vmatprep.subr.mxu0 0.0
    %1186 = vmatpush1.msra.mxu0 %v135
    %1187 = vmatprep.subr.mxu0 0.0
    %1188 = vmatpush1.msra.mxu0 %v136
    %1189 = vmatprep.subr.mxu0 0.0
    %1190 = vmatpush1.msra.mxu0 %v137
    %1191 = vmatprep.subr.mxu0 0.0
    %1192 = vmatpush1.msra.mxu0 %v138
    %1193 = vmatprep.subr.mxu0 0.0
    %1194 = vmatpush1.msra.mxu0 %v139
    %1195 = vmatprep.subr.mxu0 0.0
    %1196 = vmatpush1.msra.mxu0 %v140
    %1197 = vmatprep.subr.mxu0 0.0
    %1198 = vmatpush1.msra.mxu0 %v141
    %1199 = vmatprep.subr.mxu0 0.0
    %1200 = vmatpush1.msra.mxu0 %v142
    %1201 = vmatprep.subr.mxu0 0.0
    %1202 = vmatpush1.msra.mxu0 %v143
    %1203 = vmatprep.subr.mxu0 0.0
    %1204 = vmatpush1.msra.mxu0 %v144
    %1205 = vmatprep.subr.mxu0 0.0
    %1206 = vmatpush1.msra.mxu0 %v145
    %1207 = vmatprep.subr.mxu0 0.0
    %1208 = vmatpush1.msra.mxu0 %v146
    %1209 = vmatprep.subr.mxu0 0.0
    %1210 = vmatpush1.msra.mxu0 %v147
    %1211 = vmatprep.mubr.f32.mxu0 %v53
    %1212 = vmatmul.mubr.f32.gmra.mrb[0].mxu0 %v52
    %v1213 = vpop.f32.mrb[0].mxu0
    %v1214 = vadd.f32 %v1145, %v1213
    %v1215 = vpop.f32.mrb[0].mxu0
    %1216 = vdwg.mxu0
    %1217 = vmatprep.subr.mxu0 0.0
    %1218 = vmatpush1.msra.mxu0 %v148
    %1219 = vmatprep.subr.mxu0 0.0
    %1220 = vmatpush1.msra.mxu0 %v149
    %1221 = vmatprep.subr.mxu0 0.0
    %1222 = vmatpush1.msra.mxu0 %v150
    %1223 = vmatprep.subr.mxu0 0.0
    %1224 = vmatpush1.msra.mxu0 %v151
    %1225 = vmatprep.subr.mxu0 0.0
    %1226 = vmatpush1.msra.mxu0 %v152
    %1227 = vmatprep.subr.mxu0 0.0
    %1228 = vmatpush1.msra.mxu0 %v153
    %1229 = vmatprep.subr.mxu0 0.0
    %1230 = vmatpush1.msra.mxu0 %v154
    %1231 = vmatprep.subr.mxu0 0.0
    %1232 = vmatpush1.msra.mxu0 %v155
    %1233 = vmatprep.subr.mxu0 0.0
    %1234 = vmatpush1.msra.mxu0 %v156
    %1235 = vmatprep.subr.mxu0 0.0
    %1236 = vmatpush1.msra.mxu0 %v157
    %1237 = vmatprep.subr.mxu0 0.0
    %1238 = vmatpush1.msra.mxu0 %v158
    %1239 = vmatprep.subr.mxu0 0.0
    %1240 = vmatpush1.msra.mxu0 %v159
    %1241 = vmatprep.subr.mxu0 0.0
    %1242 = vmatpush1.msra.mxu0 %v160
    %1243 = vmatprep.subr.mxu0 0.0
    %1244 = vmatpush1.msra.mxu0 %v161
    %1245 = vmatprep.subr.mxu0 0.0
    %1246 = vmatpush1.msra.mxu0 %v162
    %1247 = vmatprep.subr.mxu0 0.0
    %1248 = vmatpush1.msra.mxu0 %v163
    %1249 = vmatprep.subr.mxu0 0.0
    %1250 = vmatpush1.msra.mxu0 %v164
    %1251 = vmatprep.subr.mxu0 0.0
    %1252 = vmatpush1.msra.mxu0 %v165
    %1253 = vmatprep.subr.mxu0 0.0
    %1254 = vmatpush1.msra.mxu0 %v166
    %1255 = vmatprep.subr.mxu0 0.0
    %1256 = vmatpush1.msra.mxu0 %v167
    %1257 = vmatprep.subr.mxu0 0.0
    %1258 = vmatpush1.msra.mxu0 %v168
    %1259 = vmatprep.subr.mxu0 0.0
    %1260 = vmatpush1.msra.mxu0 %v169
    %1261 = vmatprep.subr.mxu0 0.0
    %1262 = vmatpush1.msra.mxu0 %v170
    %1263 = vmatprep.subr.mxu0 0.0
    %1264 = vmatpush1.msra.mxu0 %v171
    %1265 = vmatprep.subr.mxu0 0.0
    %1266 = vmatpush1.msra.mxu0 %v172
    %1267 = vmatprep.subr.mxu0 0.0
    %1268 = vmatpush1.msra.mxu0 %v173
    %1269 = vmatprep.subr.mxu0 0.0
    %1270 = vmatpush1.msra.mxu0 %v174
    %1271 = vmatprep.subr.mxu0 0.0
    %1272 = vmatpush1.msra.mxu0 %v175
    %1273 = vmatprep.subr.mxu0 0.0
    %1274 = vmatpush1.msra.mxu0 %v176
    %1275 = vmatprep.subr.mxu0 0.0
    %1276 = vmatpush1.msra.mxu0 %v177
    %1277 = vmatprep.subr.mxu0 0.0
    %1278 = vmatpush1.msra.mxu0 %v178
    %1279 = vmatprep.subr.mxu0 0.0
    %1280 = vmatpush1.msra.mxu0 %v179
    %1281 = vmatprep.mubr.f32.mxu0 %v55
    %1282 = vmatmul.mubr.f32.gmra.mrb[0].mxu0 %v54
    %v1283 = vpop.f32.mrb[0].mxu0
    %v1284 = vadd.f32 %v1214, %v1283
    %v1285 = vpop.f32.mrb[0].mxu0
    %1286 = vdwg.mxu0
    %1287 = vmatprep.subr.mxu0 0.0
    %1288 = vmatpush1.msra.mxu0 %v180
    %1289 = vmatprep.subr.mxu0 0.0
    %1290 = vmatpush1.msra.mxu0 %v181
    %1291 = vmatprep.subr.mxu0 0.0
    %1292 = vmatpush1.msra.mxu0 %v182
    %1293 = vmatprep.subr.mxu0 0.0
    %1294 = vmatpush1.msra.mxu0 %v183
    %1295 = vmatprep.subr.mxu0 0.0
    %1296 = vmatpush1.msra.mxu0 %v184
    %1297 = vmatprep.subr.mxu0 0.0
    %1298 = vmatpush1.msra.mxu0 %v185
    %1299 = vmatprep.subr.mxu0 0.0
    %1300 = vmatpush1.msra.mxu0 %v186
    %1301 = vmatprep.subr.mxu0 0.0
    %1302 = vmatpush1.msra.mxu0 %v187
    %1303 = vmatprep.subr.mxu0 0.0
    %1304 = vmatpush1.msra.mxu0 %v188
    %1305 = vmatprep.subr.mxu0 0.0
    %1306 = vmatpush1.msra.mxu0 %v189
    %1307 = vmatprep.subr.mxu0 0.0
    %1308 = vmatpush1.msra.mxu0 %v190
    %1309 = vmatprep.subr.mxu0 0.0
    %1310 = vmatpush1.msra.mxu0 %v191
    %1311 = vmatprep.subr.mxu0 0.0
    %1312 = vmatpush1.msra.mxu0 %v192
    %1313 = vmatprep.subr.mxu0 0.0
    %1314 = vmatpush1.msra.mxu0 %v193
    %1315 = vmatprep.subr.mxu0 0.0
    %1316 = vmatpush1.msra.mxu0 %v194
    %1317 = vmatprep.subr.mxu0 0.0
    %1318 = vmatpush1.msra.mxu0 %v195
    %1319 = vmatprep.subr.mxu0 0.0
    %1320 = vmatpush1.msra.mxu0 %v196
    %1321 = vmatprep.subr.mxu0 0.0
    %1322 = vmatpush1.msra.mxu0 %v197
    %1323 = vmatprep.subr.mxu0 0.0
    %1324 = vmatpush1.msra.mxu0 %v198
    %1325 = vmatprep.subr.mxu0 0.0
    %1326 = vmatpush1.msra.mxu0 %v199
    %1327 = vmatprep.subr.mxu0 0.0
    %1328 = vmatpush1.msra.mxu0 %v200
    %1329 = vmatprep.subr.mxu0 0.0
    %1330 = vmatpush1.msra.mxu0 %v201
    %1331 = vmatprep.subr.mxu0 0.0
    %1332 = vmatpush1.msra.mxu0 %v202
    %1333 = vmatprep.subr.mxu0 0.0
    %1334 = vmatpush1.msra.mxu0 %v203
    %1335 = vmatprep.subr.mxu0 0.0
    %1336 = vmatpush1.msra.mxu0 %v204
    %1337 = vmatprep.subr.mxu0 0.0
    %1338 = vmatpush1.msra.mxu0 %v205
    %1339 = vmatprep.subr.mxu0 0.0
    %1340 = vmatpush1.msra.mxu0 %v206
    %1341 = vmatprep.subr.mxu0 0.0
    %1342 = vmatpush1.msra.mxu0 %v207
    %1343 = vmatprep.subr.mxu0 0.0
    %1344 = vmatpush1.msra.mxu0 %v208
    %1345 = vmatprep.subr.mxu0 0.0
    %1346 = vmatpush1.msra.mxu0 %v209
    %1347 = vmatprep.subr.mxu0 0.0
    %1348 = vmatpush1.msra.mxu0 %v210
    %1349 = vmatprep.subr.mxu0 0.0
    %1350 = vmatpush1.msra.mxu0 %v211
    %1351 = vmatprep.mubr.f32.mxu0 %v57
    %1352 = vmatmul.mubr.f32.gmra.mrb[0].mxu0 %v56
    %v1353 = vpop.f32.mrb[0].mxu0
    %v1354 = vadd.f32 %v1284, %v1353
    %v1355 = vpop.f32.mrb[0].mxu0
    %1356 = vdwg.mxu0
    %1357 = vmatprep.subr.mxu0 0.0
    %1358 = vmatpush1.msra.mxu0 %v212
    %1359 = vmatprep.subr.mxu0 0.0
    %1360 = vmatpush1.msra.mxu0 %v213
    %1361 = vmatprep.subr.mxu0 0.0
    %1362 = vmatpush1.msra.mxu0 %v214
    %1363 = vmatprep.subr.mxu0 0.0
    %1364 = vmatpush1.msra.mxu0 %v215
    %1365 = vmatprep.subr.mxu0 0.0
    %1366 = vmatpush1.msra.mxu0 %v216
    %1367 = vmatprep.subr.mxu0 0.0
    %1368 = vmatpush1.msra.mxu0 %v217
    %1369 = vmatprep.subr.mxu0 0.0
    %1370 = vmatpush1.msra.mxu0 %v218
    %1371 = vmatprep.subr.mxu0 0.0
    %1372 = vmatpush1.msra.mxu0 %v219
    %1373 = vmatprep.subr.mxu0 0.0
    %1374 = vmatpush1.msra.mxu0 %v220
    %1375 = vmatprep.subr.mxu0 0.0
    %1376 = vmatpush1.msra.mxu0 %v221
    %1377 = vmatprep.subr.mxu0 0.0
    %1378 = vmatpush1.msra.mxu0 %v222
    %1379 = vmatprep.subr.mxu0 0.0
    %1380 = vmatpush1.msra.mxu0 %v223
    %1381 = vmatprep.subr.mxu0 0.0
    %1382 = vmatpush1.msra.mxu0 %v224
    %1383 = vmatprep.subr.mxu0 0.0
    %1384 = vmatpush1.msra.mxu0 %v225
    %1385 = vmatprep.subr.mxu0 0.0
    %1386 = vmatpush1.msra.mxu0 %v226
    %1387 = vmatprep.subr.mxu0 0.0
    %1388 = vmatpush1.msra.mxu0 %v227
    %1389 = vmatprep.subr.mxu0 0.0
    %1390 = vmatpush1.msra.mxu0 %v228
    %1391 = vmatprep.subr.mxu0 0.0
    %1392 = vmatpush1.msra.mxu0 %v229
    %1393 = vmatprep.subr.mxu0 0.0
    %1394 = vmatpush1.msra.mxu0 %v230
    %1395 = vmatprep.subr.mxu0 0.0
    %1396 = vmatpush1.msra.mxu0 %v231
    %1397 = vmatprep.subr.mxu0 0.0
    %1398 = vmatpush1.msra.mxu0 %v232
    %1399 = vmatprep.subr.mxu0 0.0
    %1400 = vmatpush1.msra.mxu0 %v233
    %1401 = vmatprep.subr.mxu0 0.0
    %1402 = vmatpush1.msra.mxu0 %v234
    %1403 = vmatprep.subr.mxu0 0.0
    %1404 = vmatpush1.msra.mxu0 %v235
    %1405 = vmatprep.subr.mxu0 0.0
    %1406 = vmatpush1.msra.mxu0 %v236
    %1407 = vmatprep.subr.mxu0 0.0
    %1408 = vmatpush1.msra.mxu0 %v237
    %1409 = vmatprep.subr.mxu0 0.0
    %1410 = vmatpush1.msra.mxu0 %v238
    %1411 = vmatprep.subr.mxu0 0.0
    %1412 = vmatpush1.msra.mxu0 %v239
    %1413 = vmatprep.subr.mxu0 0.0
    %1414 = vmatpush1.msra.mxu0 %v240
    %1415 = vmatprep.subr.mxu0 0.0
    %1416 = vmatpush1.msra.mxu0 %v241
    %1417 = vmatprep.subr.mxu0 0.0
    %1418 = vmatpush1.msra.mxu0 %v242
    %1419 = vmatprep.subr.mxu0 0.0
    %1420 = vmatpush1.msra.mxu0 %v243
    %1421 = vmatprep.mubr.f32.mxu0 %v59
    %1422 = vmatmul.mubr.f32.gmra.mrb[0].mxu0 %v58
    %v1423 = vpop.f32.mrb[0].mxu0
    %v1424 = vadd.f32 %v1354, %v1423
    %v1425 = vpop.f32.mrb[0].mxu0
    %1426 = vdwg.mxu0
    %1427 = vmatprep.subr.mxu0 0.0
    %1428 = vmatpush1.msra.mxu0 %v244
    %1429 = vmatprep.subr.mxu0 0.0
    %1430 = vmatpush1.msra.mxu0 %v245
    %1431 = vmatprep.subr.mxu0 0.0
    %1432 = vmatpush1.msra.mxu0 %v246
    %1433 = vmatprep.subr.mxu0 0.0
    %1434 = vmatpush1.msra.mxu0 %v247
    %1435 = vmatprep.subr.mxu0 0.0
    %1436 = vmatpush1.msra.mxu0 %v248
    %1437 = vmatprep.subr.mxu0 0.0
    %1438 = vmatpush1.msra.mxu0 %v249
    %1439 = vmatprep.subr.mxu0 0.0
    %1440 = vmatpush1.msra.mxu0 %v250
    %1441 = vmatprep.subr.mxu0 0.0
    %1442 = vmatpush1.msra.mxu0 %v251
    %1443 = vmatprep.subr.mxu0 0.0
    %1444 = vmatpush1.msra.mxu0 %v252
    %1445 = vmatprep.subr.mxu0 0.0
    %1446 = vmatpush1.msra.mxu0 %v253
    %1447 = vmatprep.subr.mxu0 0.0
    %1448 = vmatpush1.msra.mxu0 %v254
    %1449 = vmatprep.subr.mxu0 0.0
    %1450 = vmatpush1.msra.mxu0 %v255
    %1451 = vmatprep.subr.mxu0 0.0
    %1452 = vmatpush1.msra.mxu0 %v256
    %1453 = vmatprep.subr.mxu0 0.0
    %1454 = vmatpush1.msra.mxu0 %v257
    %1455 = vmatprep.subr.mxu0 0.0
    %1456 = vmatpush1.msra.mxu0 %v258
    %1457 = vmatprep.subr.mxu0 0.0
    %1458 = vmatpush1.msra.mxu0 %v259
    %1459 = vmatprep.subr.mxu0 0.0
    %1460 = vmatpush1.msra.mxu0 %v260
    %1461 = vmatprep.subr.mxu0 0.0
    %1462 = vmatpush1.msra.mxu0 %v261
    %1463 = vmatprep.subr.mxu0 0.0
    %1464 = vmatpush1.msra.mxu0 %v262
    %1465 = vmatprep.subr.mxu0 0.0
    %1466 = vmatpush1.msra.mxu0 %v263
    %1467 = vmatprep.subr.mxu0 0.0
    %1468 = vmatpush1.msra.mxu0 %v264
    %1469 = vmatprep.subr.mxu0 0.0
    %1470 = vmatpush1.msra.mxu0 %v265
    %1471 = vmatprep.subr.mxu0 0.0
    %1472 = vmatpush1.msra.mxu0 %v266
    %1473 = vmatprep.subr.mxu0 0.0
    %1474 = vmatpush1.msra.mxu0 %v267
    %1475 = vmatprep.subr.mxu0 0.0
    %1476 = vmatpush1.msra.mxu0 %v268
    %1477 = vmatprep.subr.mxu0 0.0
    %1478 = vmatpush1.msra.mxu0 %v269
    %1479 = vmatprep.subr.mxu0 0.0
    %1480 = vmatpush1.msra.mxu0 %v270
    %1481 = vmatprep.subr.mxu0 0.0
    %1482 = vmatpush1.msra.mxu0 %v271
    %1483 = vmatprep.subr.mxu0 0.0
    %1484 = vmatpush1.msra.mxu0 %v272
    %1485 = vmatprep.subr.mxu0 0.0
    %1486 = vmatpush1.msra.mxu0 %v273
    %1487 = vmatprep.subr.mxu0 0.0
    %1488 = vmatpush1.msra.mxu0 %v274
    %1489 = vmatprep.subr.mxu0 0.0
    %1490 = vmatpush1.msra.mxu0 %v275
    %1491 = vmatprep.mubr.f32.mxu0 %v61
    %1492 = vmatmul.mubr.f32.gmra.mrb[0].mxu0 %v60
    %v1493 = vpop.f32.mrb[0].mxu0
    %v1494 = vadd.f32 %v1424, %v1493
    %v1495 = vpop.f32.mrb[0].mxu0
    %1496 = vdwg.mxu0
    %1497 = vmatprep.subr.mxu0 0.0
    %1498 = vmatpush1.msra.mxu0 %v276
    %1499 = vmatprep.subr.mxu0 0.0
    %1500 = vmatpush1.msra.mxu0 %v277
    %1501 = vmatprep.subr.mxu0 0.0
    %1502 = vmatpush1.msra.mxu0 %v278
    %1503 = vmatprep.subr.mxu0 0.0
    %1504 = vmatpush1.msra.mxu0 %v279
    %1505 = vmatprep.subr.mxu0 0.0
    %1506 = vmatpush1.msra.mxu0 %v280
    %1507 = vmatprep.subr.mxu0 0.0
    %1508 = vmatpush1.msra.mxu0 %v281
    %1509 = vmatprep.subr.mxu0 0.0
    %1510 = vmatpush1.msra.mxu0 %v282
    %1511 = vmatprep.subr.mxu0 0.0
    %1512 = vmatpush1.msra.mxu0 %v283
    %1513 = vmatprep.subr.mxu0 0.0
    %1514 = vmatpush1.msra.mxu0 %v284
    %1515 = vmatprep.subr.mxu0 0.0
    %1516 = vmatpush1.msra.mxu0 %v285
    %1517 = vmatprep.subr.mxu0 0.0
    %1518 = vmatpush1.msra.mxu0 %v286
    %1519 = vmatprep.subr.mxu0 0.0
    %1520 = vmatpush1.msra.mxu0 %v287
    %1521 = vmatprep.subr.mxu0 0.0
    %1522 = vmatpush1.msra.mxu0 %v288
    %1523 = vmatprep.subr.mxu0 0.0
    %1524 = vmatpush1.msra.mxu0 %v289
    %1525 = vmatprep.subr.mxu0 0.0
    %1526 = vmatpush1.msra.mxu0 %v290
    %1527 = vmatprep.subr.mxu0 0.0
    %1528 = vmatpush1.msra.mxu0 %v291
    %1529 = vmatprep.subr.mxu0 0.0
    %1530 = vmatpush1.msra.mxu0 %v292
    %1531 = vmatprep.subr.mxu0 0.0
    %1532 = vmatpush1.msra.mxu0 %v293
    %1533 = vmatprep.subr.mxu0 0.0
    %1534 = vmatpush1.msra.mxu0 %v294
    %1535 = vmatprep.subr.mxu0 0.0
    %1536 = vmatpush1.msra.mxu0 %v295
    %1537 = vmatprep.subr.mxu0 0.0
    %1538 = vmatpush1.msra.mxu0 %v296
    %1539 = vmatprep.subr.mxu0 0.0
    %1540 = vmatpush1.msra.mxu0 %v297
    %1541 = vmatprep.subr.mxu0 0.0
    %1542 = vmatpush1.msra.mxu0 %v298
    %1543 = vmatprep.subr.mxu0 0.0
    %1544 = vmatpush1.msra.mxu0 %v299
    %1545 = vmatprep.subr.mxu0 0.0
    %1546 = vmatpush1.msra.mxu0 %v300
    %1547 = vmatprep.subr.mxu0 0.0
    %1548 = vmatpush1.msra.mxu0 %v301
    %1549 = vmatprep.subr.mxu0 0.0
    %1550 = vmatpush1.msra.mxu0 %v302
    %1551 = vmatprep.subr.mxu0 0.0
    %1552 = vmatpush1.msra.mxu0 %v303
    %1553 = vmatprep.subr.mxu0 0.0
    %1554 = vmatpush1.msra.mxu0 %v304
    %1555 = vmatprep.subr.mxu0 0.0
    %1556 = vmatpush1.msra.mxu0 %v305
    %1557 = vmatprep.subr.mxu0 0.0
    %1558 = vmatpush1.msra.mxu0 %v306
    %1559 = vmatprep.subr.mxu0 0.0
    %1560 = vmatpush1.msra.mxu0 %v307
    %1561 = vmatprep.mubr.f32.mxu0 %v63
    %1562 = vmatmul.mubr.f32.gmra.mrb[0].mxu0 %v62
    %v1563 = vpop.f32.mrb[0].mxu0
    %v1564 = vadd.f32 %v1494, %v1563
    %v1565 = vpop.f32.mrb[0].mxu0
    %1566 = vdwg.mxu0
    %1567 = vmatprep.subr.mxu0 0.0
    %1568 = vmatpush1.msra.mxu0 %v308
    %1569 = vmatprep.subr.mxu0 0.0
    %1570 = vmatpush1.msra.mxu0 %v309
    %1571 = vmatprep.subr.mxu0 0.0
    %1572 = vmatpush1.msra.mxu0 %v310
    %1573 = vmatprep.subr.mxu0 0.0
    %1574 = vmatpush1.msra.mxu0 %v311
    %1575 = vmatprep.subr.mxu0 0.0
    %1576 = vmatpush1.msra.mxu0 %v312
    %1577 = vmatprep.subr.mxu0 0.0
    %1578 = vmatpush1.msra.mxu0 %v313
    %1579 = vmatprep.subr.mxu0 0.0
    %1580 = vmatpush1.msra.mxu0 %v314
    %1581 = vmatprep.subr.mxu0 0.0
    %1582 = vmatpush1.msra.mxu0 %v315
    %1583 = vmatprep.subr.mxu0 0.0
    %1584 = vmatpush1.msra.mxu0 %v316
    %1585 = vmatprep.subr.mxu0 0.0
    %1586 = vmatpush1.msra.mxu0 %v317
    %1587 = vmatprep.subr.mxu0 0.0
    %1588 = vmatpush1.msra.mxu0 %v318
    %1589 = vmatprep.subr.mxu0 0.0
    %1590 = vmatpush1.msra.mxu0 %v319
    %1591 = vmatprep.subr.mxu0 0.0
    %1592 = vmatpush1.msra.mxu0 %v320
    %1593 = vmatprep.subr.mxu0 0.0
    %1594 = vmatpush1.msra.mxu0 %v321
    %1595 = vmatprep.subr.mxu0 0.0
    %1596 = vmatpush1.msra.mxu0 %v322
    %1597 = vmatprep.subr.mxu0 0.0
    %1598 = vmatpush1.msra.mxu0 %v323
    %1599 = vmatprep.subr.mxu0 0.0
    %1600 = vmatpush1.msra.mxu0 %v324
    %1601 = vmatprep.subr.mxu0 0.0
    %1602 = vmatpush1.msra.mxu0 %v325
    %1603 = vmatprep.subr.mxu0 0.0
    %1604 = vmatpush1.msra.mxu0 %v326
    %1605 = vmatprep.subr.mxu0 0.0
    %1606 = vmatpush1.msra.mxu0 %v327
    %1607 = vmatprep.subr.mxu0 0.0
    %1608 = vmatpush1.msra.mxu0 %v328
    %1609 = vmatprep.subr.mxu0 0.0
    %1610 = vmatpush1.msra.mxu0 %v329
    %1611 = vmatprep.subr.mxu0 0.0
    %1612 = vmatpush1.msra.mxu0 %v330
    %1613 = vmatprep.subr.mxu0 0.0
    %1614 = vmatpush1.msra.mxu0 %v331
    %1615 = vmatprep.subr.mxu0 0.0
    %1616 = vmatpush1.msra.mxu0 %v332
    %1617 = vmatprep.subr.mxu0 0.0
    %1618 = vmatpush1.msra.mxu0 %v333
    %1619 = vmatprep.subr.mxu0 0.0
    %1620 = vmatpush1.msra.mxu0 %v334
    %1621 = vmatprep.subr.mxu0 0.0
    %1622 = vmatpush1.msra.mxu0 %v335
    %1623 = vmatprep.subr.mxu0 0.0
    %1624 = vmatpush1.msra.mxu0 %v336
    %1625 = vmatprep.subr.mxu0 0.0
    %1626 = vmatpush1.msra.mxu0 %v337
    %1627 = vmatprep.subr.mxu0 0.0
    %1628 = vmatpush1.msra.mxu0 %v338
    %1629 = vmatprep.subr.mxu0 0.0
    %1630 = vmatpush1.msra.mxu0 %v339
    %1631 = vmatprep.mubr.f32.mxu0 %v65
    %1632 = vmatmul.mubr.f32.gmra.mrb[0].mxu0 %v64
    %v1633 = vpop.f32.mrb[0].mxu0
    %v1634 = vadd.f32 %v1564, %v1633
    %v1635 = vpop.f32.mrb[0].mxu0
    %1636 = vdwg.mxu0
    %1637 = vmatprep.subr.mxu0 0.0
    %1638 = vmatpush1.msra.mxu0 %v340
    %1639 = vmatprep.subr.mxu0 0.0
    %1640 = vmatpush1.msra.mxu0 %v341
    %1641 = vmatprep.subr.mxu0 0.0
    %1642 = vmatpush1.msra.mxu0 %v342
    %1643 = vmatprep.subr.mxu0 0.0
    %1644 = vmatpush1.msra.mxu0 %v343
    %1645 = vmatprep.subr.mxu0 0.0
    %1646 = vmatpush1.msra.mxu0 %v344
    %1647 = vmatprep.subr.mxu0 0.0
    %1648 = vmatpush1.msra.mxu0 %v345
    %1649 = vmatprep.subr.mxu0 0.0
    %1650 = vmatpush1.msra.mxu0 %v346
    %1651 = vmatprep.subr.mxu0 0.0
    %1652 = vmatpush1.msra.mxu0 %v347
    %1653 = vmatprep.subr.mxu0 0.0
    %1654 = vmatpush1.msra.mxu0 %v348
    %1655 = vmatprep.subr.mxu0 0.0
    %1656 = vmatpush1.msra.mxu0 %v349
    %1657 = vmatprep.subr.mxu0 0.0
    %1658 = vmatpush1.msra.mxu0 %v350
    %1659 = vmatprep.subr.mxu0 0.0
    %1660 = vmatpush1.msra.mxu0 %v351
    %1661 = vmatprep.subr.mxu0 0.0
    %1662 = vmatpush1.msra.mxu0 %v352
    %1663 = vmatprep.subr.mxu0 0.0
    %1664 = vmatpush1.msra.mxu0 %v353
    %1665 = vmatprep.subr.mxu0 0.0
    %1666 = vmatpush1.msra.mxu0 %v354
    %1667 = vmatprep.subr.mxu0 0.0
    %1668 = vmatpush1.msra.mxu0 %v355
    %1669 = vmatprep.subr.mxu0 0.0
    %1670 = vmatpush1.msra.mxu0 %v356
    %1671 = vmatprep.subr.mxu0 0.0
    %1672 = vmatpush1.msra.mxu0 %v357
    %1673 = vmatprep.subr.mxu0 0.0
    %1674 = vmatpush1.msra.mxu0 %v358
    %1675 = vmatprep.subr.mxu0 0.0
    %1676 = vmatpush1.msra.mxu0 %v359
    %1677 = vmatprep.subr.mxu0 0.0
    %1678 = vmatpush1.msra.mxu0 %v360
    %1679 = vmatprep.subr.mxu0 0.0
    %1680 = vmatpush1.msra.mxu0 %v361
    %1681 = vmatprep.subr.mxu0 0.0
    %1682 = vmatpush1.msra.mxu0 %v362
    %1683 = vmatprep.subr.mxu0 0.0
    %1684 = vmatpush1.msra.mxu0 %v363
    %1685 = vmatprep.subr.mxu0 0.0
    %1686 = vmatpush1.msra.mxu0 %v364
    %1687 = vmatprep.subr.mxu0 0.0
    %1688 = vmatpush1.msra.mxu0 %v365
    %1689 = vmatprep.subr.mxu0 0.0
    %1690 = vmatpush1.msra.mxu0 %v366
    %1691 = vmatprep.subr.mxu0 0.0
    %1692 = vmatpush1.msra.mxu0 %v367
    %1693 = vmatprep.subr.mxu0 0.0
    %1694 = vmatpush1.msra.mxu0 %v368
    %1695 = vmatprep.subr.mxu0 0.0
    %1696 = vmatpush1.msra.mxu0 %v369
    %1697 = vmatprep.subr.mxu0 0.0
    %1698 = vmatpush1.msra.mxu0 %v370
    %1699 = vmatprep.subr.mxu0 0.0
    %1700 = vmatpush1.msra.mxu0 %v371
    %1701 = vmatprep.mubr.f32.mxu0 %v67
    %1702 = vmatmul.mubr.f32.gmra.mrb[0].mxu0 %v66
    %v1703 = vpop.f32.mrb[0].mxu0
    %v1704 = vadd.f32 %v1634, %v1703
    %v1705 = vpop.f32.mrb[0].mxu0
    %1706 = vdwg.mxu0
    %1707 = vmatprep.subr.mxu0 0.0
    %1708 = vmatpush1.msra.mxu0 %v372
    %1709 = vmatprep.subr.mxu0 0.0
    %1710 = vmatpush1.msra.mxu0 %v373
    %1711 = vmatprep.subr.mxu0 0.0
    %1712 = vmatpush1.msra.mxu0 %v374
    %1713 = vmatprep.subr.mxu0 0.0
    %1714 = vmatpush1.msra.mxu0 %v375
    %1715 = vmatprep.subr.mxu0 0.0
    %1716 = vmatpush1.msra.mxu0 %v376
    %1717 = vmatprep.subr.mxu0 0.0
    %1718 = vmatpush1.msra.mxu0 %v377
    %1719 = vmatprep.subr.mxu0 0.0
    %1720 = vmatpush1.msra.mxu0 %v378
    %1721 = vmatprep.subr.mxu0 0.0
    %1722 = vmatpush1.msra.mxu0 %v379
    %1723 = vmatprep.subr.mxu0 0.0
    %1724 = vmatpush1.msra.mxu0 %v380
    %1725 = vmatprep.subr.mxu0 0.0
    %1726 = vmatpush1.msra.mxu0 %v381
    %1727 = vmatprep.subr.mxu0 0.0
    %1728 = vmatpush1.msra.mxu0 %v382
    %1729 = vmatprep.subr.mxu0 0.0
    %1730 = vmatpush1.msra.mxu0 %v383
    %1731 = vmatprep.subr.mxu0 0.0
    %1732 = vmatpush1.msra.mxu0 %v384
    %1733 = vmatprep.subr.mxu0 0.0
    %1734 = vmatpush1.msra.mxu0 %v385
    %1735 = vmatprep.subr.mxu0 0.0
    %1736 = vmatpush1.msra.mxu0 %v386
    %1737 = vmatprep.subr.mxu0 0.0
    %1738 = vmatpush1.msra.mxu0 %v387
    %1739 = vmatprep.subr.mxu0 0.0
    %1740 = vmatpush1.msra.mxu0 %v388
    %1741 = vmatprep.subr.mxu0 0.0
    %1742 = vmatpush1.msra.mxu0 %v389
    %1743 = vmatprep.subr.mxu0 0.0
    %1744 = vmatpush1.msra.mxu0 %v390
    %1745 = vmatprep.subr.mxu0 0.0
    %1746 = vmatpush1.msra.mxu0 %v391
    %1747 = vmatprep.subr.mxu0 0.0
    %1748 = vmatpush1.msra.mxu0 %v392
    %1749 = vmatprep.subr.mxu0 0.0
    %1750 = vmatpush1.msra.mxu0 %v393
    %1751 = vmatprep.subr.mxu0 0.0
    %1752 = vmatpush1.msra.mxu0 %v394
    %1753 = vmatprep.subr.mxu0 0.0
    %1754 = vmatpush1.msra.mxu0 %v395
    %1755 = vmatprep.subr.mxu0 0.0
    %1756 = vmatpush1.msra.mxu0 %v396
    %1757 = vmatprep.subr.mxu0 0.0
    %1758 = vmatpush1.msra.mxu0 %v397
    %1759 = vmatprep.subr.mxu0 0.0
    %1760 = vmatpush1.msra.mxu0 %v398
    %1761 = vmatprep.subr.mxu0 0.0
    %1762 = vmatpush1.msra.mxu0 %v399
    %1763 = vmatprep.subr.mxu0 0.0
    %1764 = vmatpush1.msra.mxu0 %v400
    %1765 = vmatprep.subr.mxu0 0.0
    %1766 = vmatpush1.msra.mxu0 %v401
    %1767 = vmatprep.subr.mxu0 0.0
    %1768 = vmatpush1.msra.mxu0 %v402
    %1769 = vmatprep.subr.mxu0 0.0
    %1770 = vmatpush1.msra.mxu0 %v403
    %1771 = vmatprep.mubr.f32.mxu0 %v69
    %1772 = vmatmul.mubr.f32.gmra.mrb[0].mxu0 %v68
    %v1773 = vpop.f32.mrb[0].mxu0
    %v1774 = vadd.f32 %v1704, %v1773
    %v1775 = vpop.f32.mrb[0].mxu0
    %1776 = vdwg.mxu0
    %1777 = vmatprep.subr.mxu0 0.0
    %1778 = vmatpush1.msra.mxu0 %v404
    %1779 = vmatprep.subr.mxu0 0.0
    %1780 = vmatpush1.msra.mxu0 %v405
    %1781 = vmatprep.subr.mxu0 0.0
    %1782 = vmatpush1.msra.mxu0 %v406
    %1783 = vmatprep.subr.mxu0 0.0
    %1784 = vmatpush1.msra.mxu0 %v407
    %1785 = vmatprep.subr.mxu0 0.0
    %1786 = vmatpush1.msra.mxu0 %v408
    %1787 = vmatprep.subr.mxu0 0.0
    %1788 = vmatpush1.msra.mxu0 %v409
    %1789 = vmatprep.subr.mxu0 0.0
    %1790 = vmatpush1.msra.mxu0 %v410
    %1791 = vmatprep.subr.mxu0 0.0
    %1792 = vmatpush1.msra.mxu0 %v411
    %1793 = vmatprep.subr.mxu0 0.0
    %1794 = vmatpush1.msra.mxu0 %v412
    %1795 = vmatprep.subr.mxu0 0.0
    %1796 = vmatpush1.msra.mxu0 %v413
    %1797 = vmatprep.subr.mxu0 0.0
    %1798 = vmatpush1.msra.mxu0 %v414
    %1799 = vmatprep.subr.mxu0 0.0
    %1800 = vmatpush1.msra.mxu0 %v415
    %1801 = vmatprep.subr.mxu0 0.0
    %1802 = vmatpush1.msra.mxu0 %v416
    %1803 = vmatprep.subr.mxu0 0.0
    %1804 = vmatpush1.msra.mxu0 %v417
    %1805 = vmatprep.subr.mxu0 0.0
    %1806 = vmatpush1.msra.mxu0 %v418
    %1807 = vmatprep.subr.mxu0 0.0
    %1808 = vmatpush1.msra.mxu0 %v419
    %1809 = vmatprep.subr.mxu0 0.0
    %1810 = vmatpush1.msra.mxu0 %v420
    %1811 = vmatprep.subr.mxu0 0.0
    %1812 = vmatpush1.msra.mxu0 %v421
    %1813 = vmatprep.subr.mxu0 0.0
    %1814 = vmatpush1.msra.mxu0 %v422
    %1815 = vmatprep.subr.mxu0 0.0
    %1816 = vmatpush1.msra.mxu0 %v423
    %1817 = vmatprep.subr.mxu0 0.0
    %1818 = vmatpush1.msra.mxu0 %v424
    %1819 = vmatprep.subr.mxu0 0.0
    %1820 = vmatpush1.msra.mxu0 %v425
    %1821 = vmatprep.subr.mxu0 0.0
    %1822 = vmatpush1.msra.mxu0 %v426
    %1823 = vmatprep.subr.mxu0 0.0
    %1824 = vmatpush1.msra.mxu0 %v427
    %1825 = vmatprep.subr.mxu0 0.0
    %1826 = vmatpush1.msra.mxu0 %v428
    %1827 = vmatprep.subr.mxu0 0.0
    %1828 = vmatpush1.msra.mxu0 %v429
    %1829 = vmatprep.subr.mxu0 0.0
    %1830 = vmatpush1.msra.mxu0 %v430
    %1831 = vmatprep.subr.mxu0 0.0
    %1832 = vmatpush1.msra.mxu0 %v431
    %1833 = vmatprep.subr.mxu0 0.0
    %1834 = vmatpush1.msra.mxu0 %v432
    %1835 = vmatprep.subr.mxu0 0.0
    %1836 = vmatpush1.msra.mxu0 %v433
    %1837 = vmatprep.subr.mxu0 0.0
    %1838 = vmatpush1.msra.mxu0 %v434
    %1839 = vmatprep.subr.mxu0 0.0
    %1840 = vmatpush1.msra.mxu0 %v435
    %1841 = vmatprep.mubr.f32.mxu0 %v71
    %1842 = vmatmul.mubr.f32.gmra.mrb[0].mxu0 %v70
    %v1843 = vpop.f32.mrb[0].mxu0
    %v1844 = vadd.f32 %v1774, %v1843
    %v1845 = vpop.f32.mrb[0].mxu0
    %1846 = vdwg.mxu0
    %1847 = vmatprep.subr.mxu0 0.0
    %1848 = vmatpush1.msra.mxu0 %v436
    %1849 = vmatprep.subr.mxu0 0.0
    %1850 = vmatpush1.msra.mxu0 %v437
    %1851 = vmatprep.subr.mxu0 0.0
    %1852 = vmatpush1.msra.mxu0 %v438
    %1853 = vmatprep.subr.mxu0 0.0
    %1854 = vmatpush1.msra.mxu0 %v439
    %1855 = vmatprep.subr.mxu0 0.0
    %1856 = vmatpush1.msra.mxu0 %v440
    %1857 = vmatprep.subr.mxu0 0.0
    %1858 = vmatpush1.msra.mxu0 %v441
    %1859 = vmatprep.subr.mxu0 0.0
    %1860 = vmatpush1.msra.mxu0 %v442
    %1861 = vmatprep.subr.mxu0 0.0
    %1862 = vmatpush1.msra.mxu0 %v443
    %1863 = vmatprep.subr.mxu0 0.0
    %1864 = vmatpush1.msra.mxu0 %v444
    %1865 = vmatprep.subr.mxu0 0.0
    %1866 = vmatpush1.msra.mxu0 %v445
    %1867 = vmatprep.subr.mxu0 0.0
    %1868 = vmatpush1.msra.mxu0 %v446
    %1869 = vmatprep.subr.mxu0 0.0
    %1870 = vmatpush1.msra.mxu0 %v447
    %1871 = vmatprep.subr.mxu0 0.0
    %1872 = vmatpush1.msra.mxu0 %v448
    %1873 = vmatprep.subr.mxu0 0.0
    %1874 = vmatpush1.msra.mxu0 %v449
    %1875 = vmatprep.subr.mxu0 0.0
    %1876 = vmatpush1.msra.mxu0 %v450
    %1877 = vmatprep.subr.mxu0 0.0
    %1878 = vmatpush1.msra.mxu0 %v451
    %1879 = vmatprep.subr.mxu0 0.0
    %1880 = vmatpush1.msra.mxu0 %v452
    %1881 = vmatprep.subr.mxu0 0.0
    %1882 = vmatpush1.msra.mxu0 %v453
    %1883 = vmatprep.subr.mxu0 0.0
    %1884 = vmatpush1.msra.mxu0 %v454
    %1885 = vmatprep.subr.mxu0 0.0
    %1886 = vmatpush1.msra.mxu0 %v455
    %1887 = vmatprep.subr.mxu0 0.0
    %1888 = vmatpush1.msra.mxu0 %v456
    %1889 = vmatprep.subr.mxu0 0.0
    %1890 = vmatpush1.msra.mxu0 %v457
    %1891 = vmatprep.subr.mxu0 0.0
    %1892 = vmatpush1.msra.mxu0 %v458
    %1893 = vmatprep.subr.mxu0 0.0
    %1894 = vmatpush1.msra.mxu0 %v459
    %1895 = vmatprep.subr.mxu0 0.0
    %1896 = vmatpush1.msra.mxu0 %v460
    %1897 = vmatprep.subr.mxu0 0.0
    %1898 = vmatpush1.msra.mxu0 %v461
    %1899 = vmatprep.subr.mxu0 0.0
    %1900 = vmatpush1.msra.mxu0 %v462
    %1901 = vmatprep.subr.mxu0 0.0
    %1902 = vmatpush1.msra.mxu0 %v463
    %1903 = vmatprep.subr.mxu0 0.0
    %1904 = vmatpush1.msra.mxu0 %v464
    %1905 = vmatprep.subr.mxu0 0.0
    %1906 = vmatpush1.msra.mxu0 %v465
    %1907 = vmatprep.subr.mxu0 0.0
    %1908 = vmatpush1.msra.mxu0 %v466
    %1909 = vmatprep.subr.mxu0 0.0
    %1910 = vmatpush1.msra.mxu0 %v467
    %1911 = vmatprep.mubr.f32.mxu0 %v73
    %1912 = vmatmul.mubr.f32.gmra.mrb[0].mxu0 %v72
    %v1913 = vpop.f32.mrb[0].mxu0
    %v1914 = vadd.f32 %v1844, %v1913
    %v1915 = vpop.f32.mrb[0].mxu0
    %1916 = vdwg.mxu0
    %1917 = vmatprep.subr.mxu0 0.0
    %1918 = vmatpush1.msra.mxu0 %v468
    %1919 = vmatprep.subr.mxu0 0.0
    %1920 = vmatpush1.msra.mxu0 %v469
    %1921 = vmatprep.subr.mxu0 0.0
    %1922 = vmatpush1.msra.mxu0 %v470
    %1923 = vmatprep.subr.mxu0 0.0
    %1924 = vmatpush1.msra.mxu0 %v471
    %1925 = vmatprep.subr.mxu0 0.0
    %1926 = vmatpush1.msra.mxu0 %v472
    %1927 = vmatprep.subr.mxu0 0.0
    %1928 = vmatpush1.msra.mxu0 %v473
    %1929 = vmatprep.subr.mxu0 0.0
    %1930 = vmatpush1.msra.mxu0 %v474
    %1931 = vmatprep.subr.mxu0 0.0
    %1932 = vmatpush1.msra.mxu0 %v475
    %1933 = vmatprep.subr.mxu0 0.0
    %1934 = vmatpush1.msra.mxu0 %v476
    %1935 = vmatprep.subr.mxu0 0.0
    %1936 = vmatpush1.msra.mxu0 %v477
    %1937 = vmatprep.subr.mxu0 0.0
    %1938 = vmatpush1.msra.mxu0 %v478
    %1939 = vmatprep.subr.mxu0 0.0
    %1940 = vmatpush1.msra.mxu0 %v479
    %1941 = vmatprep.subr.mxu0 0.0
    %1942 = vmatpush1.msra.mxu0 %v480
    %1943 = vmatprep.subr.mxu0 0.0
    %1944 = vmatpush1.msra.mxu0 %v481
    %1945 = vmatprep.subr.mxu0 0.0
    %1946 = vmatpush1.msra.mxu0 %v482
    %1947 = vmatprep.subr.mxu0 0.0
    %1948 = vmatpush1.msra.mxu0 %v483
    %1949 = vmatprep.subr.mxu0 0.0
    %1950 = vmatpush1.msra.mxu0 %v484
    %1951 = vmatprep.subr.mxu0 0.0
    %1952 = vmatpush1.msra.mxu0 %v485
    %1953 = vmatprep.subr.mxu0 0.0
    %1954 = vmatpush1.msra.mxu0 %v486
    %1955 = vmatprep.subr.mxu0 0.0
    %1956 = vmatpush1.msra.mxu0 %v487
    %1957 = vmatprep.subr.mxu0 0.0
    %1958 = vmatpush1.msra.mxu0 %v488
    %1959 = vmatprep.subr.mxu0 0.0
    %1960 = vmatpush1.msra.mxu0 %v489
    %1961 = vmatprep.subr.mxu0 0.0
    %1962 = vmatpush1.msra.mxu0 %v490
    %1963 = vmatprep.subr.mxu0 0.0
    %1964 = vmatpush1.msra.mxu0 %v491
    %1965 = vmatprep.subr.mxu0 0.0
    %1966 = vmatpush1.msra.mxu0 %v492
    %1967 = vmatprep.subr.mxu0 0.0
    %1968 = vmatpush1.msra.mxu0 %v493
    %1969 = vmatprep.subr.mxu0 0.0
    %1970 = vmatpush1.msra.mxu0 %v494
    %1971 = vmatprep.subr.mxu0 0.0
    %1972 = vmatpush1.msra.mxu0 %v495
    %1973 = vmatprep.subr.mxu0 0.0
    %1974 = vmatpush1.msra.mxu0 %v496
    %1975 = vmatprep.subr.mxu0 0.0
    %1976 = vmatpush1.msra.mxu0 %v497
    %1977 = vmatprep.subr.mxu0 0.0
    %1978 = vmatpush1.msra.mxu0 %v498
    %1979 = vmatprep.subr.mxu0 0.0
    %1980 = vmatpush1.msra.mxu0 %v499
    %1981 = vmatprep.mubr.f32.mxu0 %v75
    %1982 = vmatmul.mubr.f32.gmra.mrb[0].mxu0 %v74
    %v1983 = vpop.f32.mrb[0].mxu0
    %v1984 = vadd.f32 %v1914, %v1983
    %v1985 = vpop.f32.mrb[0].mxu0
    %1986 = vdwg.mxu0
    %1987 = vmatprep.subr.mxu0 0.0
    %1988 = vmatpush1.msra.mxu0 %v500
    %1989 = vmatprep.subr.mxu0 0.0
    %1990 = vmatpush1.msra.mxu0 %v501
    %1991 = vmatprep.subr.mxu0 0.0
    %1992 = vmatpush1.msra.mxu0 %v502
    %1993 = vmatprep.subr.mxu0 0.0
    %1994 = vmatpush1.msra.mxu0 %v503
    %1995 = vmatprep.subr.mxu0 0.0
    %1996 = vmatpush1.msra.mxu0 %v504
    %1997 = vmatprep.subr.mxu0 0.0
    %1998 = vmatpush1.msra.mxu0 %v505
    %1999 = vmatprep.subr.mxu0 0.0
    %2000 = vmatpush1.msra.mxu0 %v506
    %2001 = vmatprep.subr.mxu0 0.0
    %2002 = vmatpush1.msra.mxu0 %v507
    %2003 = vmatprep.subr.mxu0 0.0
    %2004 = vmatpush1.msra.mxu0 %v508
    %2005 = vmatprep.subr.mxu0 0.0
    %2006 = vmatpush1.msra.mxu0 %v509
    %2007 = vmatprep.subr.mxu0 0.0
    %2008 = vmatpush1.msra.mxu0 %v510
    %2009 = vmatprep.subr.mxu0 0.0
    %2010 = vmatpush1.msra.mxu0 %v511
    %2011 = vmatprep.subr.mxu0 0.0
    %2012 = vmatpush1.msra.mxu0 %v512
    %2013 = vmatprep.subr.mxu0 0.0
    %2014 = vmatpush1.msra.mxu0 %v513
    %2015 = vmatprep.subr.mxu0 0.0
    %2016 = vmatpush1.msra.mxu0 %v514
    %2017 = vmatprep.subr.mxu0 0.0
    %2018 = vmatpush1.msra.mxu0 %v515
    %2019 = vmatprep.subr.mxu0 0.0
    %2020 = vmatpush1.msra.mxu0 %v516
    %2021 = vmatprep.subr.mxu0 0.0
    %2022 = vmatpush1.msra.mxu0 %v517
    %2023 = vmatprep.subr.mxu0 0.0
    %2024 = vmatpush1.msra.mxu0 %v518
    %2025 = vmatprep.subr.mxu0 0.0
    %2026 = vmatpush1.msra.mxu0 %v519
    %2027 = vmatprep.subr.mxu0 0.0
    %2028 = vmatpush1.msra.mxu0 %v520
    %2029 = vmatprep.subr.mxu0 0.0
    %2030 = vmatpush1.msra.mxu0 %v521
    %2031 = vmatprep.subr.mxu0 0.0
    %2032 = vmatpush1.msra.mxu0 %v522
    %2033 = vmatprep.subr.mxu0 0.0
    %2034 = vmatpush1.msra.mxu0 %v523
    %2035 = vmatprep.subr.mxu0 0.0
    %2036 = vmatpush1.msra.mxu0 %v524
    %2037 = vmatprep.subr.mxu0 0.0
    %2038 = vmatpush1.msra.mxu0 %v525
    %2039 = vmatprep.subr.mxu0 0.0
    %2040 = vmatpush1.msra.mxu0 %v526
    %2041 = vmatprep.subr.mxu0 0.0
    %2042 = vmatpush1.msra.mxu0 %v527
    %2043 = vmatprep.subr.mxu0 0.0
    %2044 = vmatpush1.msra.mxu0 %v528
    %2045 = vmatprep.subr.mxu0 0.0
    %2046 = vmatpush1.msra.mxu0 %v529
    %2047 = vmatprep.subr.mxu0 0.0
    %2048 = vmatpush1.msra.mxu0 %v530
    %2049 = vmatprep.subr.mxu0 0.0
    %2050 = vmatpush1.msra.mxu0 %v531
    %2051 = vmatprep.mubr.f32.mxu0 %v77
    %2052 = vmatmul.mubr.f32.gmra.mrb[0].mxu0 %v76
    %v2053 = vpop.f32.mrb[0].mxu0
    %v2054 = vadd.f32 %v1984, %v2053
    %v2055 = vpop.f32.mrb[0].mxu0
    %2056 = vdwg.mxu0
    %2057 = vmatprep.subr.mxu0 0.0
    %2058 = vmatpush1.msra.mxu0 %v532
    %2059 = vmatprep.subr.mxu0 0.0
    %2060 = vmatpush1.msra.mxu0 %v533
    %2061 = vmatprep.subr.mxu0 0.0
    %2062 = vmatpush1.msra.mxu0 %v534
    %2063 = vmatprep.subr.mxu0 0.0
    %2064 = vmatpush1.msra.mxu0 %v535
    %2065 = vmatprep.subr.mxu0 0.0
    %2066 = vmatpush1.msra.mxu0 %v536
    %2067 = vmatprep.subr.mxu0 0.0
    %2068 = vmatpush1.msra.mxu0 %v537
    %2069 = vmatprep.subr.mxu0 0.0
    %2070 = vmatpush1.msra.mxu0 %v538
    %2071 = vmatprep.subr.mxu0 0.0
    %2072 = vmatpush1.msra.mxu0 %v539
    %2073 = vmatprep.subr.mxu0 0.0
    %2074 = vmatpush1.msra.mxu0 %v540
    %2075 = vmatprep.subr.mxu0 0.0
    %2076 = vmatpush1.msra.mxu0 %v541
    %2077 = vmatprep.subr.mxu0 0.0
    %2078 = vmatpush1.msra.mxu0 %v542
    %2079 = vmatprep.subr.mxu0 0.0
    %2080 = vmatpush1.msra.mxu0 %v543
    %2081 = vmatprep.subr.mxu0 0.0
    %2082 = vmatpush1.msra.mxu0 %v544
    %2083 = vmatprep.subr.mxu0 0.0
    %2084 = vmatpush1.msra.mxu0 %v545
    %2085 = vmatprep.subr.mxu0 0.0
    %2086 = vmatpush1.msra.mxu0 %v546
    %2087 = vmatprep.subr.mxu0 0.0
    %2088 = vmatpush1.msra.mxu0 %v547
    %2089 = vmatprep.subr.mxu0 0.0
    %2090 = vmatpush1.msra.mxu0 %v548
    %2091 = vmatprep.subr.mxu0 0.0
    %2092 = vmatpush1.msra.mxu0 %v549
    %2093 = vmatprep.subr.mxu0 0.0
    %2094 = vmatpush1.msra.mxu0 %v550
    %2095 = vmatprep.subr.mxu0 0.0
    %2096 = vmatpush1.msra.mxu0 %v551
    %2097 = vmatprep.subr.mxu0 0.0
    %2098 = vmatpush1.msra.mxu0 %v552
    %2099 = vmatprep.subr.mxu0 0.0
    %2100 = vmatpush1.msra.mxu0 %v553
    %2101 = vmatprep.subr.mxu0 0.0
    %2102 = vmatpush1.msra.mxu0 %v554
    %2103 = vmatprep.subr.mxu0 0.0
    %2104 = vmatpush1.msra.mxu0 %v555
    %2105 = vmatprep.subr.mxu0 0.0
    %2106 = vmatpush1.msra.mxu0 %v556
    %2107 = vmatprep.subr.mxu0 0.0
    %2108 = vmatpush1.msra.mxu0 %v557
    %2109 = vmatprep.subr.mxu0 0.0
    %2110 = vmatpush1.msra.mxu0 %v558
    %2111 = vmatprep.subr.mxu0 0.0
    %2112 = vmatpush1.msra.mxu0 %v559
    %2113 = vmatprep.subr.mxu0 0.0
    %2114 = vmatpush1.msra.mxu0 %v560
    %2115 = vmatprep.subr.mxu0 0.0
    %2116 = vmatpush1.msra.mxu0 %v561
    %2117 = vmatprep.subr.mxu0 0.0
    %2118 = vmatpush1.msra.mxu0 %v562
    %2119 = vmatprep.subr.mxu0 0.0
    %2120 = vmatpush1.msra.mxu0 %v563
    %2121 = vmatprep.mubr.f32.mxu0 %v79
    %2122 = vmatmul.mubr.f32.gmra.mrb[0].mxu0 %v78
    %v2123 = vpop.f32.mrb[0].mxu0
    %v2124 = vadd.f32 %v2054, %v2123
    %v2125 = vpop.f32.mrb[0].mxu0
    %2126 = vdwg.mxu0
    %2127 = vmatprep.subr.mxu0 0.0
    %2128 = vmatpush1.msra.mxu0 %v564
    %2129 = vmatprep.subr.mxu0 0.0
    %2130 = vmatpush1.msra.mxu0 %v565
    %2131 = vmatprep.subr.mxu0 0.0
    %2132 = vmatpush1.msra.mxu0 %v566
    %2133 = vmatprep.subr.mxu0 0.0
    %2134 = vmatpush1.msra.mxu0 %v567
    %2135 = vmatprep.subr.mxu0 0.0
    %2136 = vmatpush1.msra.mxu0 %v568
    %2137 = vmatprep.subr.mxu0 0.0
    %2138 = vmatpush1.msra.mxu0 %v569
    %2139 = vmatprep.subr.mxu0 0.0
    %2140 = vmatpush1.msra.mxu0 %v570
    %2141 = vmatprep.subr.mxu0 0.0
    %2142 = vmatpush1.msra.mxu0 %v571
    %2143 = vmatprep.subr.mxu0 0.0
    %2144 = vmatpush1.msra.mxu0 %v572
    %2145 = vmatprep.subr.mxu0 0.0
    %2146 = vmatpush1.msra.mxu0 %v573
    %2147 = vmatprep.subr.mxu0 0.0
    %2148 = vmatpush1.msra.mxu0 %v574
    %2149 = vmatprep.subr.mxu0 0.0
    %2150 = vmatpush1.msra.mxu0 %v575
    %2151 = vmatprep.subr.mxu0 0.0
    %2152 = vmatpush1.msra.mxu0 %v576
    %2153 = vmatprep.subr.mxu0 0.0
    %2154 = vmatpush1.msra.mxu0 %v577
    %2155 = vmatprep.subr.mxu0 0.0
    %2156 = vmatpush1.msra.mxu0 %v578
    %2157 = vmatprep.subr.mxu0 0.0
    %2158 = vmatpush1.msra.mxu0 %v579
    %2159 = vmatprep.subr.mxu0 0.0
    %2160 = vmatpush1.msra.mxu0 %v580
    %2161 = vmatprep.subr.mxu0 0.0
    %2162 = vmatpush1.msra.mxu0 %v581
    %2163 = vmatprep.subr.mxu0 0.0
    %2164 = vmatpush1.msra.mxu0 %v582
    %2165 = vmatprep.subr.mxu0 0.0
    %2166 = vmatpush1.msra.mxu0 %v583
    %2167 = vmatprep.subr.mxu0 0.0
    %2168 = vmatpush1.msra.mxu0 %v584
    %2169 = vmatprep.subr.mxu0 0.0
    %2170 = vmatpush1.msra.mxu0 %v585
    %2171 = vmatprep.subr.mxu0 0.0
    %2172 = vmatpush1.msra.mxu0 %v586
    %2173 = vmatprep.subr.mxu0 0.0
    %2174 = vmatpush1.msra.mxu0 %v587
    %2175 = vmatprep.subr.mxu0 0.0
    %2176 = vmatpush1.msra.mxu0 %v588
    %2177 = vmatprep.subr.mxu0 0.0
    %2178 = vmatpush1.msra.mxu0 %v589
    %2179 = vmatprep.subr.mxu0 0.0
    %2180 = vmatpush1.msra.mxu0 %v590
    %2181 = vmatprep.subr.mxu0 0.0
    %2182 = vmatpush1.msra.mxu0 %v591
    %2183 = vmatprep.subr.mxu0 0.0
    %2184 = vmatpush1.msra.mxu0 %v592
    %2185 = vmatprep.subr.mxu0 0.0
    %2186 = vmatpush1.msra.mxu0 %v593
    %2187 = vmatprep.subr.mxu0 0.0
    %2188 = vmatpush1.msra.mxu0 %v594
    %2189 = vmatprep.subr.mxu0 0.0
    %2190 = vmatpush1.msra.mxu0 %v595
    %2191 = vmatprep.mubr.f32.mxu0 %v81
    %2192 = vmatmul.mubr.f32.gmra.mrb[0].mxu0 %v80
    %v2193 = vpop.f32.mrb[0].mxu0
    %v2194 = vadd.f32 %v2124, %v2193
    %v2195 = vpop.f32.mrb[0].mxu0
    %2196 = vdwg.mxu0
    %2197 = vmatprep.subr.mxu0 0.0
    %2198 = vmatpush1.msra.mxu0 %v596
    %2199 = vmatprep.subr.mxu0 0.0
    %2200 = vmatpush1.msra.mxu0 %v597
    %2201 = vmatprep.subr.mxu0 0.0
    %2202 = vmatpush1.msra.mxu0 %v598
    %2203 = vmatprep.subr.mxu0 0.0
    %2204 = vmatpush1.msra.mxu0 %v599
    %2205 = vmatprep.subr.mxu0 0.0
    %2206 = vmatpush1.msra.mxu0 %v600
    %2207 = vmatprep.subr.mxu0 0.0
    %2208 = vmatpush1.msra.mxu0 %v601
    %2209 = vmatprep.subr.mxu0 0.0
    %2210 = vmatpush1.msra.mxu0 %v602
    %2211 = vmatprep.subr.mxu0 0.0
    %2212 = vmatpush1.msra.mxu0 %v603
    %2213 = vmatprep.subr.mxu0 0.0
    %2214 = vmatpush1.msra.mxu0 %v604
    %2215 = vmatprep.subr.mxu0 0.0
    %2216 = vmatpush1.msra.mxu0 %v605
    %2217 = vmatprep.subr.mxu0 0.0
    %2218 = vmatpush1.msra.mxu0 %v606
    %2219 = vmatprep.subr.mxu0 0.0
    %2220 = vmatpush1.msra.mxu0 %v607
    %2221 = vmatprep.subr.mxu0 0.0
    %2222 = vmatpush1.msra.mxu0 %v608
    %2223 = vmatprep.subr.mxu0 0.0
    %2224 = vmatpush1.msra.mxu0 %v609
    %2225 = vmatprep.subr.mxu0 0.0
    %2226 = vmatpush1.msra.mxu0 %v610
    %2227 = vmatprep.subr.mxu0 0.0
    %2228 = vmatpush1.msra.mxu0 %v611
    %2229 = vmatprep.subr.mxu0 0.0
    %2230 = vmatpush1.msra.mxu0 %v612
    %2231 = vmatprep.subr.mxu0 0.0
    %2232 = vmatpush1.msra.mxu0 %v613
    %2233 = vmatprep.subr.mxu0 0.0
    %2234 = vmatpush1.msra.mxu0 %v614
    %2235 = vmatprep.subr.mxu0 0.0
    %2236 = vmatpush1.msra.mxu0 %v615
    %2237 = vmatprep.subr.mxu0 0.0
    %2238 = vmatpush1.msra.mxu0 %v616
    %2239 = vmatprep.subr.mxu0 0.0
    %2240 = vmatpush1.msra.mxu0 %v617
    %2241 = vmatprep.subr.mxu0 0.0
    %2242 = vmatpush1.msra.mxu0 %v618
    %2243 = vmatprep.subr.mxu0 0.0
    %2244 = vmatpush1.msra.mxu0 %v619
    %2245 = vmatprep.subr.mxu0 0.0
    %2246 = vmatpush1.msra.mxu0 %v620
    %2247 = vmatprep.subr.mxu0 0.0
    %2248 = vmatpush1.msra.mxu0 %v621
    %2249 = vmatprep.subr.mxu0 0.0
    %2250 = vmatpush1.msra.mxu0 %v622
    %2251 = vmatprep.subr.mxu0 0.0
    %2252 = vmatpush1.msra.mxu0 %v623
    %2253 = vmatprep.subr.mxu0 0.0
    %2254 = vmatpush1.msra.mxu0 %v624
    %2255 = vmatprep.subr.mxu0 0.0
    %2256 = vmatpush1.msra.mxu0 %v625
    %2257 = vmatprep.subr.mxu0 0.0
    %2258 = vmatpush1.msra.mxu0 %v626
    %2259 = vmatprep.subr.mxu0 0.0
    %2260 = vmatpush1.msra.mxu0 %v627
    %2261 = vmatprep.mubr.f32.mxu0 %v83
    %2262 = vmatmul.mubr.f32.gmra.mrb[0].mxu0 %v82
    %v2263 = vpop.f32.mrb[0].mxu0
    %v2264 = vadd.f32 %v2194, %v2263
    %v2265 = vpop.f32.mrb[0].mxu0
    %2266 = vdwg.mxu0
    %2267 = vmatprep.subr.mxu0 0.0
    %2268 = vmatpush1.msra.mxu0 %v628
    %2269 = vmatprep.subr.mxu0 0.0
    %2270 = vmatpush1.msra.mxu0 %v629
    %2271 = vmatprep.subr.mxu0 0.0
    %2272 = vmatpush1.msra.mxu0 %v630
    %2273 = vmatprep.subr.mxu0 0.0
    %2274 = vmatpush1.msra.mxu0 %v631
    %2275 = vmatprep.subr.mxu0 0.0
    %2276 = vmatpush1.msra.mxu0 %v632
    %2277 = vmatprep.subr.mxu0 0.0
    %2278 = vmatpush1.msra.mxu0 %v633
    %2279 = vmatprep.subr.mxu0 0.0
    %2280 = vmatpush1.msra.mxu0 %v634
    %2281 = vmatprep.subr.mxu0 0.0
    %2282 = vmatpush1.msra.mxu0 %v635
    %2283 = vmatprep.subr.mxu0 0.0
    %2284 = vmatpush1.msra.mxu0 %v636
    %2285 = vmatprep.subr.mxu0 0.0
    %2286 = vmatpush1.msra.mxu0 %v637
    %2287 = vmatprep.subr.mxu0 0.0
    %2288 = vmatpush1.msra.mxu0 %v638
    %2289 = vmatprep.subr.mxu0 0.0
    %2290 = vmatpush1.msra.mxu0 %v639
    %2291 = vmatprep.subr.mxu0 0.0
    %2292 = vmatpush1.msra.mxu0 %v640
    %2293 = vmatprep.subr.mxu0 0.0
    %2294 = vmatpush1.msra.mxu0 %v641
    %2295 = vmatprep.subr.mxu0 0.0
    %2296 = vmatpush1.msra.mxu0 %v642
    %2297 = vmatprep.subr.mxu0 0.0
    %2298 = vmatpush1.msra.mxu0 %v643
    %2299 = vmatprep.subr.mxu0 0.0
    %2300 = vmatpush1.msra.mxu0 %v644
    %2301 = vmatprep.subr.mxu0 0.0
    %2302 = vmatpush1.msra.mxu0 %v645
    %2303 = vmatprep.subr.mxu0 0.0
    %2304 = vmatpush1.msra.mxu0 %v646
    %2305 = vmatprep.subr.mxu0 0.0
    %2306 = vmatpush1.msra.mxu0 %v647
    %2307 = vmatprep.subr.mxu0 0.0
    %2308 = vmatpush1.msra.mxu0 %v648
    %2309 = vmatprep.subr.mxu0 0.0
    %2310 = vmatpush1.msra.mxu0 %v649
    %2311 = vmatprep.subr.mxu0 0.0
    %2312 = vmatpush1.msra.mxu0 %v650
    %2313 = vmatprep.subr.mxu0 0.0
    %2314 = vmatpush1.msra.mxu0 %v651
    %2315 = vmatprep.subr.mxu0 0.0
    %2316 = vmatpush1.msra.mxu0 %v652
    %2317 = vmatprep.subr.mxu0 0.0
    %2318 = vmatpush1.msra.mxu0 %v653
    %2319 = vmatprep.subr.mxu0 0.0
    %2320 = vmatpush1.msra.mxu0 %v654
    %2321 = vmatprep.subr.mxu0 0.0
    %2322 = vmatpush1.msra.mxu0 %v655
    %2323 = vmatprep.subr.mxu0 0.0
    %2324 = vmatpush1.msra.mxu0 %v656
    %2325 = vmatprep.subr.mxu0 0.0
    %2326 = vmatpush1.msra.mxu0 %v657
    %2327 = vmatprep.subr.mxu0 0.0
    %2328 = vmatpush1.msra.mxu0 %v658
    %2329 = vmatprep.subr.mxu0 0.0
    %2330 = vmatpush1.msra.mxu0 %v659
    %2331 = vmatprep.mubr.f32.mxu0 %v85
    %2332 = vmatmul.mubr.f32.gmra.mrb[0].mxu0 %v84
    %v2333 = vpop.f32.mrb[0].mxu0
    %v2334 = vadd.f32 %v2264, %v2333
    %v2335 = vpop.f32.mrb[0].mxu0
    %2336 = vdwg.mxu0
    %2337 = vmatprep.subr.mxu0 0.0
    %2338 = vmatpush1.msra.mxu0 %v660
    %2339 = vmatprep.subr.mxu0 0.0
    %2340 = vmatpush1.msra.mxu0 %v661
    %2341 = vmatprep.subr.mxu0 0.0
    %2342 = vmatpush1.msra.mxu0 %v662
    %2343 = vmatprep.subr.mxu0 0.0
    %2344 = vmatpush1.msra.mxu0 %v663
    %2345 = vmatprep.subr.mxu0 0.0
    %2346 = vmatpush1.msra.mxu0 %v664
    %2347 = vmatprep.subr.mxu0 0.0
    %2348 = vmatpush1.msra.mxu0 %v665
    %2349 = vmatprep.subr.mxu0 0.0
    %2350 = vmatpush1.msra.mxu0 %v666
    %2351 = vmatprep.subr.mxu0 0.0
    %2352 = vmatpush1.msra.mxu0 %v667
    %2353 = vmatprep.subr.mxu0 0.0
    %2354 = vmatpush1.msra.mxu0 %v668
    %2355 = vmatprep.subr.mxu0 0.0
    %2356 = vmatpush1.msra.mxu0 %v669
    %2357 = vmatprep.subr.mxu0 0.0
    %2358 = vmatpush1.msra.mxu0 %v670
    %2359 = vmatprep.subr.mxu0 0.0
    %2360 = vmatpush1.msra.mxu0 %v671
    %2361 = vmatprep.subr.mxu0 0.0
    %2362 = vmatpush1.msra.mxu0 %v672
    %2363 = vmatprep.subr.mxu0 0.0
    %2364 = vmatpush1.msra.mxu0 %v673
    %2365 = vmatprep.subr.mxu0 0.0
    %2366 = vmatpush1.msra.mxu0 %v674
    %2367 = vmatprep.subr.mxu0 0.0
    %2368 = vmatpush1.msra.mxu0 %v675
    %2369 = vmatprep.subr.mxu0 0.0
    %2370 = vmatpush1.msra.mxu0 %v676
    %2371 = vmatprep.subr.mxu0 0.0
    %2372 = vmatpush1.msra.mxu0 %v677
    %2373 = vmatprep.subr.mxu0 0.0
    %2374 = vmatpush1.msra.mxu0 %v678
    %2375 = vmatprep.subr.mxu0 0.0
    %2376 = vmatpush1.msra.mxu0 %v679
    %2377 = vmatprep.subr.mxu0 0.0
    %2378 = vmatpush1.msra.mxu0 %v680
    %2379 = vmatprep.subr.mxu0 0.0
    %2380 = vmatpush1.msra.mxu0 %v681
    %2381 = vmatprep.subr.mxu0 0.0
    %2382 = vmatpush1.msra.mxu0 %v682
    %2383 = vmatprep.subr.mxu0 0.0
    %2384 = vmatpush1.msra.mxu0 %v683
    %2385 = vmatprep.subr.mxu0 0.0
    %2386 = vmatpush1.msra.mxu0 %v684
    %2387 = vmatprep.subr.mxu0 0.0
    %2388 = vmatpush1.msra.mxu0 %v685
    %2389 = vmatprep.subr.mxu0 0.0
    %2390 = vmatpush1.msra.mxu0 %v686
    %2391 = vmatprep.subr.mxu0 0.0
    %2392 = vmatpush1.msra.mxu0 %v687
    %2393 = vmatprep.subr.mxu0 0.0
    %2394 = vmatpush1.msra.mxu0 %v688
    %2395 = vmatprep.subr.mxu0 0.0
    %2396 = vmatpush1.msra.mxu0 %v689
    %2397 = vmatprep.subr.mxu0 0.0
    %2398 = vmatpush1.msra.mxu0 %v690
    %2399 = vmatprep.subr.mxu0 0.0
    %2400 = vmatpush1.msra.mxu0 %v691
    %2401 = vmatprep.mubr.f32.mxu0 %v87
    %2402 = vmatmul.mubr.f32.gmra.mrb[0].mxu0 %v86
    %v2403 = vpop.f32.mrb[0].mxu0
    %v2404 = vadd.f32 %v2334, %v2403
    %v2405 = vpop.f32.mrb[0].mxu0
    %2406 = vdwg.mxu0
    %2407 = vmatprep.subr.mxu0 0.0
    %2408 = vmatpush1.msra.mxu0 %v692
    %2409 = vmatprep.subr.mxu0 0.0
    %2410 = vmatpush1.msra.mxu0 %v693
    %2411 = vmatprep.subr.mxu0 0.0
    %2412 = vmatpush1.msra.mxu0 %v694
    %2413 = vmatprep.subr.mxu0 0.0
    %2414 = vmatpush1.msra.mxu0 %v695
    %2415 = vmatprep.subr.mxu0 0.0
    %2416 = vmatpush1.msra.mxu0 %v696
    %2417 = vmatprep.subr.mxu0 0.0
    %2418 = vmatpush1.msra.mxu0 %v697
    %2419 = vmatprep.subr.mxu0 0.0
    %2420 = vmatpush1.msra.mxu0 %v698
    %2421 = vmatprep.subr.mxu0 0.0
    %2422 = vmatpush1.msra.mxu0 %v699
    %2423 = vmatprep.subr.mxu0 0.0
    %2424 = vmatpush1.msra.mxu0 %v700
    %2425 = vmatprep.subr.mxu0 0.0
    %2426 = vmatpush1.msra.mxu0 %v701
    %2427 = vmatprep.subr.mxu0 0.0
    %2428 = vmatpush1.msra.mxu0 %v702
    %2429 = vmatprep.subr.mxu0 0.0
    %2430 = vmatpush1.msra.mxu0 %v703
    %2431 = vmatprep.subr.mxu0 0.0
    %2432 = vmatpush1.msra.mxu0 %v704
    %2433 = vmatprep.subr.mxu0 0.0
    %2434 = vmatpush1.msra.mxu0 %v705
    %2435 = vmatprep.subr.mxu0 0.0
    %2436 = vmatpush1.msra.mxu0 %v706
    %2437 = vmatprep.subr.mxu0 0.0
    %2438 = vmatpush1.msra.mxu0 %v707
    %2439 = vmatprep.subr.mxu0 0.0
    %2440 = vmatpush1.msra.mxu0 %v708
    %2441 = vmatprep.subr.mxu0 0.0
    %2442 = vmatpush1.msra.mxu0 %v709
    %2443 = vmatprep.subr.mxu0 0.0
    %2444 = vmatpush1.msra.mxu0 %v710
    %2445 = vmatprep.subr.mxu0 0.0
    %2446 = vmatpush1.msra.mxu0 %v711
    %2447 = vmatprep.subr.mxu0 0.0
    %2448 = vmatpush1.msra.mxu0 %v712
    %2449 = vmatprep.subr.mxu0 0.0
    %2450 = vmatpush1.msra.mxu0 %v713
    %2451 = vmatprep.subr.mxu0 0.0
    %2452 = vmatpush1.msra.mxu0 %v714
    %2453 = vmatprep.subr.mxu0 0.0
    %2454 = vmatpush1.msra.mxu0 %v715
    %2455 = vmatprep.subr.mxu0 0.0
    %2456 = vmatpush1.msra.mxu0 %v716
    %2457 = vmatprep.subr.mxu0 0.0
    %2458 = vmatpush1.msra.mxu0 %v717
    %2459 = vmatprep.subr.mxu0 0.0
    %2460 = vmatpush1.msra.mxu0 %v718
    %2461 = vmatprep.subr.mxu0 0.0
    %2462 = vmatpush1.msra.mxu0 %v719
    %2463 = vmatprep.subr.mxu0 0.0
    %2464 = vmatpush1.msra.mxu0 %v720
    %2465 = vmatprep.subr.mxu0 0.0
    %2466 = vmatpush1.msra.mxu0 %v721
    %2467 = vmatprep.subr.mxu0 0.0
    %2468 = vmatpush1.msra.mxu0 %v722
    %2469 = vmatprep.subr.mxu0 0.0
    %2470 = vmatpush1.msra.mxu0 %v723
    %2471 = vmatprep.mubr.f32.mxu0 %v89
    %2472 = vmatmul.mubr.f32.gmra.mrb[0].mxu0 %v88
    %v2473 = vpop.f32.mrb[0].mxu0
    %v2474 = vadd.f32 %v2404, %v2473
    %v2475 = vpop.f32.mrb[0].mxu0
    %2476 = vdwg.mxu0
    %2477 = vmatprep.subr.mxu0 0.0
    %2478 = vmatpush1.msra.mxu0 %v724
    %2479 = vmatprep.subr.mxu0 0.0
    %2480 = vmatpush1.msra.mxu0 %v725
    %2481 = vmatprep.subr.mxu0 0.0
    %2482 = vmatpush1.msra.mxu0 %v726
    %2483 = vmatprep.subr.mxu0 0.0
    %2484 = vmatpush1.msra.mxu0 %v727
    %2485 = vmatprep.subr.mxu0 0.0
    %2486 = vmatpush1.msra.mxu0 %v728
    %2487 = vmatprep.subr.mxu0 0.0
    %2488 = vmatpush1.msra.mxu0 %v729
    %2489 = vmatprep.subr.mxu0 0.0
    %2490 = vmatpush1.msra.mxu0 %v730
    %2491 = vmatprep.subr.mxu0 0.0
    %2492 = vmatpush1.msra.mxu0 %v731
    %2493 = vmatprep.subr.mxu0 0.0
    %2494 = vmatpush1.msra.mxu0 %v732
    %2495 = vmatprep.subr.mxu0 0.0
    %2496 = vmatpush1.msra.mxu0 %v733
    %2497 = vmatprep.subr.mxu0 0.0
    %2498 = vmatpush1.msra.mxu0 %v734
    %2499 = vmatprep.subr.mxu0 0.0
    %2500 = vmatpush1.msra.mxu0 %v735
    %2501 = vmatprep.subr.mxu0 0.0
    %2502 = vmatpush1.msra.mxu0 %v736
    %2503 = vmatprep.subr.mxu0 0.0
    %2504 = vmatpush1.msra.mxu0 %v737
    %2505 = vmatprep.subr.mxu0 0.0
    %2506 = vmatpush1.msra.mxu0 %v738
    %2507 = vmatprep.subr.mxu0 0.0
    %2508 = vmatpush1.msra.mxu0 %v739
    %2509 = vmatprep.subr.mxu0 0.0
    %2510 = vmatpush1.msra.mxu0 %v740
    %2511 = vmatprep.subr.mxu0 0.0
    %2512 = vmatpush1.msra.mxu0 %v741
    %2513 = vmatprep.subr.mxu0 0.0
    %2514 = vmatpush1.msra.mxu0 %v742
    %2515 = vmatprep.subr.mxu0 0.0
    %2516 = vmatpush1.msra.mxu0 %v743
    %2517 = vmatprep.subr.mxu0 0.0
    %2518 = vmatpush1.msra.mxu0 %v744
    %2519 = vmatprep.subr.mxu0 0.0
    %2520 = vmatpush1.msra.mxu0 %v745
    %2521 = vmatprep.subr.mxu0 0.0
    %2522 = vmatpush1.msra.mxu0 %v746
    %2523 = vmatprep.subr.mxu0 0.0
    %2524 = vmatpush1.msra.mxu0 %v747
    %2525 = vmatprep.subr.mxu0 0.0
    %2526 = vmatpush1.msra.mxu0 %v748
    %2527 = vmatprep.subr.mxu0 0.0
    %2528 = vmatpush1.msra.mxu0 %v749
    %2529 = vmatprep.subr.mxu0 0.0
    %2530 = vmatpush1.msra.mxu0 %v750
    %2531 = vmatprep.subr.mxu0 0.0
    %2532 = vmatpush1.msra.mxu0 %v751
    %2533 = vmatprep.subr.mxu0 0.0
    %2534 = vmatpush1.msra.mxu0 %v752
    %2535 = vmatprep.subr.mxu0 0.0
    %2536 = vmatpush1.msra.mxu0 %v753
    %2537 = vmatprep.subr.mxu0 0.0
    %2538 = vmatpush1.msra.mxu0 %v754
    %2539 = vmatprep.subr.mxu0 0.0
    %2540 = vmatpush1.msra.mxu0 %v755
    %2541 = vmatprep.mubr.f32.mxu0 %v91
    %2542 = vmatmul.mubr.f32.gmra.mrb[0].mxu0 %v90
    %v2543 = vpop.f32.mrb[0].mxu0
    %v2544 = vadd.f32 %v2474, %v2543
    %v2545 = vpop.f32.mrb[0].mxu0
    %2546 = vdwg.mxu0
    %2547 = vmatprep.subr.mxu0 0.0
    %2548 = vmatpush1.msra.mxu0 %v756
    %2549 = vmatprep.subr.mxu0 0.0
    %2550 = vmatpush1.msra.mxu0 %v757
    %2551 = vmatprep.subr.mxu0 0.0
    %2552 = vmatpush1.msra.mxu0 %v758
    %2553 = vmatprep.subr.mxu0 0.0
    %2554 = vmatpush1.msra.mxu0 %v759
    %2555 = vmatprep.subr.mxu0 0.0
    %2556 = vmatpush1.msra.mxu0 %v760
    %2557 = vmatprep.subr.mxu0 0.0
    %2558 = vmatpush1.msra.mxu0 %v761
    %2559 = vmatprep.subr.mxu0 0.0
    %2560 = vmatpush1.msra.mxu0 %v762
    %2561 = vmatprep.subr.mxu0 0.0
    %2562 = vmatpush1.msra.mxu0 %v763
    %2563 = vmatprep.subr.mxu0 0.0
    %2564 = vmatpush1.msra.mxu0 %v764
    %2565 = vmatprep.subr.mxu0 0.0
    %2566 = vmatpush1.msra.mxu0 %v765
    %2567 = vmatprep.subr.mxu0 0.0
    %2568 = vmatpush1.msra.mxu0 %v766
    %2569 = vmatprep.subr.mxu0 0.0
    %2570 = vmatpush1.msra.mxu0 %v767
    %2571 = vmatprep.subr.mxu0 0.0
    %2572 = vmatpush1.msra.mxu0 %v768
    %2573 = vmatprep.subr.mxu0 0.0
    %2574 = vmatpush1.msra.mxu0 %v769
    %2575 = vmatprep.subr.mxu0 0.0
    %2576 = vmatpush1.msra.mxu0 %v770
    %2577 = vmatprep.subr.mxu0 0.0
    %2578 = vmatpush1.msra.mxu0 %v771
    %2579 = vmatprep.subr.mxu0 0.0
    %2580 = vmatpush1.msra.mxu0 %v772
    %2581 = vmatprep.subr.mxu0 0.0
    %2582 = vmatpush1.msra.mxu0 %v773
    %2583 = vmatprep.subr.mxu0 0.0
    %2584 = vmatpush1.msra.mxu0 %v774
    %2585 = vmatprep.subr.mxu0 0.0
    %2586 = vmatpush1.msra.mxu0 %v775
    %2587 = vmatprep.subr.mxu0 0.0
    %2588 = vmatpush1.msra.mxu0 %v776
    %2589 = vmatprep.subr.mxu0 0.0
    %2590 = vmatpush1.msra.mxu0 %v777
    %2591 = vmatprep.subr.mxu0 0.0
    %2592 = vmatpush1.msra.mxu0 %v778
    %2593 = vmatprep.subr.mxu0 0.0
    %2594 = vmatpush1.msra.mxu0 %v779
    %2595 = vmatprep.subr.mxu0 0.0
    %2596 = vmatpush1.msra.mxu0 %v780
    %2597 = vmatprep.subr.mxu0 0.0
    %2598 = vmatpush1.msra.mxu0 %v781
    %2599 = vmatprep.subr.mxu0 0.0
    %2600 = vmatpush1.msra.mxu0 %v782
    %2601 = vmatprep.subr.mxu0 0.0
    %2602 = vmatpush1.msra.mxu0 %v783
    %2603 = vmatprep.subr.mxu0 0.0
    %2604 = vmatpush1.msra.mxu0 %v784
    %2605 = vmatprep.subr.mxu0 0.0
    %2606 = vmatpush1.msra.mxu0 %v785
    %2607 = vmatprep.subr.mxu0 0.0
    %2608 = vmatpush1.msra.mxu0 %v786
    %2609 = vmatprep.subr.mxu0 0.0
    %2610 = vmatpush1.msra.mxu0 %v787
    %2611 = vmatprep.mubr.f32.mxu0 %v93
    %2612 = vmatmul.mubr.f32.gmra.mrb[0].mxu0 %v92
    %v2613 = vpop.f32.mrb[0].mxu0
    %v2614 = vadd.f32 %v2544, %v2613
    %v2615 = vpop.f32.mrb[0].mxu0
    %2616 = vdwg.mxu0
    %2617 = vmatprep.subr.mxu0 0.0
    %2618 = vmatpush1.msra.mxu0 %v788
    %2619 = vmatprep.subr.mxu0 0.0
    %2620 = vmatpush1.msra.mxu0 %v789
    %2621 = vmatprep.subr.mxu0 0.0
    %2622 = vmatpush1.msra.mxu0 %v790
    %2623 = vmatprep.subr.mxu0 0.0
    %2624 = vmatpush1.msra.mxu0 %v791
    %2625 = vmatprep.subr.mxu0 0.0
    %2626 = vmatpush1.msra.mxu0 %v792
    %2627 = vmatprep.subr.mxu0 0.0
    %2628 = vmatpush1.msra.mxu0 %v793
    %2629 = vmatprep.subr.mxu0 0.0
    %2630 = vmatpush1.msra.mxu0 %v794
    %2631 = vmatprep.subr.mxu0 0.0
    %2632 = vmatpush1.msra.mxu0 %v795
    %2633 = vmatprep.subr.mxu0 0.0
    %2634 = vmatpush1.msra.mxu0 %v796
    %2635 = vmatprep.subr.mxu0 0.0
    %2636 = vmatpush1.msra.mxu0 %v797
    %2637 = vmatprep.subr.mxu0 0.0
    %2638 = vmatpush1.msra.mxu0 %v798
    %2639 = vmatprep.subr.mxu0 0.0
    %2640 = vmatpush1.msra.mxu0 %v799
    %2641 = vmatprep.subr.mxu0 0.0
    %2642 = vmatpush1.msra.mxu0 %v800
    %2643 = vmatprep.subr.mxu0 0.0
    %2644 = vmatpush1.msra.mxu0 %v801
    %2645 = vmatprep.subr.mxu0 0.0
    %2646 = vmatpush1.msra.mxu0 %v802
    %2647 = vmatprep.subr.mxu0 0.0
    %2648 = vmatpush1.msra.mxu0 %v803
    %2649 = vmatprep.subr.mxu0 0.0
    %2650 = vmatpush1.msra.mxu0 %v804
    %2651 = vmatprep.subr.mxu0 0.0
    %2652 = vmatpush1.msra.mxu0 %v805
    %2653 = vmatprep.subr.mxu0 0.0
    %2654 = vmatpush1.msra.mxu0 %v806
    %2655 = vmatprep.subr.mxu0 0.0
    %2656 = vmatpush1.msra.mxu0 %v807
    %2657 = vmatprep.subr.mxu0 0.0
    %2658 = vmatpush1.msra.mxu0 %v808
    %2659 = vmatprep.subr.mxu0 0.0
    %2660 = vmatpush1.msra.mxu0 %v809
    %2661 = vmatprep.subr.mxu0 0.0
    %2662 = vmatpush1.msra.mxu0 %v810
    %2663 = vmatprep.subr.mxu0 0.0
    %2664 = vmatpush1.msra.mxu0 %v811
    %2665 = vmatprep.subr.mxu0 0.0
    %2666 = vmatpush1.msra.mxu0 %v812
    %2667 = vmatprep.subr.mxu0 0.0
    %2668 = vmatpush1.msra.mxu0 %v813
    %2669 = vmatprep.subr.mxu0 0.0
    %2670 = vmatpush1.msra.mxu0 %v814
    %2671 = vmatprep.subr.mxu0 0.0
    %2672 = vmatpush1.msra.mxu0 %v815
    %2673 = vmatprep.subr.mxu0 0.0
    %2674 = vmatpush1.msra.mxu0 %v816
    %2675 = vmatprep.subr.mxu0 0.0
    %2676 = vmatpush1.msra.mxu0 %v817
    %2677 = vmatprep.subr.mxu0 0.0
    %2678 = vmatpush1.msra.mxu0 %v818
    %2679 = vmatprep.subr.mxu0 0.0
    %2680 = vmatpush1.msra.mxu0 %v819
    %2681 = vmatprep.mubr.f32.mxu0 %v95
    %2682 = vmatmul.mubr.f32.gmra.mrb[0].mxu0 %v94
    %v2683 = vpop.f32.mrb[0].mxu0
    %v2684 = vadd.f32 %v2614, %v2683
    %v2685 = vpop.f32.mrb[0].mxu0
    %2686 = vdwg.mxu0
    %2687 = vmatprep.subr.mxu0 0.0
    %2688 = vmatpush1.msra.mxu0 %v820
    %2689 = vmatprep.subr.mxu0 0.0
    %2690 = vmatpush1.msra.mxu0 %v821
    %2691 = vmatprep.subr.mxu0 0.0
    %2692 = vmatpush1.msra.mxu0 %v822
    %2693 = vmatprep.subr.mxu0 0.0
    %2694 = vmatpush1.msra.mxu0 %v823
    %2695 = vmatprep.subr.mxu0 0.0
    %2696 = vmatpush1.msra.mxu0 %v824
    %2697 = vmatprep.subr.mxu0 0.0
    %2698 = vmatpush1.msra.mxu0 %v825
    %2699 = vmatprep.subr.mxu0 0.0
    %2700 = vmatpush1.msra.mxu0 %v826
    %2701 = vmatprep.subr.mxu0 0.0
    %2702 = vmatpush1.msra.mxu0 %v827
    %2703 = vmatprep.subr.mxu0 0.0
    %2704 = vmatpush1.msra.mxu0 %v828
    %2705 = vmatprep.subr.mxu0 0.0
    %2706 = vmatpush1.msra.mxu0 %v829
    %2707 = vmatprep.subr.mxu0 0.0
    %2708 = vmatpush1.msra.mxu0 %v830
    %2709 = vmatprep.subr.mxu0 0.0
    %2710 = vmatpush1.msra.mxu0 %v831
    %2711 = vmatprep.subr.mxu0 0.0
    %2712 = vmatpush1.msra.mxu0 %v832
    %2713 = vmatprep.subr.mxu0 0.0
    %2714 = vmatpush1.msra.mxu0 %v833
    %2715 = vmatprep.subr.mxu0 0.0
    %2716 = vmatpush1.msra.mxu0 %v834
    %2717 = vmatprep.subr.mxu0 0.0
    %2718 = vmatpush1.msra.mxu0 %v835
    %2719 = vmatprep.subr.mxu0 0.0
    %2720 = vmatpush1.msra.mxu0 %v836
    %2721 = vmatprep.subr.mxu0 0.0
    %2722 = vmatpush1.msra.mxu0 %v837
    %2723 = vmatprep.subr.mxu0 0.0
    %2724 = vmatpush1.msra.mxu0 %v838
    %2725 = vmatprep.subr.mxu0 0.0
    %2726 = vmatpush1.msra.mxu0 %v839
    %2727 = vmatprep.subr.mxu0 0.0
    %2728 = vmatpush1.msra.mxu0 %v840
    %2729 = vmatprep.subr.mxu0 0.0
    %2730 = vmatpush1.msra.mxu0 %v841
    %2731 = vmatprep.subr.mxu0 0.0
    %2732 = vmatpush1.msra.mxu0 %v842
    %2733 = vmatprep.subr.mxu0 0.0
    %2734 = vmatpush1.msra.mxu0 %v843
    %2735 = vmatprep.subr.mxu0 0.0
    %2736 = vmatpush1.msra.mxu0 %v844
    %2737 = vmatprep.subr.mxu0 0.0
    %2738 = vmatpush1.msra.mxu0 %v845
    %2739 = vmatprep.subr.mxu0 0.0
    %2740 = vmatpush1.msra.mxu0 %v846
    %2741 = vmatprep.subr.mxu0 0.0
    %2742 = vmatpush1.msra.mxu0 %v847
    %2743 = vmatprep.subr.mxu0 0.0
    %2744 = vmatpush1.msra.mxu0 %v848
    %2745 = vmatprep.subr.mxu0 0.0
    %2746 = vmatpush1.msra.mxu0 %v849
    %2747 = vmatprep.subr.mxu0 0.0
    %2748 = vmatpush1.msra.mxu0 %v850
    %2749 = vmatprep.subr.mxu0 0.0
    %2750 = vmatpush1.msra.mxu0 %v851
    %2751 = vmatprep.mubr.f32.mxu0 %v97
    %2752 = vmatmul.mubr.f32.gmra.mrb[0].mxu0 %v96
    %v2753 = vpop.f32.mrb[0].mxu0
    %v2754 = vadd.f32 %v2684, %v2753
    %v2755 = vpop.f32.mrb[0].mxu0
    %2756 = vdwg.mxu0
    %2757 = vmatprep.subr.mxu0 0.0
    %2758 = vmatpush1.msra.mxu0 %v852
    %2759 = vmatprep.subr.mxu0 0.0
    %2760 = vmatpush1.msra.mxu0 %v853
    %2761 = vmatprep.subr.mxu0 0.0
    %2762 = vmatpush1.msra.mxu0 %v854
    %2763 = vmatprep.subr.mxu0 0.0
    %2764 = vmatpush1.msra.mxu0 %v855
    %2765 = vmatprep.subr.mxu0 0.0
    %2766 = vmatpush1.msra.mxu0 %v856
    %2767 = vmatprep.subr.mxu0 0.0
    %2768 = vmatpush1.msra.mxu0 %v857
    %2769 = vmatprep.subr.mxu0 0.0
    %2770 = vmatpush1.msra.mxu0 %v858
    %2771 = vmatprep.subr.mxu0 0.0
    %2772 = vmatpush1.msra.mxu0 %v859
    %2773 = vmatprep.subr.mxu0 0.0
    %2774 = vmatpush1.msra.mxu0 %v860
    %2775 = vmatprep.subr.mxu0 0.0
    %2776 = vmatpush1.msra.mxu0 %v861
    %2777 = vmatprep.subr.mxu0 0.0
    %2778 = vmatpush1.msra.mxu0 %v862
    %2779 = vmatprep.subr.mxu0 0.0
    %2780 = vmatpush1.msra.mxu0 %v863
    %2781 = vmatprep.subr.mxu0 0.0
    %2782 = vmatpush1.msra.mxu0 %v864
    %2783 = vmatprep.subr.mxu0 0.0
    %2784 = vmatpush1.msra.mxu0 %v865
    %2785 = vmatprep.subr.mxu0 0.0
    %2786 = vmatpush1.msra.mxu0 %v866
    %2787 = vmatprep.subr.mxu0 0.0
    %2788 = vmatpush1.msra.mxu0 %v867
    %2789 = vmatprep.subr.mxu0 0.0
    %2790 = vmatpush1.msra.mxu0 %v868
    %2791 = vmatprep.subr.mxu0 0.0
    %2792 = vmatpush1.msra.mxu0 %v869
    %2793 = vmatprep.subr.mxu0 0.0
    %2794 = vmatpush1.msra.mxu0 %v870
    %2795 = vmatprep.subr.mxu0 0.0
    %2796 = vmatpush1.msra.mxu0 %v871
    %2797 = vmatprep.subr.mxu0 0.0
    %2798 = vmatpush1.msra.mxu0 %v872
    %2799 = vmatprep.subr.mxu0 0.0
    %2800 = vmatpush1.msra.mxu0 %v873
    %2801 = vmatprep.subr.mxu0 0.0
    %2802 = vmatpush1.msra.mxu0 %v874
    %2803 = vmatprep.subr.mxu0 0.0
    %2804 = vmatpush1.msra.mxu0 %v875
    %2805 = vmatprep.subr.mxu0 0.0
    %2806 = vmatpush1.msra.mxu0 %v876
    %2807 = vmatprep.subr.mxu0 0.0
    %2808 = vmatpush1.msra.mxu0 %v877
    %2809 = vmatprep.subr.mxu0 0.0
    %2810 = vmatpush1.msra.mxu0 %v878
    %2811 = vmatprep.subr.mxu0 0.0
    %2812 = vmatpush1.msra.mxu0 %v879
    %2813 = vmatprep.subr.mxu0 0.0
    %2814 = vmatpush1.msra.mxu0 %v880
    %2815 = vmatprep.subr.mxu0 0.0
    %2816 = vmatpush1.msra.mxu0 %v881
    %2817 = vmatprep.subr.mxu0 0.0
    %2818 = vmatpush1.msra.mxu0 %v882
    %2819 = vmatprep.subr.mxu0 0.0
    %2820 = vmatpush1.msra.mxu0 %v883
    %2821 = vmatprep.mubr.f32.mxu0 %v99
    %2822 = vmatmul.mubr.f32.gmra.mrb[0].mxu0 %v98
    %v2823 = vpop.f32.mrb[0].mxu0
    %v2824 = vadd.f32 %v2754, %v2823
    %v2825 = vpop.f32.mrb[0].mxu0
    %2826 = vdwg.mxu0
    %2827 = vmatprep.subr.mxu0 0.0
    %2828 = vmatpush1.msra.mxu0 %v884
    %2829 = vmatprep.subr.mxu0 0.0
    %2830 = vmatpush1.msra.mxu0 %v885
    %2831 = vmatprep.subr.mxu0 0.0
    %2832 = vmatpush1.msra.mxu0 %v886
    %2833 = vmatprep.subr.mxu0 0.0
    %2834 = vmatpush1.msra.mxu0 %v887
    %2835 = vmatprep.subr.mxu0 0.0
    %2836 = vmatpush1.msra.mxu0 %v888
    %2837 = vmatprep.subr.mxu0 0.0
    %2838 = vmatpush1.msra.mxu0 %v889
    %2839 = vmatprep.subr.mxu0 0.0
    %2840 = vmatpush1.msra.mxu0 %v890
    %2841 = vmatprep.subr.mxu0 0.0
    %2842 = vmatpush1.msra.mxu0 %v891
    %2843 = vmatprep.subr.mxu0 0.0
    %2844 = vmatpush1.msra.mxu0 %v892
    %2845 = vmatprep.subr.mxu0 0.0
    %2846 = vmatpush1.msra.mxu0 %v893
    %2847 = vmatprep.subr.mxu0 0.0
    %2848 = vmatpush1.msra.mxu0 %v894
    %2849 = vmatprep.subr.mxu0 0.0
    %2850 = vmatpush1.msra.mxu0 %v895
    %2851 = vmatprep.subr.mxu0 0.0
    %2852 = vmatpush1.msra.mxu0 %v896
    %2853 = vmatprep.subr.mxu0 0.0
    %2854 = vmatpush1.msra.mxu0 %v897
    %2855 = vmatprep.subr.mxu0 0.0
    %2856 = vmatpush1.msra.mxu0 %v898
    %2857 = vmatprep.subr.mxu0 0.0
    %2858 = vmatpush1.msra.mxu0 %v899
    %2859 = vmatprep.subr.mxu0 0.0
    %2860 = vmatpush1.msra.mxu0 %v900
    %2861 = vmatprep.subr.mxu0 0.0
    %2862 = vmatpush1.msra.mxu0 %v901
    %2863 = vmatprep.subr.mxu0 0.0
    %2864 = vmatpush1.msra.mxu0 %v902
    %2865 = vmatprep.subr.mxu0 0.0
    %2866 = vmatpush1.msra.mxu0 %v903
    %2867 = vmatprep.subr.mxu0 0.0
    %2868 = vmatpush1.msra.mxu0 %v904
    %2869 = vmatprep.subr.mxu0 0.0
    %2870 = vmatpush1.msra.mxu0 %v905
    %2871 = vmatprep.subr.mxu0 0.0
    %2872 = vmatpush1.msra.mxu0 %v906
    %2873 = vmatprep.subr.mxu0 0.0
    %2874 = vmatpush1.msra.mxu0 %v907
    %2875 = vmatprep.subr.mxu0 0.0
    %2876 = vmatpush1.msra.mxu0 %v908
    %2877 = vmatprep.subr.mxu0 0.0
    %2878 = vmatpush1.msra.mxu0 %v909
    %2879 = vmatprep.subr.mxu0 0.0
    %2880 = vmatpush1.msra.mxu0 %v910
    %2881 = vmatprep.subr.mxu0 0.0
    %2882 = vmatpush1.msra.mxu0 %v911
    %2883 = vmatprep.subr.mxu0 0.0
    %2884 = vmatpush1.msra.mxu0 %v912
    %2885 = vmatprep.subr.mxu0 0.0
    %2886 = vmatpush1.msra.mxu0 %v913
    %2887 = vmatprep.subr.mxu0 0.0
    %2888 = vmatpush1.msra.mxu0 %v914
    %2889 = vmatprep.subr.mxu0 0.0
    %2890 = vmatpush1.msra.mxu0 %v915
    %2891 = vmatprep.mubr.f32.mxu0 %v101
    %2892 = vmatmul.mubr.f32.gmra.mrb[0].mxu0 %v100
    %v2893 = vpop.f32.mrb[0].mxu0
    %v2894 = vadd.f32 %v2824, %v2893
    %v2895 = vpop.f32.mrb[0].mxu0
    %2896 = vdwg.mxu0
    %2897 = vmatprep.subr.mxu0 0.0
    %2898 = vmatpush1.msra.mxu0 %v916
    %2899 = vmatprep.subr.mxu0 0.0
    %2900 = vmatpush1.msra.mxu0 %v917
    %2901 = vmatprep.subr.mxu0 0.0
    %2902 = vmatpush1.msra.mxu0 %v918
    %2903 = vmatprep.subr.mxu0 0.0
    %2904 = vmatpush1.msra.mxu0 %v919
    %2905 = vmatprep.subr.mxu0 0.0
    %2906 = vmatpush1.msra.mxu0 %v920
    %2907 = vmatprep.subr.mxu0 0.0
    %2908 = vmatpush1.msra.mxu0 %v921
    %2909 = vmatprep.subr.mxu0 0.0
    %2910 = vmatpush1.msra.mxu0 %v922
    %2911 = vmatprep.subr.mxu0 0.0
    %2912 = vmatpush1.msra.mxu0 %v923
    %2913 = vmatprep.subr.mxu0 0.0
    %2914 = vmatpush1.msra.mxu0 %v924
    %2915 = vmatprep.subr.mxu0 0.0
    %2916 = vmatpush1.msra.mxu0 %v925
    %2917 = vmatprep.subr.mxu0 0.0
    %2918 = vmatpush1.msra.mxu0 %v926
    %2919 = vmatprep.subr.mxu0 0.0
    %2920 = vmatpush1.msra.mxu0 %v927
    %2921 = vmatprep.subr.mxu0 0.0
    %2922 = vmatpush1.msra.mxu0 %v928
    %2923 = vmatprep.subr.mxu0 0.0
    %2924 = vmatpush1.msra.mxu0 %v929
    %2925 = vmatprep.subr.mxu0 0.0
    %2926 = vmatpush1.msra.mxu0 %v930
    %2927 = vmatprep.subr.mxu0 0.0
    %2928 = vmatpush1.msra.mxu0 %v931
    %2929 = vmatprep.subr.mxu0 0.0
    %2930 = vmatpush1.msra.mxu0 %v932
    %2931 = vmatprep.subr.mxu0 0.0
    %2932 = vmatpush1.msra.mxu0 %v933
    %2933 = vmatprep.subr.mxu0 0.0
    %2934 = vmatpush1.msra.mxu0 %v934
    %2935 = vmatprep.subr.mxu0 0.0
    %2936 = vmatpush1.msra.mxu0 %v935
    %2937 = vmatprep.subr.mxu0 0.0
    %2938 = vmatpush1.msra.mxu0 %v936
    %2939 = vmatprep.subr.mxu0 0.0
    %2940 = vmatpush1.msra.mxu0 %v937
    %2941 = vmatprep.subr.mxu0 0.0
    %2942 = vmatpush1.msra.mxu0 %v938
    %2943 = vmatprep.subr.mxu0 0.0
    %2944 = vmatpush1.msra.mxu0 %v939
    %2945 = vmatprep.subr.mxu0 0.0
    %2946 = vmatpush1.msra.mxu0 %v940
    %2947 = vmatprep.subr.mxu0 0.0
    %2948 = vmatpush1.msra.mxu0 %v941
    %2949 = vmatprep.subr.mxu0 0.0
    %2950 = vmatpush1.msra.mxu0 %v942
    %2951 = vmatprep.subr.mxu0 0.0
    %2952 = vmatpush1.msra.mxu0 %v943
    %2953 = vmatprep.subr.mxu0 0.0
    %2954 = vmatpush1.msra.mxu0 %v944
    %2955 = vmatprep.subr.mxu0 0.0
    %2956 = vmatpush1.msra.mxu0 %v945
    %2957 = vmatprep.subr.mxu0 0.0
    %2958 = vmatpush1.msra.mxu0 %v946
    %2959 = vmatprep.subr.mxu0 0.0
    %2960 = vmatpush1.msra.mxu0 %v947
    %2961 = vmatprep.mubr.f32.mxu0 %v103
    %2962 = vmatmul.mubr.f32.gmra.mrb[0].mxu0 %v102
    %v2963 = vpop.f32.mrb[0].mxu0
    %v2964 = vadd.f32 %v2894, %v2963
    %v2965 = vpop.f32.mrb[0].mxu0
    %2966 = vdwg.mxu0
    %2967 = vmatprep.subr.mxu0 0.0
    %2968 = vmatpush1.msra.mxu0 %v948
    %2969 = vmatprep.subr.mxu0 0.0
    %2970 = vmatpush1.msra.mxu0 %v949
    %2971 = vmatprep.subr.mxu0 0.0
    %2972 = vmatpush1.msra.mxu0 %v950
    %2973 = vmatprep.subr.mxu0 0.0
    %2974 = vmatpush1.msra.mxu0 %v951
    %2975 = vmatprep.subr.mxu0 0.0
    %2976 = vmatpush1.msra.mxu0 %v952
    %2977 = vmatprep.subr.mxu0 0.0
    %2978 = vmatpush1.msra.mxu0 %v953
    %2979 = vmatprep.subr.mxu0 0.0
    %2980 = vmatpush1.msra.mxu0 %v954
    %2981 = vmatprep.subr.mxu0 0.0
    %2982 = vmatpush1.msra.mxu0 %v955
    %2983 = vmatprep.subr.mxu0 0.0
    %2984 = vmatpush1.msra.mxu0 %v956
    %2985 = vmatprep.subr.mxu0 0.0
    %2986 = vmatpush1.msra.mxu0 %v957
    %2987 = vmatprep.subr.mxu0 0.0
    %2988 = vmatpush1.msra.mxu0 %v958
    %2989 = vmatprep.subr.mxu0 0.0
    %2990 = vmatpush1.msra.mxu0 %v959
    %2991 = vmatprep.subr.mxu0 0.0
    %2992 = vmatpush1.msra.mxu0 %v960
    %2993 = vmatprep.subr.mxu0 0.0
    %2994 = vmatpush1.msra.mxu0 %v961
    %2995 = vmatprep.subr.mxu0 0.0
    %2996 = vmatpush1.msra.mxu0 %v962
    %2997 = vmatprep.subr.mxu0 0.0
    %2998 = vmatpush1.msra.mxu0 %v963
    %2999 = vmatprep.subr.mxu0 0.0
    %3000 = vmatpush1.msra.mxu0 %v964
    %3001 = vmatprep.subr.mxu0 0.0
    %3002 = vmatpush1.msra.mxu0 %v965
    %3003 = vmatprep.subr.mxu0 0.0
    %3004 = vmatpush1.msra.mxu0 %v966
    %3005 = vmatprep.subr.mxu0 0.0
    %3006 = vmatpush1.msra.mxu0 %v967
    %3007 = vmatprep.subr.mxu0 0.0
    %3008 = vmatpush1.msra.mxu0 %v968
    %3009 = vmatprep.subr.mxu0 0.0
    %3010 = vmatpush1.msra.mxu0 %v969
    %3011 = vmatprep.subr.mxu0 0.0
    %3012 = vmatpush1.msra.mxu0 %v970
    %3013 = vmatprep.subr.mxu0 0.0
    %3014 = vmatpush1.msra.mxu0 %v971
    %3015 = vmatprep.subr.mxu0 0.0
    %3016 = vmatpush1.msra.mxu0 %v972
    %3017 = vmatprep.subr.mxu0 0.0
    %3018 = vmatpush1.msra.mxu0 %v973
    %3019 = vmatprep.subr.mxu0 0.0
    %3020 = vmatpush1.msra.mxu0 %v974
    %3021 = vmatprep.subr.mxu0 0.0
    %3022 = vmatpush1.msra.mxu0 %v975
    %3023 = vmatprep.subr.mxu0 0.0
    %3024 = vmatpush1.msra.mxu0 %v976
    %3025 = vmatprep.subr.mxu0 0.0
    %3026 = vmatpush1.msra.mxu0 %v977
    %3027 = vmatprep.subr.mxu0 0.0
    %3028 = vmatpush1.msra.mxu0 %v978
    %3029 = vmatprep.subr.mxu0 0.0
    %3030 = vmatpush1.msra.mxu0 %v979
    %3031 = vmatprep.mubr.f32.mxu0 %v105
    %3032 = vmatmul.mubr.f32.gmra.mrb[0].mxu0 %v104
    %v3033 = vpop.f32.mrb[0].mxu0
    %v3034 = vadd.f32 %v2964, %v3033
    %v3035 = vpop.f32.mrb[0].mxu0
    %3036 = vdwg.mxu0
    %3037 = vmatprep.subr.mxu0 0.0
    %3038 = vmatpush1.msra.mxu0 %v980
    %3039 = vmatprep.subr.mxu0 0.0
    %3040 = vmatpush1.msra.mxu0 %v981
    %3041 = vmatprep.subr.mxu0 0.0
    %3042 = vmatpush1.msra.mxu0 %v982
    %3043 = vmatprep.subr.mxu0 0.0
    %3044 = vmatpush1.msra.mxu0 %v983
    %3045 = vmatprep.subr.mxu0 0.0
    %3046 = vmatpush1.msra.mxu0 %v984
    %3047 = vmatprep.subr.mxu0 0.0
    %3048 = vmatpush1.msra.mxu0 %v985
    %3049 = vmatprep.subr.mxu0 0.0
    %3050 = vmatpush1.msra.mxu0 %v986
    %3051 = vmatprep.subr.mxu0 0.0
    %3052 = vmatpush1.msra.mxu0 %v987
    %3053 = vmatprep.subr.mxu0 0.0
    %3054 = vmatpush1.msra.mxu0 %v988
    %3055 = vmatprep.subr.mxu0 0.0
    %3056 = vmatpush1.msra.mxu0 %v989
    %3057 = vmatprep.subr.mxu0 0.0
    %3058 = vmatpush1.msra.mxu0 %v990
    %3059 = vmatprep.subr.mxu0 0.0
    %3060 = vmatpush1.msra.mxu0 %v991
    %3061 = vmatprep.subr.mxu0 0.0
    %3062 = vmatpush1.msra.mxu0 %v992
    %3063 = vmatprep.subr.mxu0 0.0
    %3064 = vmatpush1.msra.mxu0 %v993
    %3065 = vmatprep.subr.mxu0 0.0
    %3066 = vmatpush1.msra.mxu0 %v994
    %3067 = vmatprep.subr.mxu0 0.0
    %3068 = vmatpush1.msra.mxu0 %v995
    %3069 = vmatprep.subr.mxu0 0.0
    %3070 = vmatpush1.msra.mxu0 %v996
    %3071 = vmatprep.subr.mxu0 0.0
    %3072 = vmatpush1.msra.mxu0 %v997
    %3073 = vmatprep.subr.mxu0 0.0
    %3074 = vmatpush1.msra.mxu0 %v998
    %3075 = vmatprep.subr.mxu0 0.0
    %3076 = vmatpush1.msra.mxu0 %v999
    %3077 = vmatprep.subr.mxu0 0.0
    %3078 = vmatpush1.msra.mxu0 %v1000
    %3079 = vmatprep.subr.mxu0 0.0
    %3080 = vmatpush1.msra.mxu0 %v1001
    %3081 = vmatprep.subr.mxu0 0.0
    %3082 = vmatpush1.msra.mxu0 %v1002
    %3083 = vmatprep.subr.mxu0 0.0
    %3084 = vmatpush1.msra.mxu0 %v1003
    %3085 = vmatprep.subr.mxu0 0.0
    %3086 = vmatpush1.msra.mxu0 %v1004
    %3087 = vmatprep.subr.mxu0 0.0
    %3088 = vmatpush1.msra.mxu0 %v1005
    %3089 = vmatprep.subr.mxu0 0.0
    %3090 = vmatpush1.msra.mxu0 %v1006
    %3091 = vmatprep.subr.mxu0 0.0
    %3092 = vmatpush1.msra.mxu0 %v1007
    %3093 = vmatprep.subr.mxu0 0.0
    %3094 = vmatpush1.msra.mxu0 %v1008
    %3095 = vmatprep.subr.mxu0 0.0
    %3096 = vmatpush1.msra.mxu0 %v1009
    %3097 = vmatprep.subr.mxu0 0.0
    %3098 = vmatpush1.msra.mxu0 %v1010
    %3099 = vmatprep.subr.mxu0 0.0
    %3100 = vmatpush1.msra.mxu0 %v1011
    %3101 = vmatprep.mubr.f32.mxu0 %v107
    %3102 = vmatmul.mubr.f32.gmra.mrb[0].mxu0 %v106
    %v3103 = vpop.f32.mrb[0].mxu0
    %v3104 = vadd.f32 %v3034, %v3103
    %v3105 = vpop.f32.mrb[0].mxu0
    %3106 = vdwg.mxu0
    %3107 = vmatprep.subr.mxu0 0.0
    %3108 = vmatpush1.msra.mxu0 %v1012
    %3109 = vmatprep.subr.mxu0 0.0
    %3110 = vmatpush1.msra.mxu0 %v1013
    %3111 = vmatprep.subr.mxu0 0.0
    %3112 = vmatpush1.msra.mxu0 %v1014
    %3113 = vmatprep.subr.mxu0 0.0
    %3114 = vmatpush1.msra.mxu0 %v1015
    %3115 = vmatprep.subr.mxu0 0.0
    %3116 = vmatpush1.msra.mxu0 %v1016
    %3117 = vmatprep.subr.mxu0 0.0
    %3118 = vmatpush1.msra.mxu0 %v1017
    %3119 = vmatprep.subr.mxu0 0.0
    %3120 = vmatpush1.msra.mxu0 %v1018
    %3121 = vmatprep.subr.mxu0 0.0
    %3122 = vmatpush1.msra.mxu0 %v1019
    %3123 = vmatprep.subr.mxu0 0.0
    %3124 = vmatpush1.msra.mxu0 %v1020
    %3125 = vmatprep.subr.mxu0 0.0
    %3126 = vmatpush1.msra.mxu0 %v1021
    %3127 = vmatprep.subr.mxu0 0.0
    %3128 = vmatpush1.msra.mxu0 %v1022
    %3129 = vmatprep.subr.mxu0 0.0
    %3130 = vmatpush1.msra.mxu0 %v1023
    %3131 = vmatprep.subr.mxu0 0.0
    %3132 = vmatpush1.msra.mxu0 %v1024
    %3133 = vmatprep.subr.mxu0 0.0
    %3134 = vmatpush1.msra.mxu0 %v1025
    %3135 = vmatprep.subr.mxu0 0.0
    %3136 = vmatpush1.msra.mxu0 %v1026
    %3137 = vmatprep.subr.mxu0 0.0
    %3138 = vmatpush1.msra.mxu0 %v1027
    %3139 = vmatprep.subr.mxu0 0.0
    %3140 = vmatpush1.msra.mxu0 %v1028
    %3141 = vmatprep.subr.mxu0 0.0
    %3142 = vmatpush1.msra.mxu0 %v1029
    %3143 = vmatprep.subr.mxu0 0.0
    %3144 = vmatpush1.msra.mxu0 %v1030
    %3145 = vmatprep.subr.mxu0 0.0
    %3146 = vmatpush1.msra.mxu0 %v1031
    %3147 = vmatprep.subr.mxu0 0.0
    %3148 = vmatpush1.msra.mxu0 %v1032
    %3149 = vmatprep.subr.mxu0 0.0
    %3150 = vmatpush1.msra.mxu0 %v1033
    %3151 = vmatprep.subr.mxu0 0.0
    %3152 = vmatpush1.msra.mxu0 %v1034
    %3153 = vmatprep.subr.mxu0 0.0
    %3154 = vmatpush1.msra.mxu0 %v1035
    %3155 = vmatprep.subr.mxu0 0.0
    %3156 = vmatpush1.msra.mxu0 %v1036
    %3157 = vmatprep.subr.mxu0 0.0
    %3158 = vmatpush1.msra.mxu0 %v1037
    %3159 = vmatprep.subr.mxu0 0.0
    %3160 = vmatpush1.msra.mxu0 %v1038
    %3161 = vmatprep.subr.mxu0 0.0
    %3162 = vmatpush1.msra.mxu0 %v1039
    %3163 = vmatprep.subr.mxu0 0.0
    %3164 = vmatpush1.msra.mxu0 %v1040
    %3165 = vmatprep.subr.mxu0 0.0
    %3166 = vmatpush1.msra.mxu0 %v1041
    %3167 = vmatprep.subr.mxu0 0.0
    %3168 = vmatpush1.msra.mxu0 %v1042
    %3169 = vmatprep.subr.mxu0 0.0
    %3170 = vmatpush1.msra.mxu0 %v1043
    %3171 = vmatprep.mubr.f32.mxu0 %v109
    %3172 = vmatmul.mubr.f32.gmra.mrb[0].mxu0 %v108
    %v3173 = vpop.f32.mrb[0].mxu0
    %v3174 = vadd.f32 %v3104, %v3173
    %v3175 = vpop.f32.mrb[0].mxu0
    %3176 = vdwg.mxu0
    %3177 = vmatprep.subr.mxu0 0.0
    %3178 = vmatpush1.msra.mxu0 %v1044
    %3179 = vmatprep.subr.mxu0 0.0
    %3180 = vmatpush1.msra.mxu0 %v1045
    %3181 = vmatprep.subr.mxu0 0.0
    %3182 = vmatpush1.msra.mxu0 %v1046
    %3183 = vmatprep.subr.mxu0 0.0
    %3184 = vmatpush1.msra.mxu0 %v1047
    %3185 = vmatprep.subr.mxu0 0.0
    %3186 = vmatpush1.msra.mxu0 %v1048
    %3187 = vmatprep.subr.mxu0 0.0
    %3188 = vmatpush1.msra.mxu0 %v1049
    %3189 = vmatprep.subr.mxu0 0.0
    %3190 = vmatpush1.msra.mxu0 %v1050
    %3191 = vmatprep.subr.mxu0 0.0
    %3192 = vmatpush1.msra.mxu0 %v1051
    %3193 = vmatprep.subr.mxu0 0.0
    %3194 = vmatpush1.msra.mxu0 %v1052
    %3195 = vmatprep.subr.mxu0 0.0
    %3196 = vmatpush1.msra.mxu0 %v1053
    %3197 = vmatprep.subr.mxu0 0.0
    %3198 = vmatpush1.msra.mxu0 %v1054
    %3199 = vmatprep.subr.mxu0 0.0
    %3200 = vmatpush1.msra.mxu0 %v1055
    %3201 = vmatprep.subr.mxu0 0.0
    %3202 = vmatpush1.msra.mxu0 %v1056
    %3203 = vmatprep.subr.mxu0 0.0
    %3204 = vmatpush1.msra.mxu0 %v1057
    %3205 = vmatprep.subr.mxu0 0.0
    %3206 = vmatpush1.msra.mxu0 %v1058
    %3207 = vmatprep.subr.mxu0 0.0
    %3208 = vmatpush1.msra.mxu0 %v1059
    %3209 = vmatprep.subr.mxu0 0.0
    %3210 = vmatpush1.msra.mxu0 %v1060
    %3211 = vmatprep.subr.mxu0 0.0
    %3212 = vmatpush1.msra.mxu0 %v1061
    %3213 = vmatprep.subr.mxu0 0.0
    %3214 = vmatpush1.msra.mxu0 %v1062
    %3215 = vmatprep.subr.mxu0 0.0
    %3216 = vmatpush1.msra.mxu0 %v1063
    %3217 = vmatprep.subr.mxu0 0.0
    %3218 = vmatpush1.msra.mxu0 %v1064
    %3219 = vmatprep.subr.mxu0 0.0
    %3220 = vmatpush1.msra.mxu0 %v1065
    %3221 = vmatprep.subr.mxu0 0.0
    %3222 = vmatpush1.msra.mxu0 %v1066
    %3223 = vmatprep.subr.mxu0 0.0
    %3224 = vmatpush1.msra.mxu0 %v1067
    %3225 = vmatprep.subr.mxu0 0.0
    %3226 = vmatpush1.msra.mxu0 %v1068
    %3227 = vmatprep.subr.mxu0 0.0
    %3228 = vmatpush1.msra.mxu0 %v1069
    %3229 = vmatprep.subr.mxu0 0.0
    %3230 = vmatpush1.msra.mxu0 %v1070
    %3231 = vmatprep.subr.mxu0 0.0
    %3232 = vmatpush1.msra.mxu0 %v1071
    %3233 = vmatprep.subr.mxu0 0.0
    %3234 = vmatpush1.msra.mxu0 %v1072
    %3235 = vmatprep.subr.mxu0 0.0
    %3236 = vmatpush1.msra.mxu0 %v1073
    %3237 = vmatprep.subr.mxu0 0.0
    %3238 = vmatpush1.msra.mxu0 %v1074
    %3239 = vmatprep.subr.mxu0 0.0
    %3240 = vmatpush1.msra.mxu0 %v1075
    %3241 = vmatprep.mubr.f32.mxu0 %v111
    %3242 = vmatmul.mubr.f32.gmra.mrb[0].mxu0 %v110
    %v3243 = vpop.f32.mrb[0].mxu0
    %v3244 = vadd.f32 %v3174, %v3243
    %v3245 = vpop.f32.mrb[0].mxu0
    %3246 = vdwg.mxu0
    %3247 = vmatprep.subr.mxu0 0.0
    %3248 = vmatpush1.msra.mxu0 %v1076
    %3249 = vmatprep.subr.mxu0 0.0
    %3250 = vmatpush1.msra.mxu0 %v1077
    %3251 = vmatprep.subr.mxu0 0.0
    %3252 = vmatpush1.msra.mxu0 %v1078
    %3253 = vmatprep.subr.mxu0 0.0
    %3254 = vmatpush1.msra.mxu0 %v1079
    %3255 = vmatprep.subr.mxu0 0.0
    %3256 = vmatpush1.msra.mxu0 %v1080
    %3257 = vmatprep.subr.mxu0 0.0
    %3258 = vmatpush1.msra.mxu0 %v1081
    %3259 = vmatprep.subr.mxu0 0.0
    %3260 = vmatpush1.msra.mxu0 %v1082
    %3261 = vmatprep.subr.mxu0 0.0
    %3262 = vmatpush1.msra.mxu0 %v1083
    %3263 = vmatprep.subr.mxu0 0.0
    %3264 = vmatpush1.msra.mxu0 %v1084
    %3265 = vmatprep.subr.mxu0 0.0
    %3266 = vmatpush1.msra.mxu0 %v1085
    %3267 = vmatprep.subr.mxu0 0.0
    %3268 = vmatpush1.msra.mxu0 %v1086
    %3269 = vmatprep.subr.mxu0 0.0
    %3270 = vmatpush1.msra.mxu0 %v1087
    %3271 = vmatprep.subr.mxu0 0.0
    %3272 = vmatpush1.msra.mxu0 %v1088
    %3273 = vmatprep.subr.mxu0 0.0
    %3274 = vmatpush1.msra.mxu0 %v1089
    %3275 = vmatprep.subr.mxu0 0.0
    %3276 = vmatpush1.msra.mxu0 %v1090
    %3277 = vmatprep.subr.mxu0 0.0
    %3278 = vmatpush1.msra.mxu0 %v1091
    %3279 = vmatprep.subr.mxu0 0.0
    %3280 = vmatpush1.msra.mxu0 %v1092
    %3281 = vmatprep.subr.mxu0 0.0
    %3282 = vmatpush1.msra.mxu0 %v1093
    %3283 = vmatprep.subr.mxu0 0.0
    %3284 = vmatpush1.msra.mxu0 %v1094
    %3285 = vmatprep.subr.mxu0 0.0
    %3286 = vmatpush1.msra.mxu0 %v1095
    %3287 = vmatprep.subr.mxu0 0.0
    %3288 = vmatpush1.msra.mxu0 %v1096
    %3289 = vmatprep.subr.mxu0 0.0
    %3290 = vmatpush1.msra.mxu0 %v1097
    %3291 = vmatprep.subr.mxu0 0.0
    %3292 = vmatpush1.msra.mxu0 %v1098
    %3293 = vmatprep.subr.mxu0 0.0
    %3294 = vmatpush1.msra.mxu0 %v1099
    %3295 = vmatprep.subr.mxu0 0.0
    %3296 = vmatpush1.msra.mxu0 %v1100
    %3297 = vmatprep.subr.mxu0 0.0
    %3298 = vmatpush1.msra.mxu0 %v1101
    %3299 = vmatprep.subr.mxu0 0.0
    %3300 = vmatpush1.msra.mxu0 %v1102
    %3301 = vmatprep.subr.mxu0 0.0
    %3302 = vmatpush1.msra.mxu0 %v1103
    %3303 = vmatprep.subr.mxu0 0.0
    %3304 = vmatpush1.msra.mxu0 %v1104
    %3305 = vmatprep.subr.mxu0 0.0
    %3306 = vmatpush1.msra.mxu0 %v1105
    %3307 = vmatprep.subr.mxu0 0.0
    %3308 = vmatpush1.msra.mxu0 %v1106
    %3309 = vmatprep.subr.mxu0 0.0
    %3310 = vmatpush1.msra.mxu0 %v1107
    %3311 = vmatprep.mubr.f32.mxu0 %v113
    %3312 = vmatmul.mubr.f32.gmra.mrb[0].mxu0 %v112
    %v3313 = vpop.f32.mrb[0].mxu0
    %v3314 = vadd.f32 %v3244, %v3313
    %v3315 = vpop.f32.mrb[0].mxu0
    %3316 = vdwg.mxu0
    %3317 = vmatprep.subr.mxu0 0.0
    %3318 = vmatpush1.msra.mxu0 %v1108
    %3319 = vmatprep.subr.mxu0 0.0
    %3320 = vmatpush1.msra.mxu0 %v1109
    %3321 = vmatprep.subr.mxu0 0.0
    %3322 = vmatpush1.msra.mxu0 %v1110
    %3323 = vmatprep.subr.mxu0 0.0
    %3324 = vmatpush1.msra.mxu0 %v1111
    %3325 = vmatprep.subr.mxu0 0.0
    %3326 = vmatpush1.msra.mxu0 %v1112
    %3327 = vmatprep.subr.mxu0 0.0
    %3328 = vmatpush1.msra.mxu0 %v1113
    %3329 = vmatprep.subr.mxu0 0.0
    %3330 = vmatpush1.msra.mxu0 %v1114
    %3331 = vmatprep.subr.mxu0 0.0
    %3332 = vmatpush1.msra.mxu0 %v1115
    %3333 = vmatprep.subr.mxu0 0.0
    %3334 = vmatpush1.msra.mxu0 %v1116
    %3335 = vmatprep.subr.mxu0 0.0
    %3336 = vmatpush1.msra.mxu0 %v1117
    %3337 = vmatprep.subr.mxu0 0.0
    %3338 = vmatpush1.msra.mxu0 %v1118
    %3339 = vmatprep.subr.mxu0 0.0
    %3340 = vmatpush1.msra.mxu0 %v1119
    %3341 = vmatprep.subr.mxu0 0.0
    %3342 = vmatpush1.msra.mxu0 %v1120
    %3343 = vmatprep.subr.mxu0 0.0
    %3344 = vmatpush1.msra.mxu0 %v1121
    %3345 = vmatprep.subr.mxu0 0.0
    %3346 = vmatpush1.msra.mxu0 %v1122
    %3347 = vmatprep.subr.mxu0 0.0
    %3348 = vmatpush1.msra.mxu0 %v1123
    %3349 = vmatprep.subr.mxu0 0.0
    %3350 = vmatpush1.msra.mxu0 %v1124
    %3351 = vmatprep.subr.mxu0 0.0
    %3352 = vmatpush1.msra.mxu0 %v1125
    %3353 = vmatprep.subr.mxu0 0.0
    %3354 = vmatpush1.msra.mxu0 %v1126
    %3355 = vmatprep.subr.mxu0 0.0
    %3356 = vmatpush1.msra.mxu0 %v1127
    %3357 = vmatprep.subr.mxu0 0.0
    %3358 = vmatpush1.msra.mxu0 %v1128
    %3359 = vmatprep.subr.mxu0 0.0
    %3360 = vmatpush1.msra.mxu0 %v1129
    %3361 = vmatprep.subr.mxu0 0.0
    %3362 = vmatpush1.msra.mxu0 %v1130
    %3363 = vmatprep.subr.mxu0 0.0
    %3364 = vmatpush1.msra.mxu0 %v1131
    %3365 = vmatprep.subr.mxu0 0.0
    %3366 = vmatpush1.msra.mxu0 %v1132
    %3367 = vmatprep.subr.mxu0 0.0
    %3368 = vmatpush1.msra.mxu0 %v1133
    %3369 = vmatprep.subr.mxu0 0.0
    %3370 = vmatpush1.msra.mxu0 %v1134
    %3371 = vmatprep.subr.mxu0 0.0
    %3372 = vmatpush1.msra.mxu0 %v1135
    %3373 = vmatprep.subr.mxu0 0.0
    %3374 = vmatpush1.msra.mxu0 %v1136
    %3375 = vmatprep.subr.mxu0 0.0
    %3376 = vmatpush1.msra.mxu0 %v1137
    %3377 = vmatprep.subr.mxu0 0.0
    %3378 = vmatpush1.msra.mxu0 %v1138
    %3379 = vmatprep.subr.mxu0 0.0
    %3380 = vmatpush1.msra.mxu0 %v1139
    %3381 = vmatprep.mubr.f32.mxu0 %v115
    %3382 = vmatmul.mubr.f32.gmra.mrb[0].mxu0 %v114
    %v3383 = vpop.f32.mrb[0].mxu0
    %v3384 = vadd.f32 %v3314, %v3383
    %v3385 = vpop.f32.mrb[0].mxu0
    %3386 = vdwg.mxu0
    %3387 = vst [vmem:[#allocation8] sm:$0xff] %v3384
    // Predicated region
    $region26: #{tpu_custom_call.1} parent=1 // pred_check
      _
    $region27: #{tpu_custom_call.1} parent=1 // pred_check_branch
      %3389 = sbr.rel (0) target = $region29
    $region28: #{tpu_custom_call.1} parent=1 // pred_region
      %s3391 = ssub.s32 128, 128
      %3392 = vsyncadd [#allocation4], %s3391
      %s3394 = sshll.u32 [#allocation8], 4
      %s3395 = int_to_ptr.vmem [resolvable:$true] %s3394
      %3397 = dma.vmem_to_hbm [thread:$0]  %s3395, 128, %s3, [#allocation4]
    $region29: #{tpu_custom_call.1} parent=1 // pred_fallthru
      _
    // Predicated region
    $region30: #{tpu_custom_call.1} parent=1 // pred_check
      _
    $region31: #{tpu_custom_call.1} parent=1 // pred_check_branch
      %3399 = sbr.rel (0) target = $region33
    $region32: #{tpu_custom_call.1} parent=1 // pred_region
      %3400 = dma.done [#allocation4], 128
    $region33: #{tpu_custom_call.1} parent=1 // pred_fallthru
      _
    %3401 = vsyncpa [#allocation3], 1
    %3402 = vsyncpa [#allocation6], 1
    %3403 = vsyncpa [#allocation4], 1

</llo_original>
